<compile_context>
chip_gen: v7x
topology: tpu7x:2x2x1
jax: 0.10.0
libtpu: 0.0.40
codegen_flags: <defaults>
</compile_context>

<pallas_src>
import math

import jax
import jax.numpy as jnp
from jax.experimental import pallas as pl
from jax.experimental.pallas import tpu as pltpu

GN_GROUPS = 32
GN_EPS = 1e-5
PRED_PAD = 128   # lane-dense padded width for the prediction-conv outputs


# ------------------------------ Pallas kernels ------------------------------

def _fill_patches(xpad_ref, pcol_ref, H, W, Cin):
    """im2col: fill pcol_ref (B*H*W, 9*Cin) (bf16) from the zero-padded activation scratch."""
    xp = xpad_ref[...]                     # (B, H+2, W+2, Cin) f32
    B = xp.shape[0]
    j = 0
    for dy in range(3):
        for dx in range(3):
            piece = xp[:, dy:dy + H, dx:dx + W, :].reshape(B * H * W, Cin)
            pcol_ref[:, j * Cin:(j + 1) * Cin] = piece.astype(pcol_ref.dtype)
            j += 1


def stem_kernel(x_ref, w_ref, b_ref, o_ref, xpad_ref, pcol_ref):
    """Conv3x3 (Cin=3 -> C) + bias + ReLU for one sample, as one K=27 im2col matmul."""
    Bb, H, W, Cin = x_ref.shape            # Bb == 1 per grid step
    Cout = o_ref.shape[-1]
    xpad_ref[...] = jnp.zeros(xpad_ref.shape, xpad_ref.dtype)
    xpad_ref[:, 1:H + 1, 1:W + 1, :] = x_ref[...]
    _fill_patches(xpad_ref, pcol_ref, H, W, Cin)
    acc = jnp.dot(pcol_ref[...], w_ref[...], preferred_element_type=jnp.float32)
    y = jnp.maximum(acc + b_ref[...], 0.0)
    o_ref[...] = y.reshape(Bb, H, W, Cout)


def head_tower_kernel(x_ref, tw_ref, gamma_ref, beta_ref, member_ref, member_t_ref,
                      pw_ref, pb_ref, o_ref, xpad_ref, pcol_ref):
    """One full RetinaNet head branch (cls or reg, selected by grid index h) for one
    pyramid level: 4x [conv3x3 + GroupNorm(32) + ReLU] + prediction conv.

    Activations stay in a padded VMEM scratch across layers; batch is folded into the
    matmul M dimension; every conv is a single im2col matmul with K = 9*C in bf16."""
    B, H, W, C = x_ref.shape
    HW = H * W
    G = GN_GROUPS
    cpg = C // G
    n = float(HW * cpg)

    member = member_ref[...]               # (C, G) 0/1 group membership (precomputed)
    member_t = member_t_ref[...]           # (G, C)

    # Zero-padded activation buffer; border stays zero for all layers.
    xpad_ref[...] = jnp.zeros(xpad_ref.shape, xpad_ref.dtype)
    xpad_ref[:, 1:H + 1, 1:W + 1, :] = x_ref[...]

    for layer in range(4):
        _fill_patches(xpad_ref, pcol_ref, H, W, C)
        w = tw_ref[0, layer]                                                 # (9C, C) bf16
        acc = jnp.dot(pcol_ref[...], w, preferred_element_type=jnp.float32)  # (B*HW, C) f32
        acc3 = acc.reshape(B, HW, C)

        # GroupNorm(32): per-sample per-group stats via precomputed membership matmuls.
        s = jnp.sum(acc3, axis=1)                                            # (B, C)
        ss = jnp.sum(acc3 * acc3, axis=1)                                    # (B, C)
        gmean = jnp.dot(s, member, preferred_element_type=jnp.float32) / n   # (B, G)
        gex2 = jnp.dot(ss, member, preferred_element_type=jnp.float32) / n
        gvar = jnp.maximum(gex2 - gmean * gmean, 0.0)                        # clamp (cancellation)
        mean_c = jnp.dot(gmean, member_t, preferred_element_type=jnp.float32)  # (B, C)
        var_c = jnp.dot(gvar, member_t, preferred_element_type=jnp.float32)
        rstd_c = jax.lax.rsqrt(var_c + GN_EPS)

        scale = rstd_c * gamma_ref[0, layer]                                 # (B, C)
        shift = beta_ref[0, layer] - mean_c * scale                          # (B, C)
        y = jnp.maximum(acc3 * scale[:, None, :] + shift[:, None, :], 0.0)   # f32 epilogue
        xpad_ref[:, 1:H + 1, 1:W + 1, :] = y.reshape(B, H, W, C)

    # Prediction conv: output padded to PRED_PAD lanes for dense stores.
    _fill_patches(xpad_ref, pcol_ref, H, W, C)
    out = jnp.dot(pcol_ref[...], pw_ref[0], preferred_element_type=jnp.float32) + pb_ref[0]
    o_ref[0] = out.reshape(B, HW, o_ref.shape[-1])


# ----------------------------- pallas_call wrappers -------------------------

def stem_conv(x, w_bf16, b):
    """x: (B, H, W, 3) NHWC f32; w_bf16: (27, C) bf16; b: (1, C) f32."""
    B, H, W, Cin = x.shape
    Cout = w_bf16.shape[-1]
    return pl.pallas_call(
        stem_kernel,
        out_shape=jax.ShapeDtypeStruct((B, H, W, Cout), jnp.float32),
        grid=(B,),
        in_specs=[
            pl.BlockSpec((1, H, W, Cin), lambda b: (b, 0, 0, 0)),
            pl.BlockSpec((9 * Cin, Cout), lambda b: (0, 0)),
            pl.BlockSpec((1, Cout), lambda b: (0, 0)),
        ],
        out_specs=pl.BlockSpec((1, H, W, Cout), lambda b: (b, 0, 0, 0)),
        scratch_shapes=[
            pltpu.VMEM((1, H + 2, W + 2, Cin), jnp.float32),   # padded activation
            pltpu.VMEM((H * W, 9 * Cin), jnp.bfloat16),        # im2col patch buffer
        ],
        compiler_params=pltpu.CompilerParams(dimension_semantics=("parallel",)),
    )(x, w_bf16, b)


def run_head(f, hp):
    """f: (B, H, W, C) level feature.  Returns (2, B, H*W, PRED_PAD): [0]=cls, [1]=reg."""
    B, H, W, C = f.shape
    HW = H * W
    P = PRED_PAD
    G = GN_GROUPS
    return pl.pallas_call(
        head_tower_kernel,
        out_shape=jax.ShapeDtypeStruct((2, B, HW, P), jnp.float32),
        grid=(2,),   # 2-wide parallel axis: cls vs reg head (megacore-friendly on v7x)
        in_specs=[
            pl.BlockSpec((B, H, W, C), lambda h: (0, 0, 0, 0)),
            pl.BlockSpec((1, 4, 9 * C, C), lambda h: (h, 0, 0, 0)),
            pl.BlockSpec((1, 4, 1, C), lambda h: (h, 0, 0, 0)),
            pl.BlockSpec((1, 4, 1, C), lambda h: (h, 0, 0, 0)),
            pl.BlockSpec((C, G), lambda h: (0, 0)),
            pl.BlockSpec((G, C), lambda h: (0, 0)),
            pl.BlockSpec((1, 9 * C, P), lambda h: (h, 0, 0)),
            pl.BlockSpec((1, 1, P), lambda h: (h, 0, 0)),
        ],
        out_specs=pl.BlockSpec((1, B, HW, P), lambda h: (h, 0, 0, 0)),
        scratch_shapes=[
            pltpu.VMEM((B, H + 2, W + 2, C), jnp.float32),     # padded activation
            pltpu.VMEM((B * HW, 9 * C), jnp.bfloat16),         # im2col patch buffer
        ],
        compiler_params=pltpu.CompilerParams(dimension_semantics=("parallel",)),
    )(f, hp["tower_w"], hp["tower_gamma"], hp["tower_beta"],
      hp["gn_member"], hp["gn_member_t"], hp["pred_w"], hp["pred_b"])


# ----------------------------- plain-JAX glue -------------------------------

def avg_pool2(x):
    B, H, W, C = x.shape
    return x.reshape(B, H // 2, 2, W // 2, 2, C).mean(axis=(2, 4))


def make_anchors(feat_shapes, image_size, anchor_sizes, aspect_ratios):
    """Matches torchvision AnchorGenerator.grid_anchors ordering."""
    all_anchors = []
    for (H, W), sizes, ratios in zip(feat_shapes, anchor_sizes, aspect_ratios):
        stride_h = image_size[0] // H
        stride_w = image_size[1] // W
        scales = jnp.asarray(sizes, jnp.float32)
        ratios = jnp.asarray(ratios, jnp.float32)
        h_ratios = jnp.sqrt(ratios)
        w_ratios = 1.0 / h_ratios
        ws = (w_ratios[:, None] * scales[None, :]).reshape(-1)
        hs = (h_ratios[:, None] * scales[None, :]).reshape(-1)
        base = jnp.round(jnp.stack([-ws, -hs, ws, hs], axis=1) / 2.0)  # (A, 4)
        shifts_x = jnp.arange(W, dtype=jnp.float32) * stride_w
        shifts_y = jnp.arange(H, dtype=jnp.float32) * stride_h
        sy, sx = jnp.meshgrid(shifts_y, shifts_x, indexing="ij")
        shifts = jnp.stack(
            [sx.reshape(-1), sy.reshape(-1), sx.reshape(-1), sy.reshape(-1)], axis=1)
        anchors = (shifts[:, None, :] + base[None, :, :]).reshape(-1, 4)
        all_anchors.append(anchors)
    return jnp.concatenate(all_anchors, axis=0)


class Cfg:
    num_classes = 4
    min_size = 32
    max_size = 32
    anchor_sizes = ((32,), (64,), (128,))
    aspect_ratios = ((0.5, 1.0, 2.0),) * 3
    pretrained_backbone = False


def init_params(key, C, num_classes, num_anchors):
    """Deterministic synthetic init mirroring RetinaNetHead conventions:
    tower/pred conv weights ~ N(0, 0.01), biases 0 except cls bias = -log((1-p)/p),
    GN gamma=1 beta=0.  Stem uses N(0, 0.05) (synthetic backbone stand-in)."""
    ks = iter(jax.random.split(key, 16))
    p = {}
    p["stem_w"] = 0.05 * jax.random.normal(next(ks), (9, 3, C), jnp.float32)
    p["stem_b"] = jnp.zeros((1, C), jnp.float32)
    for head in ("cls", "reg"):
        tower = []
        for _ in range(4):
            tower.append({
                "w": 0.01 * jax.random.normal(next(ks), (9, C, C), jnp.float32),
                "gamma": jnp.ones((1, C), jnp.float32),
                "beta": jnp.zeros((1, C), jnp.float32),
            })
        p[f"{head}_tower"] = tower
    prior = 0.01
    p["cls_w"] = 0.01 * jax.random.normal(
        next(ks), (9, C, num_anchors * num_classes), jnp.float32)
    p["cls_b"] = jnp.full((1, num_anchors * num_classes),
                          -math.log((1 - prior) / prior), jnp.float32)
    p["reg_w"] = 0.01 * jax.random.normal(next(ks), (9, C, num_anchors * 4), jnp.float32)
    p["reg_b"] = jnp.zeros((1, num_anchors * 4), jnp.float32)
    return p


def pack_params(params, C, num_anchors, num_classes):
    """Pack per-layer params into the stacked / padded / bf16 layout the kernels expect."""
    A = num_anchors
    G = GN_GROUPS
    cpg = C // G
    P = PRED_PAD
    assert A * num_classes <= P and A * 4 <= P

    packed = {}
    packed["stem_w"] = params["stem_w"].reshape(9 * 3, C).astype(jnp.bfloat16)
    packed["stem_b"] = params["stem_b"]

    tw, gm, bt = [], [], []
    for head in ("cls", "reg"):
        tw.append(jnp.stack([blk["w"].reshape(9 * C, C) for blk in params[f"{head}_tower"]]))
        gm.append(jnp.stack([blk["gamma"].reshape(1, C) for blk in params[f"{head}_tower"]]))
        bt.append(jnp.stack([blk["beta"].reshape(1, C) for blk in params[f"{head}_tower"]]))
    packed["tower_w"] = jnp.stack(tw).astype(jnp.bfloat16)      # (2, 4, 9C, C)
    packed["tower_gamma"] = jnp.stack(gm)                       # (2, 4, 1, C) f32
    packed["tower_beta"] = jnp.stack(bt)                        # (2, 4, 1, C) f32

    pw = jnp.zeros((2, 9 * C, P), jnp.float32)
    pw = pw.at[0, :, :A * num_classes].set(params["cls_w"].reshape(9 * C, A * num_classes))
    pw = pw.at[1, :, :A * 4].set(params["reg_w"].reshape(9 * C, A * 4))
    packed["pred_w"] = pw.astype(jnp.bfloat16)                  # (2, 9C, 128)
    pb = jnp.zeros((2, 1, P), jnp.float32)
    pb = pb.at[0, :, :A * num_classes].set(params["cls_b"])
    pb = pb.at[1, :, :A * 4].set(params["reg_b"])
    packed["pred_b"] = pb                                       # (2, 1, 128)

    # GroupNorm membership matrices (compile-time constants, passed as kernel inputs).
    cid = jnp.arange(C)
    gidx = jnp.arange(G)
    member = (cid[:, None] // cpg == gidx[None, :]).astype(jnp.float32)   # (C, G)
    packed["gn_member"] = member
    packed["gn_member_t"] = member.T                                      # (G, C)
    return packed


def retinanet_forward(packed, images_nchw, cfg):
    B, _, Himg, Wimg = images_nchw.shape
    A = len(cfg.anchor_sizes[0]) * len(cfg.aspect_ratios[0])
    K = cfg.num_classes

    # GeneralizedRCNNTransform: ImageNet normalization.
    # TODO(synk): the transform's resize-to-(min_size, max_size) is skipped; images are pre-sized.
    x = jnp.transpose(images_nchw, (0, 2, 3, 1)).astype(jnp.float32)  # NCHW -> NHWC
    mean = jnp.array([0.485, 0.456, 0.406], jnp.float32)
    std = jnp.array([0.229, 0.224, 0.225], jnp.float32)
    x = (x - mean) / std

    # TODO(synk): full ResNet50-FPN backbone replaced by a Pallas conv stem + avg-pool
    # pyramid exposing the same (multi-level, fixed-channel) interface to the head.
    feat = stem_conv(x, packed["stem_w"], packed["stem_b"])
    feats = []
    f = feat
    for _ in range(len(cfg.anchor_sizes)):
        f = avg_pool2(f)      # tiny tensors; plain JAX between fused Pallas level kernels
        feats.append(f)

    cls_per_level, reg_per_level, shapes = [], [], []
    for f in feats:
        Bf, Hf, Wf, _ = f.shape
        out = run_head(f, packed)                  # (2, B, H*W, 128): [0]=cls, [1]=reg
        # (B, H*W, A*K) -> (B, H*W*A, K) matches torch view/permute/reshape ordering.
        cls = out[0, :, :, :A * K].reshape(Bf, Hf * Wf * A, K)
        reg = out[1, :, :, :A * 4].reshape(Bf, Hf * Wf * A, 4)
        cls_per_level.append(cls)
        reg_per_level.append(reg)
        shapes.append((Hf, Wf))

    cls_logits = jnp.concatenate(cls_per_level, axis=1)
    bbox_regression = jnp.concatenate(reg_per_level, axis=1)
    anchors = make_anchors(shapes, (Himg, Wimg), cfg.anchor_sizes, cfg.aspect_ratios)

    # TODO(synk): inference postprocess (sigmoid + topk + per-class NMS + box decode) and the
    # training focal/giou losses are data-dependent control flow with no clean Pallas equivalent;
    # raw head outputs + anchors are returned instead.
    return {"cls_logits": cls_logits,
            "bbox_regression": bbox_regression,
            "anchors": anchors}


if __name__ == "__main__":
    cfg = Cfg()
    key = jax.random.PRNGKey(0)
    pkey, xkey = jax.random.split(key)

    C = 64  # scaled-down stand-in for the FPN's 256 out_channels (divisible by 32 for GN)
    num_anchors = len(cfg.anchor_sizes[0]) * len(cfg.aspect_ratios[0])
    params = init_params(pkey, C, cfg.num_classes, num_anchors)
    packed = pack_params(params, C, num_anchors, cfg.num_classes)

    images = jax.random.uniform(xkey, (2, 3, 32, 32), jnp.float32)  # NCHW, like torch
    batch = {"images": images}

    out = retinanet_forward(packed, batch["images"], cfg)
    out = jax.tree_util.tree_map(lambda a: a.block_until_ready(), out)

    total_anchors = out["anchors"].shape[0]
    assert out["cls_logits"].shape == (2, total_anchors, cfg.num_classes), out["cls_logits"].shape
    assert out["bbox_regression"].shape == (2, total_anchors, 4), out["bbox_regression"].shape
    assert bool(jnp.all(jnp.isfinite(out["cls_logits"]))) and bool(
        jnp.all(jnp.isfinite(out["bbox_regression"])))
    print("KERNEL_OK")
</pallas_src>

<mosaic_0001>
module attributes {stable_mosaic.version = 11 : i64} {
  func.func @stem_kernel(%arg0: i32, %arg1: memref<1x32x32x3xf32, #tpu.memory_space<vmem>>, %arg2: memref<27x64xbf16, #tpu.memory_space<vmem>>, %arg3: memref<1x64xf32, #tpu.memory_space<vmem>>, %arg4: memref<1x32x32x64xf32, #tpu.memory_space<vmem>>, %arg5: memref<1x34x34x3xf32, #tpu.memory_space<vmem>>, %arg6: memref<1024x27xbf16, #tpu.memory_space<vmem>>) attributes {dimension_semantics = [#tpu.dimension_semantics<parallel>], iteration_bounds = array<i64: 2>, scalar_prefetch = 0 : i64, scratch_operands = 2 : i64, tpu.core_type = #tpu.core_type<tc>, window_params = [{transform_indices = @transform_0, window_bounds = array<i64: 1, 32, 32, 3>}, {pipeline_mode = #tpu.pipeline_mode<synchronous>, transform_indices = @transform_1, window_bounds = array<i64: 27, 64>}, {pipeline_mode = #tpu.pipeline_mode<synchronous>, transform_indices = @transform_2, window_bounds = array<i64: 1, 64>}, {transform_indices = @transform_3, window_bounds = array<i64: 1, 32, 32, 64>}]} {
    %cst = arith.constant 0.000000e+00 : f32
    %0 = vector.broadcast %cst : f32 to vector<1x34x34x3xf32>
    %c0 = arith.constant 0 : index
    %c0_0 = arith.constant 0 : index
    %c0_1 = arith.constant 0 : index
    %c0_2 = arith.constant 0 : index
    %1 = vector.load %arg5[%c0, %c0_0, %c0_1, %c0_2] : memref<1x34x34x3xf32, #tpu.memory_space<vmem>>, vector<1x34x34x3xf32>
    tpu.vector_store %arg5[%c0, %c0_0, %c0_1, %c0_2], %0 {strides = array<i32>} : memref<1x34x34x3xf32, #tpu.memory_space<vmem>>, vector<1x34x34x3xf32>,
    %c0_3 = arith.constant 0 : index
    %c0_4 = arith.constant 0 : index
    %c0_5 = arith.constant 0 : index
    %c0_6 = arith.constant 0 : index
    %2 = vector.load %arg1[%c0_3, %c0_4, %c0_5, %c0_6] : memref<1x32x32x3xf32, #tpu.memory_space<vmem>>, vector<1x32x32x3xf32>
    %c0_7 = arith.constant 0 : index
    %c1 = arith.constant 1 : index
    %c1_8 = arith.constant 1 : index
    %c0_9 = arith.constant 0 : index
    %3 = vector.load %arg5[%c0_7, %c1, %c1_8, %c0_9] : memref<1x34x34x3xf32, #tpu.memory_space<vmem>>, vector<1x32x32x3xf32>
    tpu.vector_store %arg5[%c0_7, %c1, %c1_8, %c0_9], %2 {strides = array<i32>} : memref<1x34x34x3xf32, #tpu.memory_space<vmem>>, vector<1x32x32x3xf32>,
    %c0_10 = arith.constant 0 : index
    %c0_11 = arith.constant 0 : index
    %c0_12 = arith.constant 0 : index
    %c0_13 = arith.constant 0 : index
    %4 = vector.load %arg5[%c0_10, %c0_11, %c0_12, %c0_13] : memref<1x34x34x3xf32, #tpu.memory_space<vmem>>, vector<1x34x34x3xf32>
    %5 = vector.extract_strided_slice %4 {offsets = [0, 0, 0, 0], sizes = [1, 32, 32, 3], strides = [1, 1, 1, 1]} : vector<1x34x34x3xf32> to vector<1x32x32x3xf32>
    %6 = vector.shape_cast %5 : vector<1x32x32x3xf32> to vector<1024x3xf32>
    %7 = arith.truncf %6 : vector<1024x3xf32> to vector<1024x3xbf16>
    %c0_14 = arith.constant 0 : index
    %c0_15 = arith.constant 0 : index
    %8 = vector.load %arg6[%c0_14, %c0_15] : memref<1024x27xbf16, #tpu.memory_space<vmem>>, vector<1024x3xbf16>
    tpu.vector_store %arg6[%c0_14, %c0_15], %7 {strides = array<i32>} : memref<1024x27xbf16, #tpu.memory_space<vmem>>, vector<1024x3xbf16>,
    %9 = vector.extract_strided_slice %4 {offsets = [0, 0, 1, 0], sizes = [1, 32, 32, 3], strides = [1, 1, 1, 1]} : vector<1x34x34x3xf32> to vector<1x32x32x3xf32>
    %10 = vector.shape_cast %9 : vector<1x32x32x3xf32> to vector<1024x3xf32>
    %11 = arith.truncf %10 : vector<1024x3xf32> to vector<1024x3xbf16>
    %c0_16 = arith.constant 0 : index
    %c3 = arith.constant 3 : index
    %12 = vector.load %arg6[%c0_16, %c3] : memref<1024x27xbf16, #tpu.memory_space<vmem>>, vector<1024x3xbf16>
    tpu.vector_store %arg6[%c0_16, %c3], %11 {strides = array<i32>} : memref<1024x27xbf16, #tpu.memory_space<vmem>>, vector<1024x3xbf16>,
    %13 = vector.extract_strided_slice %4 {offsets = [0, 0, 2, 0], sizes = [1, 32, 32, 3], strides = [1, 1, 1, 1]} : vector<1x34x34x3xf32> to vector<1x32x32x3xf32>
    %14 = vector.shape_cast %13 : vector<1x32x32x3xf32> to vector<1024x3xf32>
    %15 = arith.truncf %14 : vector<1024x3xf32> to vector<1024x3xbf16>
    %c0_17 = arith.constant 0 : index
    %c6 = arith.constant 6 : index
    %16 = vector.load %arg6[%c0_17, %c6] : memref<1024x27xbf16, #tpu.memory_space<vmem>>, vector<1024x3xbf16>
    tpu.vector_store %arg6[%c0_17, %c6], %15 {strides = array<i32>} : memref<1024x27xbf16, #tpu.memory_space<vmem>>, vector<1024x3xbf16>,
    %17 = vector.extract_strided_slice %4 {offsets = [0, 1, 0, 0], sizes = [1, 32, 32, 3], strides = [1, 1, 1, 1]} : vector<1x34x34x3xf32> to vector<1x32x32x3xf32>
    %18 = vector.shape_cast %17 : vector<1x32x32x3xf32> to vector<1024x3xf32>
    %19 = arith.truncf %18 : vector<1024x3xf32> to vector<1024x3xbf16>
    %c0_18 = arith.constant 0 : index
    %c9 = arith.constant 9 : index
    %20 = vector.load %arg6[%c0_18, %c9] : memref<1024x27xbf16, #tpu.memory_space<vmem>>, vector<1024x3xbf16>
    tpu.vector_store %arg6[%c0_18, %c9], %19 {strides = array<i32>} : memref<1024x27xbf16, #tpu.memory_space<vmem>>, vector<1024x3xbf16>,
    %21 = vector.extract_strided_slice %4 {offsets = [0, 1, 1, 0], sizes = [1, 32, 32, 3], strides = [1, 1, 1, 1]} : vector<1x34x34x3xf32> to vector<1x32x32x3xf32>
    %22 = vector.shape_cast %21 : vector<1x32x32x3xf32> to vector<1024x3xf32>
    %23 = arith.truncf %22 : vector<1024x3xf32> to vector<1024x3xbf16>
    %c0_19 = arith.constant 0 : index
    %c12 = arith.constant 12 : index
    %24 = vector.load %arg6[%c0_19, %c12] : memref<1024x27xbf16, #tpu.memory_space<vmem>>, vector<1024x3xbf16>
    tpu.vector_store %arg6[%c0_19, %c12], %23 {strides = array<i32>} : memref<1024x27xbf16, #tpu.memory_space<vmem>>, vector<1024x3xbf16>,
    %25 = vector.extract_strided_slice %4 {offsets = [0, 1, 2, 0], sizes = [1, 32, 32, 3], strides = [1, 1, 1, 1]} : vector<1x34x34x3xf32> to vector<1x32x32x3xf32>
    %26 = vector.shape_cast %25 : vector<1x32x32x3xf32> to vector<1024x3xf32>
    %27 = arith.truncf %26 : vector<1024x3xf32> to vector<1024x3xbf16>
    %c0_20 = arith.constant 0 : index
    %c15 = arith.constant 15 : index
    %28 = vector.load %arg6[%c0_20, %c15] : memref<1024x27xbf16, #tpu.memory_space<vmem>>, vector<1024x3xbf16>
    tpu.vector_store %arg6[%c0_20, %c15], %27 {strides = array<i32>} : memref<1024x27xbf16, #tpu.memory_space<vmem>>, vector<1024x3xbf16>,
    %29 = vector.extract_strided_slice %4 {offsets = [0, 2, 0, 0], sizes = [1, 32, 32, 3], strides = [1, 1, 1, 1]} : vector<1x34x34x3xf32> to vector<1x32x32x3xf32>
    %30 = vector.shape_cast %29 : vector<1x32x32x3xf32> to vector<1024x3xf32>
    %31 = arith.truncf %30 : vector<1024x3xf32> to vector<1024x3xbf16>
    %c0_21 = arith.constant 0 : index
    %c18 = arith.constant 18 : index
    %32 = vector.load %arg6[%c0_21, %c18] : memref<1024x27xbf16, #tpu.memory_space<vmem>>, vector<1024x3xbf16>
    tpu.vector_store %arg6[%c0_21, %c18], %31 {strides = array<i32>} : memref<1024x27xbf16, #tpu.memory_space<vmem>>, vector<1024x3xbf16>,
    %33 = vector.extract_strided_slice %4 {offsets = [0, 2, 1, 0], sizes = [1, 32, 32, 3], strides = [1, 1, 1, 1]} : vector<1x34x34x3xf32> to vector<1x32x32x3xf32>
    %34 = vector.shape_cast %33 : vector<1x32x32x3xf32> to vector<1024x3xf32>
    %35 = arith.truncf %34 : vector<1024x3xf32> to vector<1024x3xbf16>
    %c0_22 = arith.constant 0 : index
    %c21 = arith.constant 21 : index
    %36 = vector.load %arg6[%c0_22, %c21] : memref<1024x27xbf16, #tpu.memory_space<vmem>>, vector<1024x3xbf16>
    tpu.vector_store %arg6[%c0_22, %c21], %35 {strides = array<i32>} : memref<1024x27xbf16, #tpu.memory_space<vmem>>, vector<1024x3xbf16>,
    %37 = vector.extract_strided_slice %4 {offsets = [0, 2, 2, 0], sizes = [1, 32, 32, 3], strides = [1, 1, 1, 1]} : vector<1x34x34x3xf32> to vector<1x32x32x3xf32>
    %38 = vector.shape_cast %37 : vector<1x32x32x3xf32> to vector<1024x3xf32>
    %39 = arith.truncf %38 : vector<1024x3xf32> to vector<1024x3xbf16>
    %c0_23 = arith.constant 0 : index
    %c24 = arith.constant 24 : index
    %40 = vector.load %arg6[%c0_23, %c24] : memref<1024x27xbf16, #tpu.memory_space<vmem>>, vector<1024x3xbf16>
    tpu.vector_store %arg6[%c0_23, %c24], %39 {strides = array<i32>} : memref<1024x27xbf16, #tpu.memory_space<vmem>>, vector<1024x3xbf16>,
    %c0_24 = arith.constant 0 : index
    %c0_25 = arith.constant 0 : index
    %41 = vector.load %arg6[%c0_24, %c0_25] : memref<1024x27xbf16, #tpu.memory_space<vmem>>, vector<1024x27xbf16>
    %c0_26 = arith.constant 0 : index
    %c0_27 = arith.constant 0 : index
    %42 = vector.load %arg2[%c0_26, %c0_27] : memref<27x64xbf16, #tpu.memory_space<vmem>>, vector<27x64xbf16>
    %cst_28 = arith.constant dense<0.000000e+00> : vector<1024x64xf32>
    %43 = tpu.matmul %41, %42, %cst_28 {dimension_numbers = #tpu.dot_dimension_numbers<[1], [0], [0], [1], [0, 0, 1, 1], [], []>} : vector<1024x27xbf16>, vector<27x64xbf16>, vector<1024x64xf32> -> vector<1024x64xf32>
    %c0_29 = arith.constant 0 : index
    %c0_30 = arith.constant 0 : index
    %44 = vector.load %arg3[%c0_29, %c0_30] : memref<1x64xf32, #tpu.memory_space<vmem>>, vector<1x64xf32>
    %45 = vector.broadcast %44 : vector<1x64xf32> to vector<1024x64xf32>
    %46 = arith.addf %43, %45 : vector<1024x64xf32>
    %cst_31 = arith.constant 0.000000e+00 : f32
    %47 = vector.broadcast %cst_31 : f32 to vector<1024x64xf32>
    %48 = arith.maximumf %46, %47 : vector<1024x64xf32>
    %49 = vector.shape_cast %48 : vector<1024x64xf32> to vector<1x32x32x64xf32>
    %c0_32 = arith.constant 0 : index
    %c0_33 = arith.constant 0 : index
    %c0_34 = arith.constant 0 : index
    %c0_35 = arith.constant 0 : index
    %50 = vector.load %arg4[%c0_32, %c0_33, %c0_34, %c0_35] : memref<1x32x32x64xf32, #tpu.memory_space<vmem>>, vector<1x32x32x64xf32>
    tpu.vector_store %arg4[%c0_32, %c0_33, %c0_34, %c0_35], %49 {strides = array<i32>} : memref<1x32x32x64xf32, #tpu.memory_space<vmem>>, vector<1x32x32x64xf32>,
    return
  }
  func.func @transform_0(%arg0: i32) -> (i32, i32, i32, i32) {
    %c0_i32 = arith.constant 0 : i32
    %c0_i32_0 = arith.constant 0 : i32
    %c0_i32_1 = arith.constant 0 : i32
    %c0_i32_2 = arith.constant 0 : i32
    return %arg0, %c0_i32, %c0_i32_0, %c0_i32_1 : i32, i32, i32, i32
  }
  func.func @transform_1(%arg0: i32) -> (i32, i32) {
    %c0_i32 = arith.constant 0 : i32
    %c0_i32_0 = arith.constant 0 : i32
    %c0_i32_1 = arith.constant 0 : i32
    return %c0_i32, %c0_i32_0 : i32, i32
  }
  func.func @transform_2(%arg0: i32) -> (i32, i32) {
    %c0_i32 = arith.constant 0 : i32
    %c0_i32_0 = arith.constant 0 : i32
    %c0_i32_1 = arith.constant 0 : i32
    return %c0_i32, %c0_i32_0 : i32, i32
  }
  func.func @transform_3(%arg0: i32) -> (i32, i32, i32, i32) {
    %c0_i32 = arith.constant 0 : i32
    %c0_i32_0 = arith.constant 0 : i32
    %c0_i32_1 = arith.constant 0 : i32
    %c0_i32_2 = arith.constant 0 : i32
    return %arg0, %c0_i32, %c0_i32_0, %c0_i32_1 : i32, i32, i32, i32
  }
}

</mosaic_0001>

<llo_original>
// kernel: tpu_custom_call.1
$region0: #{tpu_custom_call.1}
  #allocation0 [shape = 'u32[]', space=smem, size = 0x4, offset = 0x4, fixed_abs, tag = 'smem constant byte address 0x4 - core index']
  #allocation1 [shape = 'u32[144,128]{1,0:T(1,128)}', space=vmem, size = 0x12000, scoped, tag = 'internal scratch']
  #allocation2 [shape = 'f32[1,34,34,3]{3,2,1,0:T(8,128)}', space=vmem, size = 0xaa000, scoped, tag = 'scratch operand']
  #allocation3 [shape = 'bf16[1024,27]{1,0:T(16,128)(2,1)}', space=vmem, size = 0x40000, scoped, tag = 'scratch operand']
  %s0 = inlined_call_operand.vmem [shape: f32[2,32,32,3], index: 0, kind: input, shape index: {}]
  %s1 = inlined_call_operand.vmem [shape: bf16[27,64], index: 1, kind: input, shape index: {}]
  %s2 = inlined_call_operand.vmem [shape: f32[1,64], index: 2, kind: input, shape index: {}]
  %s3 = inlined_call_operand.hbm [shape: f32[2,32,32,64], index: 3, kind: output, shape index: {}]
  %s4 = sld [smem:[#allocation0]]
  $region45: #{tpu_custom_call.1} parent=0
    _
  %s6 = ssub.s32 1, %s4
  %s7 = scalar_select 0, %s6, %s4
  $region1: #{tpu_custom_call.1} parent=0
    #allocation4 [shape = 'u8[1048576]{0}', space=vmem, size = 0x100000, scoped, tag = 'output window, operand 0']
    #allocation5 [shape = 's32[2]{0}', space=sflag, size = 0x8, scoped, tag = 'scoped memory for tpu_custom_call.1']
    %8 = vsyncpa [#allocation5], 0
    %s9 = scalar_lea.sflag [#allocation5], 1
    %10 = vsyncpa %s9, 0
    loop: start=0, step=1, limit=4
    $region2: #{tpu_custom_call.1} parent=1 // loop_pre_header
      _
    $region3: #{tpu_custom_call.1} parent=1 // loop_header
      %s12 = sphi 0, %s16
      %p13 = scmp.ge.s32.totalorder %s12, 4
      %s22 = sphi 0, %s24
      %s25 = sphi 0, %s22
      %s26 = sphi 0, %s25
      %s42 = sphi 0, %s26
      %s46 = sphi 0, %s46
      %s48 = sphi 0, %s46
      %s49 = sphi 0, %s48
      %s63 = sphi 0, %s49
      %s67 = sphi 0, %s67
      %s69 = sphi 0, %s67
      %s70 = sphi 0, %s69
      %s84 = sphi 0, %s70
      %s90 = sphi 0, %s92
      %s93 = sphi 0, %s90
      %s94 = sphi 0, %s93
      %s110 = sphi 0, %s94
    $region4: #{tpu_custom_call.1} parent=1 // loop_header_branch
      %15 = sbr.rel (%p13) target = $region8
    $region5: #{tpu_custom_call.1} parent=1 // loop_body
      %s17 = ssub.s32 %s12, 1
      %s18 = ssub.s32 %s12, 2
      %s19 = sadd.s32 %s12, 1
      %s20 = ssub.s32 %s12, %s19
      %p21 = scmp.eq.s32.totalorder %s20, 0
      %s23 = sadd.s32 %s22, 1
      %s24 = scalar_select %p21, %s22, %s23
      %p27 = pneg %p21
      %p28 = scmp.eq.s32.totalorder %s12, 1
      %p29 = por %p27, %p28
      %p30 = scmp.ne.s32.totalorder %s22, %s25
      %p31 = scmp.eq.s32.totalorder %s12, 0
      %p32 = por %p30, %p31
      %p33 = scmp.ne.s32.totalorder %s22, %s25
      %p34 = scmp.eq.s32.totalorder %s17, 1
      %p35 = por %p33, %p34
      %p36 = scmp.ne.s32.totalorder %s25, %s26
      %p37 = scmp.eq.s32.totalorder %s17, 0
      %p38 = por %p36, %p37
      %p39 = scmp.ne.s32.totalorder %s25, %s26
      %p40 = scmp.eq.s32.totalorder %s18, 1
      %p41 = por %p39, %p40
      %p43 = scmp.ne.s32.totalorder %s26, %s42
      %p44 = scmp.eq.s32.totalorder %s18, 0
      %p45 = por %p43, %p44
      %s47 = sadd.s32 %s46, 1
      %p50 = scmp.eq.s32.totalorder %s12, 1
      %p51 = scmp.ne.s32.totalorder %s46, %s48
      %p52 = scmp.eq.s32.totalorder %s12, 0
      %p53 = por %p51, %p52
      %p54 = scmp.ne.s32.totalorder %s46, %s48
      %p55 = scmp.eq.s32.totalorder %s17, 1
      %p56 = por %p54, %p55
      %p57 = scmp.ne.s32.totalorder %s48, %s49
      %p58 = scmp.eq.s32.totalorder %s17, 0
      %p59 = por %p57, %p58
      %p60 = scmp.ne.s32.totalorder %s48, %s49
      %p61 = scmp.eq.s32.totalorder %s18, 1
      %p62 = por %p60, %p61
      %p64 = scmp.ne.s32.totalorder %s49, %s63
      %p65 = scmp.eq.s32.totalorder %s18, 0
      %p66 = por %p64, %p65
      %s68 = sadd.s32 %s67, 1
      %p71 = scmp.eq.s32.totalorder %s12, 1
      %p72 = scmp.ne.s32.totalorder %s67, %s69
      %p73 = scmp.eq.s32.totalorder %s12, 0
      %p74 = por %p72, %p73
      %p75 = scmp.ne.s32.totalorder %s67, %s69
      %p76 = scmp.eq.s32.totalorder %s17, 1
      %p77 = por %p75, %p76
      %p78 = scmp.ne.s32.totalorder %s69, %s70
      %p79 = scmp.eq.s32.totalorder %s17, 0
      %p80 = por %p78, %p79
      %p81 = scmp.ne.s32.totalorder %s69, %s70
      %p82 = scmp.eq.s32.totalorder %s18, 1
      %p83 = por %p81, %p82
      %p85 = scmp.ne.s32.totalorder %s70, %s84
      %p86 = scmp.eq.s32.totalorder %s18, 0
      %p87 = por %p85, %p86
      %s88 = ssub.s32 %s12, %s19
      %p89 = scmp.eq.s32.totalorder %s88, 0
      %s91 = sadd.s32 %s90, 1
      %s92 = scalar_select %p89, %s90, %s91
      %p95 = pneg %p89
      %p96 = scmp.eq.s32.totalorder %s12, 1
      %p97 = por %p95, %p96
      %p98 = scmp.ne.s32.totalorder %s90, %s93
      %p99 = scmp.eq.s32.totalorder %s12, 0
      %p100 = por %p98, %p99
      %p101 = scmp.ne.s32.totalorder %s90, %s93
      %p102 = scmp.eq.s32.totalorder %s17, 1
      %p103 = por %p101, %p102
      %p104 = scmp.ne.s32.totalorder %s93, %s94
      %p105 = scmp.eq.s32.totalorder %s17, 0
      %p106 = por %p104, %p105
      %p107 = scmp.ne.s32.totalorder %s93, %s94
      %p108 = scmp.eq.s32.totalorder %s18, 1
      %p109 = por %p107, %p108
      %p111 = scmp.ne.s32.totalorder %s94, %s110
      %p112 = scmp.eq.s32.totalorder %s18, 0
      %p113 = por %p111, %p112
      %p114 = scmp.le.s32.totalorder 1, %s12
      %p115 = scmp.lt.s32.totalorder %s12, 3
      %p116 = pnand %p114, %p115
      %p117 = pneg %p116
      // Predicated region
      $region9: #{tpu_custom_call.1} parent=5 // pred_check
        _
      $region10: #{tpu_custom_call.1} parent=5 // pred_check_branch
        %119 = sbr.rel (%p116) target = $region12
      $region11: #{tpu_custom_call.1} parent=5 // pred_region
        %s120 = ssub.s32 %s12, 1
        // Predicated region
        $region13: #{tpu_custom_call.1} parent=11 // pred_check
          %p121 = pneg %p59
        $region14: #{tpu_custom_call.1} parent=11 // pred_check_branch
          %123 = sbr.rel (%p121) target = $region16
        $region15: #{tpu_custom_call.1} parent=11 // pred_region
          _
        $region16: #{tpu_custom_call.1} parent=11 // pred_fallthru
          _
        // Predicated region
        $region17: #{tpu_custom_call.1} parent=11 // pred_check
          %p124 = pneg %p80
        $region18: #{tpu_custom_call.1} parent=11 // pred_check_branch
          %126 = sbr.rel (%p124) target = $region20
        $region19: #{tpu_custom_call.1} parent=11 // pred_region
          _
        $region20: #{tpu_custom_call.1} parent=11 // pred_fallthru
          _
      $region12: #{tpu_custom_call.1} parent=5 // pred_fallthru
        _
      %p127 = scmp.lt.s32.totalorder %s12, 2
      // Predicated region
      $region21: #{tpu_custom_call.1} parent=5 // pred_check
        %p128 = pneg %p127
      $region22: #{tpu_custom_call.1} parent=5 // pred_check_branch
        %130 = sbr.rel (%p128) target = $region24
      $region23: #{tpu_custom_call.1} parent=5 // pred_region
        // Predicated region
        $region25: #{tpu_custom_call.1} parent=23 // pred_check
          %p131 = pneg %p32
        $region26: #{tpu_custom_call.1} parent=23 // pred_check_branch
          %133 = sbr.rel (%p131) target = $region28
        $region27: #{tpu_custom_call.1} parent=23 // pred_region
          %p134 = scmp.lt.s32.totalorder %s12, 1
          %s135 = scalar_select %p134, %s12, 1
          %s136 = smul.addr %s135, 128
          %s137 = smul.addr %s136, 8
          %s138 = scalar_lea.vmem %s0, %s137
        $region28: #{tpu_custom_call.1} parent=23 // pred_fallthru
          _
      $region24: #{tpu_custom_call.1} parent=5 // pred_fallthru
        _
      %p139 = scmp.le.s32.totalorder 1, %s12
      %p140 = scmp.lt.s32.totalorder %s12, 3
      %p141 = pnand %p139, %p140
      %p142 = pneg %p141
      // Predicated region
      $region29: #{tpu_custom_call.1} parent=5 // pred_check
        _
      $region30: #{tpu_custom_call.1} parent=5 // pred_check_branch
        %144 = sbr.rel (%p141) target = $region32
      $region31: #{tpu_custom_call.1} parent=5 // pred_region
        %s145 = ssub.s32 %s12, 1
        %p146 = scmp.lt.s32.totalorder %s17, 1
        %s147 = scalar_select %p146, %s17, 1
        %s148 = smul.addr %s147, 128
        %s149 = smul.addr %s148, 8
        %s150 = scalar_lea.vmem %s0, %s149
        %p151 = pneg %p38
        %p152 = pneg %p35
        %p153 = pneg %p59
        %p154 = pneg %p56
        %p155 = pneg %p80
        %p156 = pneg %p77
        %p157 = pneg %p106
        %p158 = pneg %p103
        %s159 = sand.u32 %s93, 1
        %s160 = scalar_lea.sflag [#allocation5], %s159
        %s161 = sand.u32 %s93, 1
        %s162 = smul.addr %s161, 1024
        %s163 = scalar_lea.vmem [#allocation4], %s162
        %p164 = scmp.lt.s32.totalorder %s17, 1
        %s165 = scalar_select %p164, %s17, 1
        %s166 = smul.addr %s165, 128
        %s167 = smul.addr %s166, 8
        %s168 = scalar_lea.vmem %s0, %s167
        %vm170 = vcmask 23552
        %171 = vst.msk [vmem:[#allocation2] sm:$0xff] %vm170, 0.0
        %172 = vst.msk [vmem:[#allocation2 + $0x8] sm:$0xff] %vm170, 0.0
        %173 = vst.msk [vmem:[#allocation2 + $0x10] sm:$0xff] %vm170, 0.0
        %174 = vst.msk [vmem:[#allocation2 + $0x18] sm:$0xff] %vm170, 0.0
        %vm175 = vcmask 17408
        %176 = vst.msk [vmem:[#allocation2 + $0x20] sm:$0x3] %vm175, 0.0
        %177 = vst.msk [vmem:[#allocation2 + $0x28] sm:$0xff] %vm170, 0.0
        %178 = vst.msk [vmem:[#allocation2 + $0x30] sm:$0xff] %vm170, 0.0
        %179 = vst.msk [vmem:[#allocation2 + $0x38] sm:$0xff] %vm170, 0.0
        %180 = vst.msk [vmem:[#allocation2 + $0x40] sm:$0xff] %vm170, 0.0
        %181 = vst.msk [vmem:[#allocation2 + $0x48] sm:$0x3] %vm175, 0.0
        %182 = vst.msk [vmem:[#allocation2 + $0x50] sm:$0xff] %vm170, 0.0
        %183 = vst.msk [vmem:[#allocation2 + $0x58] sm:$0xff] %vm170, 0.0
        %184 = vst.msk [vmem:[#allocation2 + $0x60] sm:$0xff] %vm170, 0.0
        %185 = vst.msk [vmem:[#allocation2 + $0x68] sm:$0xff] %vm170, 0.0
        %186 = vst.msk [vmem:[#allocation2 + $0x70] sm:$0x3] %vm175, 0.0
        %187 = vst.msk [vmem:[#allocation2 + $0x78] sm:$0xff] %vm170, 0.0
        %188 = vst.msk [vmem:[#allocation2 + $0x80] sm:$0xff] %vm170, 0.0
        %189 = vst.msk [vmem:[#allocation2 + $0x88] sm:$0xff] %vm170, 0.0
        %190 = vst.msk [vmem:[#allocation2 + $0x90] sm:$0xff] %vm170, 0.0
        %191 = vst.msk [vmem:[#allocation2 + $0x98] sm:$0x3] %vm175, 0.0
        %192 = vst.msk [vmem:[#allocation2 + $0xa0] sm:$0xff] %vm170, 0.0
        %193 = vst.msk [vmem:[#allocation2 + $0xa8] sm:$0xff] %vm170, 0.0
        %194 = vst.msk [vmem:[#allocation2 + $0xb0] sm:$0xff] %vm170, 0.0
        %195 = vst.msk [vmem:[#allocation2 + $0xb8] sm:$0xff] %vm170, 0.0
        %196 = vst.msk [vmem:[#allocation2 + $0xc0] sm:$0x3] %vm175, 0.0
        %197 = vst.msk [vmem:[#allocation2 + $0xc8] sm:$0xff] %vm170, 0.0
        %198 = vst.msk [vmem:[#allocation2 + $0xd0] sm:$0xff] %vm170, 0.0
        %199 = vst.msk [vmem:[#allocation2 + $0xd8] sm:$0xff] %vm170, 0.0
        %200 = vst.msk [vmem:[#allocation2 + $0xe0] sm:$0xff] %vm170, 0.0
        %201 = vst.msk [vmem:[#allocation2 + $0xe8] sm:$0x3] %vm175, 0.0
        %202 = vst.msk [vmem:[#allocation2 + $0xf0] sm:$0xff] %vm170, 0.0
        %203 = vst.msk [vmem:[#allocation2 + $0xf8] sm:$0xff] %vm170, 0.0
        %204 = vst.msk [vmem:[#allocation2 + $0x100] sm:$0xff] %vm170, 0.0
        %205 = vst.msk [vmem:[#allocation2 + $0x108] sm:$0xff] %vm170, 0.0
        %206 = vst.msk [vmem:[#allocation2 + $0x110] sm:$0x3] %vm175, 0.0
        %207 = vst.msk [vmem:[#allocation2 + $0x118] sm:$0xff] %vm170, 0.0
        %208 = vst.msk [vmem:[#allocation2 + $0x120] sm:$0xff] %vm170, 0.0
        %209 = vst.msk [vmem:[#allocation2 + $0x128] sm:$0xff] %vm170, 0.0
        %210 = vst.msk [vmem:[#allocation2 + $0x130] sm:$0xff] %vm170, 0.0
        %211 = vst.msk [vmem:[#allocation2 + $0x138] sm:$0x3] %vm175, 0.0
        %212 = vst.msk [vmem:[#allocation2 + $0x140] sm:$0xff] %vm170, 0.0
        %213 = vst.msk [vmem:[#allocation2 + $0x148] sm:$0xff] %vm170, 0.0
        %214 = vst.msk [vmem:[#allocation2 + $0x150] sm:$0xff] %vm170, 0.0
        %215 = vst.msk [vmem:[#allocation2 + $0x158] sm:$0xff] %vm170, 0.0
        %216 = vst.msk [vmem:[#allocation2 + $0x160] sm:$0x3] %vm175, 0.0
        %217 = vst.msk [vmem:[#allocation2 + $0x168] sm:$0xff] %vm170, 0.0
        %218 = vst.msk [vmem:[#allocation2 + $0x170] sm:$0xff] %vm170, 0.0
        %219 = vst.msk [vmem:[#allocation2 + $0x178] sm:$0xff] %vm170, 0.0
        %220 = vst.msk [vmem:[#allocation2 + $0x180] sm:$0xff] %vm170, 0.0
        %221 = vst.msk [vmem:[#allocation2 + $0x188] sm:$0x3] %vm175, 0.0
        %222 = vst.msk [vmem:[#allocation2 + $0x190] sm:$0xff] %vm170, 0.0
        %223 = vst.msk [vmem:[#allocation2 + $0x198] sm:$0xff] %vm170, 0.0
        %224 = vst.msk [vmem:[#allocation2 + $0x1a0] sm:$0xff] %vm170, 0.0
        %225 = vst.msk [vmem:[#allocation2 + $0x1a8] sm:$0xff] %vm170, 0.0
        %226 = vst.msk [vmem:[#allocation2 + $0x1b0] sm:$0x3] %vm175, 0.0
        %227 = vst.msk [vmem:[#allocation2 + $0x1b8] sm:$0xff] %vm170, 0.0
        %228 = vst.msk [vmem:[#allocation2 + $0x1c0] sm:$0xff] %vm170, 0.0
        %229 = vst.msk [vmem:[#allocation2 + $0x1c8] sm:$0xff] %vm170, 0.0
        %230 = vst.msk [vmem:[#allocation2 + $0x1d0] sm:$0xff] %vm170, 0.0
        %231 = vst.msk [vmem:[#allocation2 + $0x1d8] sm:$0x3] %vm175, 0.0
        %232 = vst.msk [vmem:[#allocation2 + $0x1e0] sm:$0xff] %vm170, 0.0
        %233 = vst.msk [vmem:[#allocation2 + $0x1e8] sm:$0xff] %vm170, 0.0
        %234 = vst.msk [vmem:[#allocation2 + $0x1f0] sm:$0xff] %vm170, 0.0
        %235 = vst.msk [vmem:[#allocation2 + $0x1f8] sm:$0xff] %vm170, 0.0
        %236 = vst.msk [vmem:[#allocation2 + $0x200] sm:$0x3] %vm175, 0.0
        %237 = vst.msk [vmem:[#allocation2 + $0x208] sm:$0xff] %vm170, 0.0
        %238 = vst.msk [vmem:[#allocation2 + $0x210] sm:$0xff] %vm170, 0.0
        %239 = vst.msk [vmem:[#allocation2 + $0x218] sm:$0xff] %vm170, 0.0
        %240 = vst.msk [vmem:[#allocation2 + $0x220] sm:$0xff] %vm170, 0.0
        %241 = vst.msk [vmem:[#allocation2 + $0x228] sm:$0x3] %vm175, 0.0
        %242 = vst.msk [vmem:[#allocation2 + $0x230] sm:$0xff] %vm170, 0.0
        %243 = vst.msk [vmem:[#allocation2 + $0x238] sm:$0xff] %vm170, 0.0
        %244 = vst.msk [vmem:[#allocation2 + $0x240] sm:$0xff] %vm170, 0.0
        %245 = vst.msk [vmem:[#allocation2 + $0x248] sm:$0xff] %vm170, 0.0
        %246 = vst.msk [vmem:[#allocation2 + $0x250] sm:$0x3] %vm175, 0.0
        %247 = vst.msk [vmem:[#allocation2 + $0x258] sm:$0xff] %vm170, 0.0
        %248 = vst.msk [vmem:[#allocation2 + $0x260] sm:$0xff] %vm170, 0.0
        %249 = vst.msk [vmem:[#allocation2 + $0x268] sm:$0xff] %vm170, 0.0
        %250 = vst.msk [vmem:[#allocation2 + $0x270] sm:$0xff] %vm170, 0.0
        %251 = vst.msk [vmem:[#allocation2 + $0x278] sm:$0x3] %vm175, 0.0
        %252 = vst.msk [vmem:[#allocation2 + $0x280] sm:$0xff] %vm170, 0.0
        %253 = vst.msk [vmem:[#allocation2 + $0x288] sm:$0xff] %vm170, 0.0
        %254 = vst.msk [vmem:[#allocation2 + $0x290] sm:$0xff] %vm170, 0.0
        %255 = vst.msk [vmem:[#allocation2 + $0x298] sm:$0xff] %vm170, 0.0
        %256 = vst.msk [vmem:[#allocation2 + $0x2a0] sm:$0x3] %vm175, 0.0
        %257 = vst.msk [vmem:[#allocation2 + $0x2a8] sm:$0xff] %vm170, 0.0
        %258 = vst.msk [vmem:[#allocation2 + $0x2b0] sm:$0xff] %vm170, 0.0
        %259 = vst.msk [vmem:[#allocation2 + $0x2b8] sm:$0xff] %vm170, 0.0
        %260 = vst.msk [vmem:[#allocation2 + $0x2c0] sm:$0xff] %vm170, 0.0
        %261 = vst.msk [vmem:[#allocation2 + $0x2c8] sm:$0x3] %vm175, 0.0
        %262 = vst.msk [vmem:[#allocation2 + $0x2d0] sm:$0xff] %vm170, 0.0
        %263 = vst.msk [vmem:[#allocation2 + $0x2d8] sm:$0xff] %vm170, 0.0
        %264 = vst.msk [vmem:[#allocation2 + $0x2e0] sm:$0xff] %vm170, 0.0
        %265 = vst.msk [vmem:[#allocation2 + $0x2e8] sm:$0xff] %vm170, 0.0
        %266 = vst.msk [vmem:[#allocation2 + $0x2f0] sm:$0x3] %vm175, 0.0
        %267 = vst.msk [vmem:[#allocation2 + $0x2f8] sm:$0xff] %vm170, 0.0
        %268 = vst.msk [vmem:[#allocation2 + $0x300] sm:$0xff] %vm170, 0.0
        %269 = vst.msk [vmem:[#allocation2 + $0x308] sm:$0xff] %vm170, 0.0
        %270 = vst.msk [vmem:[#allocation2 + $0x310] sm:$0xff] %vm170, 0.0
        %271 = vst.msk [vmem:[#allocation2 + $0x318] sm:$0x3] %vm175, 0.0
        %272 = vst.msk [vmem:[#allocation2 + $0x320] sm:$0xff] %vm170, 0.0
        %273 = vst.msk [vmem:[#allocation2 + $0x328] sm:$0xff] %vm170, 0.0
        %274 = vst.msk [vmem:[#allocation2 + $0x330] sm:$0xff] %vm170, 0.0
        %275 = vst.msk [vmem:[#allocation2 + $0x338] sm:$0xff] %vm170, 0.0
        %276 = vst.msk [vmem:[#allocation2 + $0x340] sm:$0x3] %vm175, 0.0
        %277 = vst.msk [vmem:[#allocation2 + $0x348] sm:$0xff] %vm170, 0.0
        %278 = vst.msk [vmem:[#allocation2 + $0x350] sm:$0xff] %vm170, 0.0
        %279 = vst.msk [vmem:[#allocation2 + $0x358] sm:$0xff] %vm170, 0.0
        %280 = vst.msk [vmem:[#allocation2 + $0x360] sm:$0xff] %vm170, 0.0
        %281 = vst.msk [vmem:[#allocation2 + $0x368] sm:$0x3] %vm175, 0.0
        %282 = vst.msk [vmem:[#allocation2 + $0x370] sm:$0xff] %vm170, 0.0
        %283 = vst.msk [vmem:[#allocation2 + $0x378] sm:$0xff] %vm170, 0.0
        %284 = vst.msk [vmem:[#allocation2 + $0x380] sm:$0xff] %vm170, 0.0
        %285 = vst.msk [vmem:[#allocation2 + $0x388] sm:$0xff] %vm170, 0.0
        %286 = vst.msk [vmem:[#allocation2 + $0x390] sm:$0x3] %vm175, 0.0
        %287 = vst.msk [vmem:[#allocation2 + $0x398] sm:$0xff] %vm170, 0.0
        %288 = vst.msk [vmem:[#allocation2 + $0x3a0] sm:$0xff] %vm170, 0.0
        %289 = vst.msk [vmem:[#allocation2 + $0x3a8] sm:$0xff] %vm170, 0.0
        %290 = vst.msk [vmem:[#allocation2 + $0x3b0] sm:$0xff] %vm170, 0.0
        %291 = vst.msk [vmem:[#allocation2 + $0x3b8] sm:$0x3] %vm175, 0.0
        %292 = vst.msk [vmem:[#allocation2 + $0x3c0] sm:$0xff] %vm170, 0.0
        %293 = vst.msk [vmem:[#allocation2 + $0x3c8] sm:$0xff] %vm170, 0.0
        %294 = vst.msk [vmem:[#allocation2 + $0x3d0] sm:$0xff] %vm170, 0.0
        %295 = vst.msk [vmem:[#allocation2 + $0x3d8] sm:$0xff] %vm170, 0.0
        %296 = vst.msk [vmem:[#allocation2 + $0x3e0] sm:$0x3] %vm175, 0.0
        %297 = vst.msk [vmem:[#allocation2 + $0x3e8] sm:$0xff] %vm170, 0.0
        %298 = vst.msk [vmem:[#allocation2 + $0x3f0] sm:$0xff] %vm170, 0.0
        %299 = vst.msk [vmem:[#allocation2 + $0x3f8] sm:$0xff] %vm170, 0.0
        %300 = vst.msk [vmem:[#allocation2 + $0x400] sm:$0xff] %vm170, 0.0
        %301 = vst.msk [vmem:[#allocation2 + $0x408] sm:$0x3] %vm175, 0.0
        %302 = vst.msk [vmem:[#allocation2 + $0x410] sm:$0xff] %vm170, 0.0
        %303 = vst.msk [vmem:[#allocation2 + $0x418] sm:$0xff] %vm170, 0.0
        %304 = vst.msk [vmem:[#allocation2 + $0x420] sm:$0xff] %vm170, 0.0
        %305 = vst.msk [vmem:[#allocation2 + $0x428] sm:$0xff] %vm170, 0.0
        %306 = vst.msk [vmem:[#allocation2 + $0x430] sm:$0x3] %vm175, 0.0
        %307 = vst.msk [vmem:[#allocation2 + $0x438] sm:$0xff] %vm170, 0.0
        %308 = vst.msk [vmem:[#allocation2 + $0x440] sm:$0xff] %vm170, 0.0
        %309 = vst.msk [vmem:[#allocation2 + $0x448] sm:$0xff] %vm170, 0.0
        %310 = vst.msk [vmem:[#allocation2 + $0x450] sm:$0xff] %vm170, 0.0
        %311 = vst.msk [vmem:[#allocation2 + $0x458] sm:$0x3] %vm175, 0.0
        %312 = vst.msk [vmem:[#allocation2 + $0x460] sm:$0xff] %vm170, 0.0
        %313 = vst.msk [vmem:[#allocation2 + $0x468] sm:$0xff] %vm170, 0.0
        %314 = vst.msk [vmem:[#allocation2 + $0x470] sm:$0xff] %vm170, 0.0
        %315 = vst.msk [vmem:[#allocation2 + $0x478] sm:$0xff] %vm170, 0.0
        %316 = vst.msk [vmem:[#allocation2 + $0x480] sm:$0x3] %vm175, 0.0
        %317 = vst.msk [vmem:[#allocation2 + $0x488] sm:$0xff] %vm170, 0.0
        %318 = vst.msk [vmem:[#allocation2 + $0x490] sm:$0xff] %vm170, 0.0
        %319 = vst.msk [vmem:[#allocation2 + $0x498] sm:$0xff] %vm170, 0.0
        %320 = vst.msk [vmem:[#allocation2 + $0x4a0] sm:$0xff] %vm170, 0.0
        %321 = vst.msk [vmem:[#allocation2 + $0x4a8] sm:$0x3] %vm175, 0.0
        %322 = vst.msk [vmem:[#allocation2 + $0x4b0] sm:$0xff] %vm170, 0.0
        %323 = vst.msk [vmem:[#allocation2 + $0x4b8] sm:$0xff] %vm170, 0.0
        %324 = vst.msk [vmem:[#allocation2 + $0x4c0] sm:$0xff] %vm170, 0.0
        %325 = vst.msk [vmem:[#allocation2 + $0x4c8] sm:$0xff] %vm170, 0.0
        %326 = vst.msk [vmem:[#allocation2 + $0x4d0] sm:$0x3] %vm175, 0.0
        %327 = vst.msk [vmem:[#allocation2 + $0x4d8] sm:$0xff] %vm170, 0.0
        %328 = vst.msk [vmem:[#allocation2 + $0x4e0] sm:$0xff] %vm170, 0.0
        %329 = vst.msk [vmem:[#allocation2 + $0x4e8] sm:$0xff] %vm170, 0.0
        %330 = vst.msk [vmem:[#allocation2 + $0x4f0] sm:$0xff] %vm170, 0.0
        %331 = vst.msk [vmem:[#allocation2 + $0x4f8] sm:$0x3] %vm175, 0.0
        %332 = vst.msk [vmem:[#allocation2 + $0x500] sm:$0xff] %vm170, 0.0
        %333 = vst.msk [vmem:[#allocation2 + $0x508] sm:$0xff] %vm170, 0.0
        %334 = vst.msk [vmem:[#allocation2 + $0x510] sm:$0xff] %vm170, 0.0
        %335 = vst.msk [vmem:[#allocation2 + $0x518] sm:$0xff] %vm170, 0.0
        %336 = vst.msk [vmem:[#allocation2 + $0x520] sm:$0x3] %vm175, 0.0
        %337 = vst.msk [vmem:[#allocation2 + $0x528] sm:$0xff] %vm170, 0.0
        %338 = vst.msk [vmem:[#allocation2 + $0x530] sm:$0xff] %vm170, 0.0
        %339 = vst.msk [vmem:[#allocation2 + $0x538] sm:$0xff] %vm170, 0.0
        %340 = vst.msk [vmem:[#allocation2 + $0x540] sm:$0xff] %vm170, 0.0
        %341 = vst.msk [vmem:[#allocation2 + $0x548] sm:$0x3] %vm175, 0.0
        %v342 = vld [vmem:[%s168] sm:$0xff]
        %v343 = vld [vmem:[%s168 + $0x8] sm:$0xff]
        %v344 = vld [vmem:[%s168 + $0x10] sm:$0xff]
        %v345 = vld [vmem:[%s168 + $0x18] sm:$0xff]
        %v346 = vld [vmem:[%s168 + $0x20] sm:$0xff]
        %v347 = vld [vmem:[%s168 + $0x28] sm:$0xff]
        %v348 = vld [vmem:[%s168 + $0x30] sm:$0xff]
        %v349 = vld [vmem:[%s168 + $0x38] sm:$0xff]
        %v350 = vld [vmem:[%s168 + $0x40] sm:$0xff]
        %v351 = vld [vmem:[%s168 + $0x48] sm:$0xff]
        %v352 = vld [vmem:[%s168 + $0x50] sm:$0xff]
        %v353 = vld [vmem:[%s168 + $0x58] sm:$0xff]
        %v354 = vld [vmem:[%s168 + $0x60] sm:$0xff]
        %v355 = vld [vmem:[%s168 + $0x68] sm:$0xff]
        %v356 = vld [vmem:[%s168 + $0x70] sm:$0xff]
        %v357 = vld [vmem:[%s168 + $0x78] sm:$0xff]
        %v358 = vld [vmem:[%s168 + $0x80] sm:$0xff]
        %v359 = vld [vmem:[%s168 + $0x88] sm:$0xff]
        %v360 = vld [vmem:[%s168 + $0x90] sm:$0xff]
        %v361 = vld [vmem:[%s168 + $0x98] sm:$0xff]
        %v362 = vld [vmem:[%s168 + $0xa0] sm:$0xff]
        %v363 = vld [vmem:[%s168 + $0xa8] sm:$0xff]
        %v364 = vld [vmem:[%s168 + $0xb0] sm:$0xff]
        %v365 = vld [vmem:[%s168 + $0xb8] sm:$0xff]
        %v366 = vld [vmem:[%s168 + $0xc0] sm:$0xff]
        %v367 = vld [vmem:[%s168 + $0xc8] sm:$0xff]
        %v368 = vld [vmem:[%s168 + $0xd0] sm:$0xff]
        %v369 = vld [vmem:[%s168 + $0xd8] sm:$0xff]
        %v370 = vld [vmem:[%s168 + $0xe0] sm:$0xff]
        %v371 = vld [vmem:[%s168 + $0xe8] sm:$0xff]
        %v372 = vld [vmem:[%s168 + $0xf0] sm:$0xff]
        %v373 = vld [vmem:[%s168 + $0xf8] sm:$0xff]
        %v374 = vld [vmem:[%s168 + $0x100] sm:$0xff]
        %v375 = vld [vmem:[%s168 + $0x108] sm:$0xff]
        %v376 = vld [vmem:[%s168 + $0x110] sm:$0xff]
        %v377 = vld [vmem:[%s168 + $0x118] sm:$0xff]
        %v378 = vld [vmem:[%s168 + $0x120] sm:$0xff]
        %v379 = vld [vmem:[%s168 + $0x128] sm:$0xff]
        %v380 = vld [vmem:[%s168 + $0x130] sm:$0xff]
        %v381 = vld [vmem:[%s168 + $0x138] sm:$0xff]
        %v382 = vld [vmem:[%s168 + $0x140] sm:$0xff]
        %v383 = vld [vmem:[%s168 + $0x148] sm:$0xff]
        %v384 = vld [vmem:[%s168 + $0x150] sm:$0xff]
        %v385 = vld [vmem:[%s168 + $0x158] sm:$0xff]
        %v386 = vld [vmem:[%s168 + $0x160] sm:$0xff]
        %v387 = vld [vmem:[%s168 + $0x168] sm:$0xff]
        %v388 = vld [vmem:[%s168 + $0x170] sm:$0xff]
        %v389 = vld [vmem:[%s168 + $0x178] sm:$0xff]
        %v390 = vld [vmem:[%s168 + $0x180] sm:$0xff]
        %v391 = vld [vmem:[%s168 + $0x188] sm:$0xff]
        %v392 = vld [vmem:[%s168 + $0x190] sm:$0xff]
        %v393 = vld [vmem:[%s168 + $0x198] sm:$0xff]
        %v394 = vld [vmem:[%s168 + $0x1a0] sm:$0xff]
        %v395 = vld [vmem:[%s168 + $0x1a8] sm:$0xff]
        %v396 = vld [vmem:[%s168 + $0x1b0] sm:$0xff]
        %v397 = vld [vmem:[%s168 + $0x1b8] sm:$0xff]
        %v398 = vld [vmem:[%s168 + $0x1c0] sm:$0xff]
        %v399 = vld [vmem:[%s168 + $0x1c8] sm:$0xff]
        %v400 = vld [vmem:[%s168 + $0x1d0] sm:$0xff]
        %v401 = vld [vmem:[%s168 + $0x1d8] sm:$0xff]
        %v402 = vld [vmem:[%s168 + $0x1e0] sm:$0xff]
        %v403 = vld [vmem:[%s168 + $0x1e8] sm:$0xff]
        %v404 = vld [vmem:[%s168 + $0x1f0] sm:$0xff]
        %v405 = vld [vmem:[%s168 + $0x1f8] sm:$0xff]
        %v406 = vld [vmem:[%s168 + $0x200] sm:$0xff]
        %v407 = vld [vmem:[%s168 + $0x208] sm:$0xff]
        %v408 = vld [vmem:[%s168 + $0x210] sm:$0xff]
        %v409 = vld [vmem:[%s168 + $0x218] sm:$0xff]
        %v410 = vld [vmem:[%s168 + $0x220] sm:$0xff]
        %v411 = vld [vmem:[%s168 + $0x228] sm:$0xff]
        %v412 = vld [vmem:[%s168 + $0x230] sm:$0xff]
        %v413 = vld [vmem:[%s168 + $0x238] sm:$0xff]
        %v414 = vld [vmem:[%s168 + $0x240] sm:$0xff]
        %v415 = vld [vmem:[%s168 + $0x248] sm:$0xff]
        %v416 = vld [vmem:[%s168 + $0x250] sm:$0xff]
        %v417 = vld [vmem:[%s168 + $0x258] sm:$0xff]
        %v418 = vld [vmem:[%s168 + $0x260] sm:$0xff]
        %v419 = vld [vmem:[%s168 + $0x268] sm:$0xff]
        %v420 = vld [vmem:[%s168 + $0x270] sm:$0xff]
        %v421 = vld [vmem:[%s168 + $0x278] sm:$0xff]
        %v422 = vld [vmem:[%s168 + $0x280] sm:$0xff]
        %v423 = vld [vmem:[%s168 + $0x288] sm:$0xff]
        %v424 = vld [vmem:[%s168 + $0x290] sm:$0xff]
        %v425 = vld [vmem:[%s168 + $0x298] sm:$0xff]
        %v426 = vld [vmem:[%s168 + $0x2a0] sm:$0xff]
        %v427 = vld [vmem:[%s168 + $0x2a8] sm:$0xff]
        %v428 = vld [vmem:[%s168 + $0x2b0] sm:$0xff]
        %v429 = vld [vmem:[%s168 + $0x2b8] sm:$0xff]
        %v430 = vld [vmem:[%s168 + $0x2c0] sm:$0xff]
        %v431 = vld [vmem:[%s168 + $0x2c8] sm:$0xff]
        %v432 = vld [vmem:[%s168 + $0x2d0] sm:$0xff]
        %v433 = vld [vmem:[%s168 + $0x2d8] sm:$0xff]
        %v434 = vld [vmem:[%s168 + $0x2e0] sm:$0xff]
        %v435 = vld [vmem:[%s168 + $0x2e8] sm:$0xff]
        %v436 = vld [vmem:[%s168 + $0x2f0] sm:$0xff]
        %v437 = vld [vmem:[%s168 + $0x2f8] sm:$0xff]
        %v438 = vld [vmem:[%s168 + $0x300] sm:$0xff]
        %v439 = vld [vmem:[%s168 + $0x308] sm:$0xff]
        %v440 = vld [vmem:[%s168 + $0x310] sm:$0xff]
        %v441 = vld [vmem:[%s168 + $0x318] sm:$0xff]
        %v442 = vld [vmem:[%s168 + $0x320] sm:$0xff]
        %v443 = vld [vmem:[%s168 + $0x328] sm:$0xff]
        %v444 = vld [vmem:[%s168 + $0x330] sm:$0xff]
        %v445 = vld [vmem:[%s168 + $0x338] sm:$0xff]
        %v446 = vld [vmem:[%s168 + $0x340] sm:$0xff]
        %v447 = vld [vmem:[%s168 + $0x348] sm:$0xff]
        %v448 = vld [vmem:[%s168 + $0x350] sm:$0xff]
        %v449 = vld [vmem:[%s168 + $0x358] sm:$0xff]
        %v450 = vld [vmem:[%s168 + $0x360] sm:$0xff]
        %v451 = vld [vmem:[%s168 + $0x368] sm:$0xff]
        %v452 = vld [vmem:[%s168 + $0x370] sm:$0xff]
        %v453 = vld [vmem:[%s168 + $0x378] sm:$0xff]
        %v454 = vld [vmem:[%s168 + $0x380] sm:$0xff]
        %v455 = vld [vmem:[%s168 + $0x388] sm:$0xff]
        %v456 = vld [vmem:[%s168 + $0x390] sm:$0xff]
        %v457 = vld [vmem:[%s168 + $0x398] sm:$0xff]
        %v458 = vld [vmem:[%s168 + $0x3a0] sm:$0xff]
        %v459 = vld [vmem:[%s168 + $0x3a8] sm:$0xff]
        %v460 = vld [vmem:[%s168 + $0x3b0] sm:$0xff]
        %v461 = vld [vmem:[%s168 + $0x3b8] sm:$0xff]
        %v462 = vld [vmem:[%s168 + $0x3c0] sm:$0xff]
        %v463 = vld [vmem:[%s168 + $0x3c8] sm:$0xff]
        %v464 = vld [vmem:[%s168 + $0x3d0] sm:$0xff]
        %v465 = vld [vmem:[%s168 + $0x3d8] sm:$0xff]
        %v466 = vld [vmem:[%s168 + $0x3e0] sm:$0xff]
        %v467 = vld [vmem:[%s168 + $0x3e8] sm:$0xff]
        %v468 = vld [vmem:[%s168 + $0x3f0] sm:$0xff]
        %v469 = vld [vmem:[%s168 + $0x3f8] sm:$0xff]
        %s470 = scalar_lea.vmem [#allocation2], 40
        %471 = vst.msk [vmem:[%s470 + $0x1] sm:$0xff] %vm170, %v342
        %472 = vst.msk [vmem:[%s470 + $0x9] sm:$0xff] %vm170, %v343
        %473 = vst.msk [vmem:[%s470 + $0x11] sm:$0xff] %vm170, %v344
        %474 = vst.msk [vmem:[%s470 + $0x19] sm:$0xff] %vm170, %v345
        %475 = vst.msk [vmem:[%s470 + $0x29] sm:$0xff] %vm170, %v346
        %476 = vst.msk [vmem:[%s470 + $0x31] sm:$0xff] %vm170, %v347
        %477 = vst.msk [vmem:[%s470 + $0x39] sm:$0xff] %vm170, %v348
        %478 = vst.msk [vmem:[%s470 + $0x41] sm:$0xff] %vm170, %v349
        %479 = vst.msk [vmem:[%s470 + $0x51] sm:$0xff] %vm170, %v350
        %480 = vst.msk [vmem:[%s470 + $0x59] sm:$0xff] %vm170, %v351
        %481 = vst.msk [vmem:[%s470 + $0x61] sm:$0xff] %vm170, %v352
        %482 = vst.msk [vmem:[%s470 + $0x69] sm:$0xff] %vm170, %v353
        %483 = vst.msk [vmem:[%s470 + $0x79] sm:$0xff] %vm170, %v354
        %484 = vst.msk [vmem:[%s470 + $0x81] sm:$0xff] %vm170, %v355
        %485 = vst.msk [vmem:[%s470 + $0x89] sm:$0xff] %vm170, %v356
        %486 = vst.msk [vmem:[%s470 + $0x91] sm:$0xff] %vm170, %v357
        %487 = vst.msk [vmem:[%s470 + $0xa1] sm:$0xff] %vm170, %v358
        %488 = vst.msk [vmem:[%s470 + $0xa9] sm:$0xff] %vm170, %v359
        %489 = vst.msk [vmem:[%s470 + $0xb1] sm:$0xff] %vm170, %v360
        %490 = vst.msk [vmem:[%s470 + $0xb9] sm:$0xff] %vm170, %v361
        %491 = vst.msk [vmem:[%s470 + $0xc9] sm:$0xff] %vm170, %v362
        %492 = vst.msk [vmem:[%s470 + $0xd1] sm:$0xff] %vm170, %v363
        %493 = vst.msk [vmem:[%s470 + $0xd9] sm:$0xff] %vm170, %v364
        %494 = vst.msk [vmem:[%s470 + $0xe1] sm:$0xff] %vm170, %v365
        %495 = vst.msk [vmem:[%s470 + $0xf1] sm:$0xff] %vm170, %v366
        %496 = vst.msk [vmem:[%s470 + $0xf9] sm:$0xff] %vm170, %v367
        %497 = vst.msk [vmem:[%s470 + $0x101] sm:$0xff] %vm170, %v368
        %498 = vst.msk [vmem:[%s470 + $0x109] sm:$0xff] %vm170, %v369
        %499 = vst.msk [vmem:[%s470 + $0x119] sm:$0xff] %vm170, %v370
        %500 = vst.msk [vmem:[%s470 + $0x121] sm:$0xff] %vm170, %v371
        %501 = vst.msk [vmem:[%s470 + $0x129] sm:$0xff] %vm170, %v372
        %502 = vst.msk [vmem:[%s470 + $0x131] sm:$0xff] %vm170, %v373
        %503 = vst.msk [vmem:[%s470 + $0x141] sm:$0xff] %vm170, %v374
        %504 = vst.msk [vmem:[%s470 + $0x149] sm:$0xff] %vm170, %v375
        %505 = vst.msk [vmem:[%s470 + $0x151] sm:$0xff] %vm170, %v376
        %506 = vst.msk [vmem:[%s470 + $0x159] sm:$0xff] %vm170, %v377
        %507 = vst.msk [vmem:[%s470 + $0x169] sm:$0xff] %vm170, %v378
        %508 = vst.msk [vmem:[%s470 + $0x171] sm:$0xff] %vm170, %v379
        %509 = vst.msk [vmem:[%s470 + $0x179] sm:$0xff] %vm170, %v380
        %510 = vst.msk [vmem:[%s470 + $0x181] sm:$0xff] %vm170, %v381
        %511 = vst.msk [vmem:[%s470 + $0x191] sm:$0xff] %vm170, %v382
        %512 = vst.msk [vmem:[%s470 + $0x199] sm:$0xff] %vm170, %v383
        %513 = vst.msk [vmem:[%s470 + $0x1a1] sm:$0xff] %vm170, %v384
        %514 = vst.msk [vmem:[%s470 + $0x1a9] sm:$0xff] %vm170, %v385
        %515 = vst.msk [vmem:[%s470 + $0x1b9] sm:$0xff] %vm170, %v386
        %516 = vst.msk [vmem:[%s470 + $0x1c1] sm:$0xff] %vm170, %v387
        %517 = vst.msk [vmem:[%s470 + $0x1c9] sm:$0xff] %vm170, %v388
        %518 = vst.msk [vmem:[%s470 + $0x1d1] sm:$0xff] %vm170, %v389
        %519 = vst.msk [vmem:[%s470 + $0x1e1] sm:$0xff] %vm170, %v390
        %520 = vst.msk [vmem:[%s470 + $0x1e9] sm:$0xff] %vm170, %v391
        %521 = vst.msk [vmem:[%s470 + $0x1f1] sm:$0xff] %vm170, %v392
        %522 = vst.msk [vmem:[%s470 + $0x1f9] sm:$0xff] %vm170, %v393
        %523 = vst.msk [vmem:[%s470 + $0x209] sm:$0xff] %vm170, %v394
        %524 = vst.msk [vmem:[%s470 + $0x211] sm:$0xff] %vm170, %v395
        %525 = vst.msk [vmem:[%s470 + $0x219] sm:$0xff] %vm170, %v396
        %526 = vst.msk [vmem:[%s470 + $0x221] sm:$0xff] %vm170, %v397
        %527 = vst.msk [vmem:[%s470 + $0x231] sm:$0xff] %vm170, %v398
        %528 = vst.msk [vmem:[%s470 + $0x239] sm:$0xff] %vm170, %v399
        %529 = vst.msk [vmem:[%s470 + $0x241] sm:$0xff] %vm170, %v400
        %530 = vst.msk [vmem:[%s470 + $0x249] sm:$0xff] %vm170, %v401
        %531 = vst.msk [vmem:[%s470 + $0x259] sm:$0xff] %vm170, %v402
        %532 = vst.msk [vmem:[%s470 + $0x261] sm:$0xff] %vm170, %v403
        %533 = vst.msk [vmem:[%s470 + $0x269] sm:$0xff] %vm170, %v404
        %534 = vst.msk [vmem:[%s470 + $0x271] sm:$0xff] %vm170, %v405
        %535 = vst.msk [vmem:[%s470 + $0x281] sm:$0xff] %vm170, %v406
        %536 = vst.msk [vmem:[%s470 + $0x289] sm:$0xff] %vm170, %v407
        %537 = vst.msk [vmem:[%s470 + $0x291] sm:$0xff] %vm170, %v408
        %538 = vst.msk [vmem:[%s470 + $0x299] sm:$0xff] %vm170, %v409
        %539 = vst.msk [vmem:[%s470 + $0x2a9] sm:$0xff] %vm170, %v410
        %540 = vst.msk [vmem:[%s470 + $0x2b1] sm:$0xff] %vm170, %v411
        %541 = vst.msk [vmem:[%s470 + $0x2b9] sm:$0xff] %vm170, %v412
        %542 = vst.msk [vmem:[%s470 + $0x2c1] sm:$0xff] %vm170, %v413
        %543 = vst.msk [vmem:[%s470 + $0x2d1] sm:$0xff] %vm170, %v414
        %544 = vst.msk [vmem:[%s470 + $0x2d9] sm:$0xff] %vm170, %v415
        %545 = vst.msk [vmem:[%s470 + $0x2e1] sm:$0xff] %vm170, %v416
        %546 = vst.msk [vmem:[%s470 + $0x2e9] sm:$0xff] %vm170, %v417
        %547 = vst.msk [vmem:[%s470 + $0x2f9] sm:$0xff] %vm170, %v418
        %548 = vst.msk [vmem:[%s470 + $0x301] sm:$0xff] %vm170, %v419
        %549 = vst.msk [vmem:[%s470 + $0x309] sm:$0xff] %vm170, %v420
        %550 = vst.msk [vmem:[%s470 + $0x311] sm:$0xff] %vm170, %v421
        %551 = vst.msk [vmem:[%s470 + $0x321] sm:$0xff] %vm170, %v422
        %552 = vst.msk [vmem:[%s470 + $0x329] sm:$0xff] %vm170, %v423
        %553 = vst.msk [vmem:[%s470 + $0x331] sm:$0xff] %vm170, %v424
        %554 = vst.msk [vmem:[%s470 + $0x339] sm:$0xff] %vm170, %v425
        %555 = vst.msk [vmem:[%s470 + $0x349] sm:$0xff] %vm170, %v426
        %556 = vst.msk [vmem:[%s470 + $0x351] sm:$0xff] %vm170, %v427
        %557 = vst.msk [vmem:[%s470 + $0x359] sm:$0xff] %vm170, %v428
        %558 = vst.msk [vmem:[%s470 + $0x361] sm:$0xff] %vm170, %v429
        %559 = vst.msk [vmem:[%s470 + $0x371] sm:$0xff] %vm170, %v430
        %560 = vst.msk [vmem:[%s470 + $0x379] sm:$0xff] %vm170, %v431
        %561 = vst.msk [vmem:[%s470 + $0x381] sm:$0xff] %vm170, %v432
        %562 = vst.msk [vmem:[%s470 + $0x389] sm:$0xff] %vm170, %v433
        %563 = vst.msk [vmem:[%s470 + $0x399] sm:$0xff] %vm170, %v434
        %564 = vst.msk [vmem:[%s470 + $0x3a1] sm:$0xff] %vm170, %v435
        %565 = vst.msk [vmem:[%s470 + $0x3a9] sm:$0xff] %vm170, %v436
        %566 = vst.msk [vmem:[%s470 + $0x3b1] sm:$0xff] %vm170, %v437
        %567 = vst.msk [vmem:[%s470 + $0x3c1] sm:$0xff] %vm170, %v438
        %568 = vst.msk [vmem:[%s470 + $0x3c9] sm:$0xff] %vm170, %v439
        %569 = vst.msk [vmem:[%s470 + $0x3d1] sm:$0xff] %vm170, %v440
        %570 = vst.msk [vmem:[%s470 + $0x3d9] sm:$0xff] %vm170, %v441
        %571 = vst.msk [vmem:[%s470 + $0x3e9] sm:$0xff] %vm170, %v442
        %572 = vst.msk [vmem:[%s470 + $0x3f1] sm:$0xff] %vm170, %v443
        %573 = vst.msk [vmem:[%s470 + $0x3f9] sm:$0xff] %vm170, %v444
        %574 = vst.msk [vmem:[%s470 + $0x401] sm:$0xff] %vm170, %v445
        %575 = vst.msk [vmem:[%s470 + $0x411] sm:$0xff] %vm170, %v446
        %576 = vst.msk [vmem:[%s470 + $0x419] sm:$0xff] %vm170, %v447
        %577 = vst.msk [vmem:[%s470 + $0x421] sm:$0xff] %vm170, %v448
        %578 = vst.msk [vmem:[%s470 + $0x429] sm:$0xff] %vm170, %v449
        %579 = vst.msk [vmem:[%s470 + $0x439] sm:$0xff] %vm170, %v450
        %580 = vst.msk [vmem:[%s470 + $0x441] sm:$0xff] %vm170, %v451
        %581 = vst.msk [vmem:[%s470 + $0x449] sm:$0xff] %vm170, %v452
        %582 = vst.msk [vmem:[%s470 + $0x451] sm:$0xff] %vm170, %v453
        %583 = vst.msk [vmem:[%s470 + $0x461] sm:$0xff] %vm170, %v454
        %584 = vst.msk [vmem:[%s470 + $0x469] sm:$0xff] %vm170, %v455
        %585 = vst.msk [vmem:[%s470 + $0x471] sm:$0xff] %vm170, %v456
        %586 = vst.msk [vmem:[%s470 + $0x479] sm:$0xff] %vm170, %v457
        %587 = vst.msk [vmem:[%s470 + $0x489] sm:$0xff] %vm170, %v458
        %588 = vst.msk [vmem:[%s470 + $0x491] sm:$0xff] %vm170, %v459
        %589 = vst.msk [vmem:[%s470 + $0x499] sm:$0xff] %vm170, %v460
        %590 = vst.msk [vmem:[%s470 + $0x4a1] sm:$0xff] %vm170, %v461
        %591 = vst.msk [vmem:[%s470 + $0x4b1] sm:$0xff] %vm170, %v462
        %592 = vst.msk [vmem:[%s470 + $0x4b9] sm:$0xff] %vm170, %v463
        %593 = vst.msk [vmem:[%s470 + $0x4c1] sm:$0xff] %vm170, %v464
        %594 = vst.msk [vmem:[%s470 + $0x4c9] sm:$0xff] %vm170, %v465
        %595 = vst.msk [vmem:[%s470 + $0x4d9] sm:$0xff] %vm170, %v466
        %596 = vst.msk [vmem:[%s470 + $0x4e1] sm:$0xff] %vm170, %v467
        %597 = vst.msk [vmem:[%s470 + $0x4e9] sm:$0xff] %vm170, %v468
        %598 = vst.msk [vmem:[%s470 + $0x4f1] sm:$0xff] %vm170, %v469
        %v599 = vld [vmem:[#allocation2] sm:$0xff]
        %v600 = vld [vmem:[#allocation2 + $0x8] sm:$0xff]
        %v601 = vld [vmem:[#allocation2 + $0x10] sm:$0xff]
        %v602 = vld [vmem:[#allocation2 + $0x18] sm:$0xff]
        %v603 = vld [vmem:[#allocation2 + $0x20] sm:$0x3]
        %v604 = vld [vmem:[#allocation2 + $0x28] sm:$0xff]
        %v605 = vld [vmem:[#allocation2 + $0x30] sm:$0xff]
        %v606 = vld [vmem:[#allocation2 + $0x38] sm:$0xff]
        %v607 = vld [vmem:[#allocation2 + $0x40] sm:$0xff]
        %v608 = vld [vmem:[#allocation2 + $0x48] sm:$0x3]
        %v609 = vld [vmem:[#allocation2 + $0x50] sm:$0xff]
        %v610 = vld [vmem:[#allocation2 + $0x58] sm:$0xff]
        %v611 = vld [vmem:[#allocation2 + $0x60] sm:$0xff]
        %v612 = vld [vmem:[#allocation2 + $0x68] sm:$0xff]
        %v613 = vld [vmem:[#allocation2 + $0x70] sm:$0x3]
        %v614 = vld [vmem:[#allocation2 + $0x78] sm:$0xff]
        %v615 = vld [vmem:[#allocation2 + $0x80] sm:$0xff]
        %v616 = vld [vmem:[#allocation2 + $0x88] sm:$0xff]
        %v617 = vld [vmem:[#allocation2 + $0x90] sm:$0xff]
        %v618 = vld [vmem:[#allocation2 + $0x98] sm:$0x3]
        %v619 = vld [vmem:[#allocation2 + $0xa0] sm:$0xff]
        %v620 = vld [vmem:[#allocation2 + $0xa8] sm:$0xff]
        %v621 = vld [vmem:[#allocation2 + $0xb0] sm:$0xff]
        %v622 = vld [vmem:[#allocation2 + $0xb8] sm:$0xff]
        %v623 = vld [vmem:[#allocation2 + $0xc0] sm:$0x3]
        %v624 = vld [vmem:[#allocation2 + $0xc8] sm:$0xff]
        %v625 = vld [vmem:[#allocation2 + $0xd0] sm:$0xff]
        %v626 = vld [vmem:[#allocation2 + $0xd8] sm:$0xff]
        %v627 = vld [vmem:[#allocation2 + $0xe0] sm:$0xff]
        %v628 = vld [vmem:[#allocation2 + $0xe8] sm:$0x3]
        %v629 = vld [vmem:[#allocation2 + $0xf0] sm:$0xff]
        %v630 = vld [vmem:[#allocation2 + $0xf8] sm:$0xff]
        %v631 = vld [vmem:[#allocation2 + $0x100] sm:$0xff]
        %v632 = vld [vmem:[#allocation2 + $0x108] sm:$0xff]
        %v633 = vld [vmem:[#allocation2 + $0x110] sm:$0x3]
        %v634 = vld [vmem:[#allocation2 + $0x118] sm:$0xff]
        %v635 = vld [vmem:[#allocation2 + $0x120] sm:$0xff]
        %v636 = vld [vmem:[#allocation2 + $0x128] sm:$0xff]
        %v637 = vld [vmem:[#allocation2 + $0x130] sm:$0xff]
        %v638 = vld [vmem:[#allocation2 + $0x138] sm:$0x3]
        %v639 = vld [vmem:[#allocation2 + $0x140] sm:$0xff]
        %v640 = vld [vmem:[#allocation2 + $0x148] sm:$0xff]
        %v641 = vld [vmem:[#allocation2 + $0x150] sm:$0xff]
        %v642 = vld [vmem:[#allocation2 + $0x158] sm:$0xff]
        %v643 = vld [vmem:[#allocation2 + $0x160] sm:$0x3]
        %v644 = vld [vmem:[#allocation2 + $0x168] sm:$0xff]
        %v645 = vld [vmem:[#allocation2 + $0x170] sm:$0xff]
        %v646 = vld [vmem:[#allocation2 + $0x178] sm:$0xff]
        %v647 = vld [vmem:[#allocation2 + $0x180] sm:$0xff]
        %v648 = vld [vmem:[#allocation2 + $0x188] sm:$0x3]
        %v649 = vld [vmem:[#allocation2 + $0x190] sm:$0xff]
        %v650 = vld [vmem:[#allocation2 + $0x198] sm:$0xff]
        %v651 = vld [vmem:[#allocation2 + $0x1a0] sm:$0xff]
        %v652 = vld [vmem:[#allocation2 + $0x1a8] sm:$0xff]
        %v653 = vld [vmem:[#allocation2 + $0x1b0] sm:$0x3]
        %v654 = vld [vmem:[#allocation2 + $0x1b8] sm:$0xff]
        %v655 = vld [vmem:[#allocation2 + $0x1c0] sm:$0xff]
        %v656 = vld [vmem:[#allocation2 + $0x1c8] sm:$0xff]
        %v657 = vld [vmem:[#allocation2 + $0x1d0] sm:$0xff]
        %v658 = vld [vmem:[#allocation2 + $0x1d8] sm:$0x3]
        %v659 = vld [vmem:[#allocation2 + $0x1e0] sm:$0xff]
        %v660 = vld [vmem:[#allocation2 + $0x1e8] sm:$0xff]
        %v661 = vld [vmem:[#allocation2 + $0x1f0] sm:$0xff]
        %v662 = vld [vmem:[#allocation2 + $0x1f8] sm:$0xff]
        %v663 = vld [vmem:[#allocation2 + $0x200] sm:$0x3]
        %v664 = vld [vmem:[#allocation2 + $0x208] sm:$0xff]
        %v665 = vld [vmem:[#allocation2 + $0x210] sm:$0xff]
        %v666 = vld [vmem:[#allocation2 + $0x218] sm:$0xff]
        %v667 = vld [vmem:[#allocation2 + $0x220] sm:$0xff]
        %v668 = vld [vmem:[#allocation2 + $0x228] sm:$0x3]
        %v669 = vld [vmem:[#allocation2 + $0x230] sm:$0xff]
        %v670 = vld [vmem:[#allocation2 + $0x238] sm:$0xff]
        %v671 = vld [vmem:[#allocation2 + $0x240] sm:$0xff]
        %v672 = vld [vmem:[#allocation2 + $0x248] sm:$0xff]
        %v673 = vld [vmem:[#allocation2 + $0x250] sm:$0x3]
        %v674 = vld [vmem:[#allocation2 + $0x258] sm:$0xff]
        %v675 = vld [vmem:[#allocation2 + $0x260] sm:$0xff]
        %v676 = vld [vmem:[#allocation2 + $0x268] sm:$0xff]
        %v677 = vld [vmem:[#allocation2 + $0x270] sm:$0xff]
        %v678 = vld [vmem:[#allocation2 + $0x278] sm:$0x3]
        %v679 = vld [vmem:[#allocation2 + $0x280] sm:$0xff]
        %v680 = vld [vmem:[#allocation2 + $0x288] sm:$0xff]
        %v681 = vld [vmem:[#allocation2 + $0x290] sm:$0xff]
        %v682 = vld [vmem:[#allocation2 + $0x298] sm:$0xff]
        %v683 = vld [vmem:[#allocation2 + $0x2a0] sm:$0x3]
        %v684 = vld [vmem:[#allocation2 + $0x2a8] sm:$0xff]
        %v685 = vld [vmem:[#allocation2 + $0x2b0] sm:$0xff]
        %v686 = vld [vmem:[#allocation2 + $0x2b8] sm:$0xff]
        %v687 = vld [vmem:[#allocation2 + $0x2c0] sm:$0xff]
        %v688 = vld [vmem:[#allocation2 + $0x2c8] sm:$0x3]
        %v689 = vld [vmem:[#allocation2 + $0x2d0] sm:$0xff]
        %v690 = vld [vmem:[#allocation2 + $0x2d8] sm:$0xff]
        %v691 = vld [vmem:[#allocation2 + $0x2e0] sm:$0xff]
        %v692 = vld [vmem:[#allocation2 + $0x2e8] sm:$0xff]
        %v693 = vld [vmem:[#allocation2 + $0x2f0] sm:$0x3]
        %v694 = vld [vmem:[#allocation2 + $0x2f8] sm:$0xff]
        %v695 = vld [vmem:[#allocation2 + $0x300] sm:$0xff]
        %v696 = vld [vmem:[#allocation2 + $0x308] sm:$0xff]
        %v697 = vld [vmem:[#allocation2 + $0x310] sm:$0xff]
        %v698 = vld [vmem:[#allocation2 + $0x318] sm:$0x3]
        %v699 = vld [vmem:[#allocation2 + $0x320] sm:$0xff]
        %v700 = vld [vmem:[#allocation2 + $0x328] sm:$0xff]
        %v701 = vld [vmem:[#allocation2 + $0x330] sm:$0xff]
        %v702 = vld [vmem:[#allocation2 + $0x338] sm:$0xff]
        %v703 = vld [vmem:[#allocation2 + $0x340] sm:$0x3]
        %v704 = vld [vmem:[#allocation2 + $0x348] sm:$0xff]
        %v705 = vld [vmem:[#allocation2 + $0x350] sm:$0xff]
        %v706 = vld [vmem:[#allocation2 + $0x358] sm:$0xff]
        %v707 = vld [vmem:[#allocation2 + $0x360] sm:$0xff]
        %v708 = vld [vmem:[#allocation2 + $0x368] sm:$0x3]
        %v709 = vld [vmem:[#allocation2 + $0x370] sm:$0xff]
        %v710 = vld [vmem:[#allocation2 + $0x378] sm:$0xff]
        %v711 = vld [vmem:[#allocation2 + $0x380] sm:$0xff]
        %v712 = vld [vmem:[#allocation2 + $0x388] sm:$0xff]
        %v713 = vld [vmem:[#allocation2 + $0x390] sm:$0x3]
        %v714 = vld [vmem:[#allocation2 + $0x398] sm:$0xff]
        %v715 = vld [vmem:[#allocation2 + $0x3a0] sm:$0xff]
        %v716 = vld [vmem:[#allocation2 + $0x3a8] sm:$0xff]
        %v717 = vld [vmem:[#allocation2 + $0x3b0] sm:$0xff]
        %v718 = vld [vmem:[#allocation2 + $0x3b8] sm:$0x3]
        %v719 = vld [vmem:[#allocation2 + $0x3c0] sm:$0xff]
        %v720 = vld [vmem:[#allocation2 + $0x3c8] sm:$0xff]
        %v721 = vld [vmem:[#allocation2 + $0x3d0] sm:$0xff]
        %v722 = vld [vmem:[#allocation2 + $0x3d8] sm:$0xff]
        %v723 = vld [vmem:[#allocation2 + $0x3e0] sm:$0x3]
        %v724 = vld [vmem:[#allocation2 + $0x3e8] sm:$0xff]
        %v725 = vld [vmem:[#allocation2 + $0x3f0] sm:$0xff]
        %v726 = vld [vmem:[#allocation2 + $0x3f8] sm:$0xff]
        %v727 = vld [vmem:[#allocation2 + $0x400] sm:$0xff]
        %v728 = vld [vmem:[#allocation2 + $0x408] sm:$0x3]
        %v729 = vld [vmem:[#allocation2 + $0x410] sm:$0xff]
        %v730 = vld [vmem:[#allocation2 + $0x418] sm:$0xff]
        %v731 = vld [vmem:[#allocation2 + $0x420] sm:$0xff]
        %v732 = vld [vmem:[#allocation2 + $0x428] sm:$0xff]
        %v733 = vld [vmem:[#allocation2 + $0x430] sm:$0x3]
        %v734 = vld [vmem:[#allocation2 + $0x438] sm:$0xff]
        %v735 = vld [vmem:[#allocation2 + $0x440] sm:$0xff]
        %v736 = vld [vmem:[#allocation2 + $0x448] sm:$0xff]
        %v737 = vld [vmem:[#allocation2 + $0x450] sm:$0xff]
        %v738 = vld [vmem:[#allocation2 + $0x458] sm:$0x3]
        %v739 = vld [vmem:[#allocation2 + $0x460] sm:$0xff]
        %v740 = vld [vmem:[#allocation2 + $0x468] sm:$0xff]
        %v741 = vld [vmem:[#allocation2 + $0x470] sm:$0xff]
        %v742 = vld [vmem:[#allocation2 + $0x478] sm:$0xff]
        %v743 = vld [vmem:[#allocation2 + $0x480] sm:$0x3]
        %v744 = vld [vmem:[#allocation2 + $0x488] sm:$0xff]
        %v745 = vld [vmem:[#allocation2 + $0x490] sm:$0xff]
        %v746 = vld [vmem:[#allocation2 + $0x498] sm:$0xff]
        %v747 = vld [vmem:[#allocation2 + $0x4a0] sm:$0xff]
        %v748 = vld [vmem:[#allocation2 + $0x4a8] sm:$0x3]
        %v749 = vld [vmem:[#allocation2 + $0x4b0] sm:$0xff]
        %v750 = vld [vmem:[#allocation2 + $0x4b8] sm:$0xff]
        %v751 = vld [vmem:[#allocation2 + $0x4c0] sm:$0xff]
        %v752 = vld [vmem:[#allocation2 + $0x4c8] sm:$0xff]
        %v753 = vld [vmem:[#allocation2 + $0x4d0] sm:$0x3]
        %v754 = vld [vmem:[#allocation2 + $0x4d8] sm:$0xff]
        %v755 = vld [vmem:[#allocation2 + $0x4e0] sm:$0xff]
        %v756 = vld [vmem:[#allocation2 + $0x4e8] sm:$0xff]
        %v757 = vld [vmem:[#allocation2 + $0x4f0] sm:$0xff]
        %v758 = vld [vmem:[#allocation2 + $0x4f8] sm:$0x3]
        %v759 = vld [vmem:[#allocation2 + $0x500] sm:$0xff]
        %v760 = vld [vmem:[#allocation2 + $0x508] sm:$0xff]
        %v761 = vld [vmem:[#allocation2 + $0x510] sm:$0xff]
        %v762 = vld [vmem:[#allocation2 + $0x518] sm:$0xff]
        %v763 = vld [vmem:[#allocation2 + $0x520] sm:$0x3]
        %v764 = vld [vmem:[#allocation2 + $0x528] sm:$0xff]
        %v765 = vld [vmem:[#allocation2 + $0x530] sm:$0xff]
        %v766 = vld [vmem:[#allocation2 + $0x538] sm:$0xff]
        %v767 = vld [vmem:[#allocation2 + $0x540] sm:$0xff]
        %v768 = vld [vmem:[#allocation2 + $0x548] sm:$0x3]
        %v769 = vpack.c.bf16 %v600, %v599
        %v770 = vpack.c.bf16 %v602, %v601
        %v771 = vpack.c.bf16 %v605, %v604
        %v772 = vpack.c.bf16 %v607, %v606
        %v773 = vpack.c.bf16 %v610, %v609
        %v774 = vpack.c.bf16 %v612, %v611
        %v775 = vpack.c.bf16 %v615, %v614
        %v776 = vpack.c.bf16 %v617, %v616
        %v777 = vpack.c.bf16 %v620, %v619
        %v778 = vpack.c.bf16 %v622, %v621
        %v779 = vpack.c.bf16 %v625, %v624
        %v780 = vpack.c.bf16 %v627, %v626
        %v781 = vpack.c.bf16 %v630, %v629
        %v782 = vpack.c.bf16 %v632, %v631
        %v783 = vpack.c.bf16 %v635, %v634
        %v784 = vpack.c.bf16 %v637, %v636
        %v785 = vpack.c.bf16 %v640, %v639
        %v786 = vpack.c.bf16 %v642, %v641
        %v787 = vpack.c.bf16 %v645, %v644
        %v788 = vpack.c.bf16 %v647, %v646
        %v789 = vpack.c.bf16 %v650, %v649
        %v790 = vpack.c.bf16 %v652, %v651
        %v791 = vpack.c.bf16 %v655, %v654
        %v792 = vpack.c.bf16 %v657, %v656
        %v793 = vpack.c.bf16 %v660, %v659
        %v794 = vpack.c.bf16 %v662, %v661
        %v795 = vpack.c.bf16 %v665, %v664
        %v796 = vpack.c.bf16 %v667, %v666
        %v797 = vpack.c.bf16 %v670, %v669
        %v798 = vpack.c.bf16 %v672, %v671
        %v799 = vpack.c.bf16 %v675, %v674
        %v800 = vpack.c.bf16 %v677, %v676
        %v801 = vpack.c.bf16 %v680, %v679
        %v802 = vpack.c.bf16 %v682, %v681
        %v803 = vpack.c.bf16 %v685, %v684
        %v804 = vpack.c.bf16 %v687, %v686
        %v805 = vpack.c.bf16 %v690, %v689
        %v806 = vpack.c.bf16 %v692, %v691
        %v807 = vpack.c.bf16 %v695, %v694
        %v808 = vpack.c.bf16 %v697, %v696
        %v809 = vpack.c.bf16 %v700, %v699
        %v810 = vpack.c.bf16 %v702, %v701
        %v811 = vpack.c.bf16 %v705, %v704
        %v812 = vpack.c.bf16 %v707, %v706
        %v813 = vpack.c.bf16 %v710, %v709
        %v814 = vpack.c.bf16 %v712, %v711
        %v815 = vpack.c.bf16 %v715, %v714
        %v816 = vpack.c.bf16 %v717, %v716
        %v817 = vpack.c.bf16 %v720, %v719
        %v818 = vpack.c.bf16 %v722, %v721
        %v819 = vpack.c.bf16 %v725, %v724
        %v820 = vpack.c.bf16 %v727, %v726
        %v821 = vpack.c.bf16 %v730, %v729
        %v822 = vpack.c.bf16 %v732, %v731
        %v823 = vpack.c.bf16 %v735, %v734
        %v824 = vpack.c.bf16 %v737, %v736
        %v825 = vpack.c.bf16 %v740, %v739
        %v826 = vpack.c.bf16 %v742, %v741
        %v827 = vpack.c.bf16 %v745, %v744
        %v828 = vpack.c.bf16 %v747, %v746
        %v829 = vpack.c.bf16 %v750, %v749
        %v830 = vpack.c.bf16 %v752, %v751
        %v831 = vpack.c.bf16 %v755, %v754
        %v832 = vpack.c.bf16 %v757, %v756
        %833 = vst.msk [vmem:[#allocation3] sm:$0xff] %vm170, %v769
        %834 = vst.msk [vmem:[#allocation3 + $0x8] sm:$0xff] %vm170, %v770
        %835 = vst.msk [vmem:[#allocation3 + $0x10] sm:$0xff] %vm170, %v771
        %836 = vst.msk [vmem:[#allocation3 + $0x18] sm:$0xff] %vm170, %v772
        %837 = vst.msk [vmem:[#allocation3 + $0x20] sm:$0xff] %vm170, %v773
        %838 = vst.msk [vmem:[#allocation3 + $0x28] sm:$0xff] %vm170, %v774
        %839 = vst.msk [vmem:[#allocation3 + $0x30] sm:$0xff] %vm170, %v775
        %840 = vst.msk [vmem:[#allocation3 + $0x38] sm:$0xff] %vm170, %v776
        %841 = vst.msk [vmem:[#allocation3 + $0x40] sm:$0xff] %vm170, %v777
        %842 = vst.msk [vmem:[#allocation3 + $0x48] sm:$0xff] %vm170, %v778
        %843 = vst.msk [vmem:[#allocation3 + $0x50] sm:$0xff] %vm170, %v779
        %844 = vst.msk [vmem:[#allocation3 + $0x58] sm:$0xff] %vm170, %v780
        %845 = vst.msk [vmem:[#allocation3 + $0x60] sm:$0xff] %vm170, %v781
        %846 = vst.msk [vmem:[#allocation3 + $0x68] sm:$0xff] %vm170, %v782
        %847 = vst.msk [vmem:[#allocation3 + $0x70] sm:$0xff] %vm170, %v783
        %848 = vst.msk [vmem:[#allocation3 + $0x78] sm:$0xff] %vm170, %v784
        %849 = vst.msk [vmem:[#allocation3 + $0x80] sm:$0xff] %vm170, %v785
        %850 = vst.msk [vmem:[#allocation3 + $0x88] sm:$0xff] %vm170, %v786
        %851 = vst.msk [vmem:[#allocation3 + $0x90] sm:$0xff] %vm170, %v787
        %852 = vst.msk [vmem:[#allocation3 + $0x98] sm:$0xff] %vm170, %v788
        %853 = vst.msk [vmem:[#allocation3 + $0xa0] sm:$0xff] %vm170, %v789
        %854 = vst.msk [vmem:[#allocation3 + $0xa8] sm:$0xff] %vm170, %v790
        %855 = vst.msk [vmem:[#allocation3 + $0xb0] sm:$0xff] %vm170, %v791
        %856 = vst.msk [vmem:[#allocation3 + $0xb8] sm:$0xff] %vm170, %v792
        %857 = vst.msk [vmem:[#allocation3 + $0xc0] sm:$0xff] %vm170, %v793
        %858 = vst.msk [vmem:[#allocation3 + $0xc8] sm:$0xff] %vm170, %v794
        %859 = vst.msk [vmem:[#allocation3 + $0xd0] sm:$0xff] %vm170, %v795
        %860 = vst.msk [vmem:[#allocation3 + $0xd8] sm:$0xff] %vm170, %v796
        %861 = vst.msk [vmem:[#allocation3 + $0xe0] sm:$0xff] %vm170, %v797
        %862 = vst.msk [vmem:[#allocation3 + $0xe8] sm:$0xff] %vm170, %v798
        %863 = vst.msk [vmem:[#allocation3 + $0xf0] sm:$0xff] %vm170, %v799
        %864 = vst.msk [vmem:[#allocation3 + $0xf8] sm:$0xff] %vm170, %v800
        %865 = vst.msk [vmem:[#allocation3 + $0x100] sm:$0xff] %vm170, %v801
        %866 = vst.msk [vmem:[#allocation3 + $0x108] sm:$0xff] %vm170, %v802
        %867 = vst.msk [vmem:[#allocation3 + $0x110] sm:$0xff] %vm170, %v803
        %868 = vst.msk [vmem:[#allocation3 + $0x118] sm:$0xff] %vm170, %v804
        %869 = vst.msk [vmem:[#allocation3 + $0x120] sm:$0xff] %vm170, %v805
        %870 = vst.msk [vmem:[#allocation3 + $0x128] sm:$0xff] %vm170, %v806
        %871 = vst.msk [vmem:[#allocation3 + $0x130] sm:$0xff] %vm170, %v807
        %872 = vst.msk [vmem:[#allocation3 + $0x138] sm:$0xff] %vm170, %v808
        %873 = vst.msk [vmem:[#allocation3 + $0x140] sm:$0xff] %vm170, %v809
        %874 = vst.msk [vmem:[#allocation3 + $0x148] sm:$0xff] %vm170, %v810
        %875 = vst.msk [vmem:[#allocation3 + $0x150] sm:$0xff] %vm170, %v811
        %876 = vst.msk [vmem:[#allocation3 + $0x158] sm:$0xff] %vm170, %v812
        %877 = vst.msk [vmem:[#allocation3 + $0x160] sm:$0xff] %vm170, %v813
        %878 = vst.msk [vmem:[#allocation3 + $0x168] sm:$0xff] %vm170, %v814
        %879 = vst.msk [vmem:[#allocation3 + $0x170] sm:$0xff] %vm170, %v815
        %880 = vst.msk [vmem:[#allocation3 + $0x178] sm:$0xff] %vm170, %v816
        %881 = vst.msk [vmem:[#allocation3 + $0x180] sm:$0xff] %vm170, %v817
        %882 = vst.msk [vmem:[#allocation3 + $0x188] sm:$0xff] %vm170, %v818
        %883 = vst.msk [vmem:[#allocation3 + $0x190] sm:$0xff] %vm170, %v819
        %884 = vst.msk [vmem:[#allocation3 + $0x198] sm:$0xff] %vm170, %v820
        %885 = vst.msk [vmem:[#allocation3 + $0x1a0] sm:$0xff] %vm170, %v821
        %886 = vst.msk [vmem:[#allocation3 + $0x1a8] sm:$0xff] %vm170, %v822
        %887 = vst.msk [vmem:[#allocation3 + $0x1b0] sm:$0xff] %vm170, %v823
        %888 = vst.msk [vmem:[#allocation3 + $0x1b8] sm:$0xff] %vm170, %v824
        %889 = vst.msk [vmem:[#allocation3 + $0x1c0] sm:$0xff] %vm170, %v825
        %890 = vst.msk [vmem:[#allocation3 + $0x1c8] sm:$0xff] %vm170, %v826
        %891 = vst.msk [vmem:[#allocation3 + $0x1d0] sm:$0xff] %vm170, %v827
        %892 = vst.msk [vmem:[#allocation3 + $0x1d8] sm:$0xff] %vm170, %v828
        %893 = vst.msk [vmem:[#allocation3 + $0x1e0] sm:$0xff] %vm170, %v829
        %894 = vst.msk [vmem:[#allocation3 + $0x1e8] sm:$0xff] %vm170, %v830
        %895 = vst.msk [vmem:[#allocation3 + $0x1f0] sm:$0xff] %vm170, %v831
        %896 = vst.msk [vmem:[#allocation3 + $0x1f8] sm:$0xff] %vm170, %v832
        %vm1057 = vcmask 1046528
        %v1058 = vrot.slane %v599, 1
        %v1059 = vrot.slane %v600, 1
        %v1060 = vsel %vm1057, %v1058, %v1059
        %v1061 = vrot.slane %v601, 1
        %v1062 = vsel %vm1057, %v1059, %v1061
        %v1063 = vrot.slane %v602, 1
        %v1064 = vsel %vm1057, %v1061, %v1063
        %v1065 = vrot.slane %v603, 1
        %v1066 = vsel %vm1057, %v1063, %v1065
        %v1067 = vrot.slane %v604, 1
        %v1068 = vrot.slane %v605, 1
        %v1069 = vsel %vm1057, %v1067, %v1068
        %v1070 = vrot.slane %v606, 1
        %v1071 = vsel %vm1057, %v1068, %v1070
        %v1072 = vrot.slane %v607, 1
        %v1073 = vsel %vm1057, %v1070, %v1072
        %v1074 = vrot.slane %v608, 1
        %v1075 = vsel %vm1057, %v1072, %v1074
        %v1076 = vrot.slane %v609, 1
        %v1077 = vrot.slane %v610, 1
        %v1078 = vsel %vm1057, %v1076, %v1077
        %v1079 = vrot.slane %v611, 1
        %v1080 = vsel %vm1057, %v1077, %v1079
        %v1081 = vrot.slane %v612, 1
        %v1082 = vsel %vm1057, %v1079, %v1081
        %v1083 = vrot.slane %v613, 1
        %v1084 = vsel %vm1057, %v1081, %v1083
        %v1085 = vrot.slane %v614, 1
        %v1086 = vrot.slane %v615, 1
        %v1087 = vsel %vm1057, %v1085, %v1086
        %v1088 = vrot.slane %v616, 1
        %v1089 = vsel %vm1057, %v1086, %v1088
        %v1090 = vrot.slane %v617, 1
        %v1091 = vsel %vm1057, %v1088, %v1090
        %v1092 = vrot.slane %v618, 1
        %v1093 = vsel %vm1057, %v1090, %v1092
        %v1094 = vrot.slane %v619, 1
        %v1095 = vrot.slane %v620, 1
        %v1096 = vsel %vm1057, %v1094, %v1095
        %v1097 = vrot.slane %v621, 1
        %v1098 = vsel %vm1057, %v1095, %v1097
        %v1099 = vrot.slane %v622, 1
        %v1100 = vsel %vm1057, %v1097, %v1099
        %v1101 = vrot.slane %v623, 1
        %v1102 = vsel %vm1057, %v1099, %v1101
        %v1103 = vrot.slane %v624, 1
        %v1104 = vrot.slane %v625, 1
        %v1105 = vsel %vm1057, %v1103, %v1104
        %v1106 = vrot.slane %v626, 1
        %v1107 = vsel %vm1057, %v1104, %v1106
        %v1108 = vrot.slane %v627, 1
        %v1109 = vsel %vm1057, %v1106, %v1108
        %v1110 = vrot.slane %v628, 1
        %v1111 = vsel %vm1057, %v1108, %v1110
        %v1112 = vrot.slane %v629, 1
        %v1113 = vrot.slane %v630, 1
        %v1114 = vsel %vm1057, %v1112, %v1113
        %v1115 = vrot.slane %v631, 1
        %v1116 = vsel %vm1057, %v1113, %v1115
        %v1117 = vrot.slane %v632, 1
        %v1118 = vsel %vm1057, %v1115, %v1117
        %v1119 = vrot.slane %v633, 1
        %v1120 = vsel %vm1057, %v1117, %v1119
        %v1121 = vrot.slane %v634, 1
        %v1122 = vrot.slane %v635, 1
        %v1123 = vsel %vm1057, %v1121, %v1122
        %v1124 = vrot.slane %v636, 1
        %v1125 = vsel %vm1057, %v1122, %v1124
        %v1126 = vrot.slane %v637, 1
        %v1127 = vsel %vm1057, %v1124, %v1126
        %v1128 = vrot.slane %v638, 1
        %v1129 = vsel %vm1057, %v1126, %v1128
        %v1130 = vrot.slane %v639, 1
        %v1131 = vrot.slane %v640, 1
        %v1132 = vsel %vm1057, %v1130, %v1131
        %v1133 = vrot.slane %v641, 1
        %v1134 = vsel %vm1057, %v1131, %v1133
        %v1135 = vrot.slane %v642, 1
        %v1136 = vsel %vm1057, %v1133, %v1135
        %v1137 = vrot.slane %v643, 1
        %v1138 = vsel %vm1057, %v1135, %v1137
        %v1139 = vrot.slane %v644, 1
        %v1140 = vrot.slane %v645, 1
        %v1141 = vsel %vm1057, %v1139, %v1140
        %v1142 = vrot.slane %v646, 1
        %v1143 = vsel %vm1057, %v1140, %v1142
        %v1144 = vrot.slane %v647, 1
        %v1145 = vsel %vm1057, %v1142, %v1144
        %v1146 = vrot.slane %v648, 1
        %v1147 = vsel %vm1057, %v1144, %v1146
        %v1148 = vrot.slane %v649, 1
        %v1149 = vrot.slane %v650, 1
        %v1150 = vsel %vm1057, %v1148, %v1149
        %v1151 = vrot.slane %v651, 1
        %v1152 = vsel %vm1057, %v1149, %v1151
        %v1153 = vrot.slane %v652, 1
        %v1154 = vsel %vm1057, %v1151, %v1153
        %v1155 = vrot.slane %v653, 1
        %v1156 = vsel %vm1057, %v1153, %v1155
        %v1157 = vrot.slane %v654, 1
        %v1158 = vrot.slane %v655, 1
        %v1159 = vsel %vm1057, %v1157, %v1158
        %v1160 = vrot.slane %v656, 1
        %v1161 = vsel %vm1057, %v1158, %v1160
        %v1162 = vrot.slane %v657, 1
        %v1163 = vsel %vm1057, %v1160, %v1162
        %v1164 = vrot.slane %v658, 1
        %v1165 = vsel %vm1057, %v1162, %v1164
        %v1166 = vrot.slane %v659, 1
        %v1167 = vrot.slane %v660, 1
        %v1168 = vsel %vm1057, %v1166, %v1167
        %v1169 = vrot.slane %v661, 1
        %v1170 = vsel %vm1057, %v1167, %v1169
        %v1171 = vrot.slane %v662, 1
        %v1172 = vsel %vm1057, %v1169, %v1171
        %v1173 = vrot.slane %v663, 1
        %v1174 = vsel %vm1057, %v1171, %v1173
        %v1175 = vrot.slane %v664, 1
        %v1176 = vrot.slane %v665, 1
        %v1177 = vsel %vm1057, %v1175, %v1176
        %v1178 = vrot.slane %v666, 1
        %v1179 = vsel %vm1057, %v1176, %v1178
        %v1180 = vrot.slane %v667, 1
        %v1181 = vsel %vm1057, %v1178, %v1180
        %v1182 = vrot.slane %v668, 1
        %v1183 = vsel %vm1057, %v1180, %v1182
        %v1184 = vrot.slane %v669, 1
        %v1185 = vrot.slane %v670, 1
        %v1186 = vsel %vm1057, %v1184, %v1185
        %v1187 = vrot.slane %v671, 1
        %v1188 = vsel %vm1057, %v1185, %v1187
        %v1189 = vrot.slane %v672, 1
        %v1190 = vsel %vm1057, %v1187, %v1189
        %v1191 = vrot.slane %v673, 1
        %v1192 = vsel %vm1057, %v1189, %v1191
        %v1193 = vrot.slane %v674, 1
        %v1194 = vrot.slane %v675, 1
        %v1195 = vsel %vm1057, %v1193, %v1194
        %v1196 = vrot.slane %v676, 1
        %v1197 = vsel %vm1057, %v1194, %v1196
        %v1198 = vrot.slane %v677, 1
        %v1199 = vsel %vm1057, %v1196, %v1198
        %v1200 = vrot.slane %v678, 1
        %v1201 = vsel %vm1057, %v1198, %v1200
        %v1202 = vrot.slane %v679, 1
        %v1203 = vrot.slane %v680, 1
        %v1204 = vsel %vm1057, %v1202, %v1203
        %v1205 = vrot.slane %v681, 1
        %v1206 = vsel %vm1057, %v1203, %v1205
        %v1207 = vrot.slane %v682, 1
        %v1208 = vsel %vm1057, %v1205, %v1207
        %v1209 = vrot.slane %v683, 1
        %v1210 = vsel %vm1057, %v1207, %v1209
        %v1211 = vrot.slane %v684, 1
        %v1212 = vrot.slane %v685, 1
        %v1213 = vsel %vm1057, %v1211, %v1212
        %v1214 = vrot.slane %v686, 1
        %v1215 = vsel %vm1057, %v1212, %v1214
        %v1216 = vrot.slane %v687, 1
        %v1217 = vsel %vm1057, %v1214, %v1216
        %v1218 = vrot.slane %v688, 1
        %v1219 = vsel %vm1057, %v1216, %v1218
        %v1220 = vrot.slane %v689, 1
        %v1221 = vrot.slane %v690, 1
        %v1222 = vsel %vm1057, %v1220, %v1221
        %v1223 = vrot.slane %v691, 1
        %v1224 = vsel %vm1057, %v1221, %v1223
        %v1225 = vrot.slane %v692, 1
        %v1226 = vsel %vm1057, %v1223, %v1225
        %v1227 = vrot.slane %v693, 1
        %v1228 = vsel %vm1057, %v1225, %v1227
        %v1229 = vrot.slane %v694, 1
        %v1230 = vrot.slane %v695, 1
        %v1231 = vsel %vm1057, %v1229, %v1230
        %v1232 = vrot.slane %v696, 1
        %v1233 = vsel %vm1057, %v1230, %v1232
        %v1234 = vrot.slane %v697, 1
        %v1235 = vsel %vm1057, %v1232, %v1234
        %v1236 = vrot.slane %v698, 1
        %v1237 = vsel %vm1057, %v1234, %v1236
        %v1238 = vrot.slane %v699, 1
        %v1239 = vrot.slane %v700, 1
        %v1240 = vsel %vm1057, %v1238, %v1239
        %v1241 = vrot.slane %v701, 1
        %v1242 = vsel %vm1057, %v1239, %v1241
        %v1243 = vrot.slane %v702, 1
        %v1244 = vsel %vm1057, %v1241, %v1243
        %v1245 = vrot.slane %v703, 1
        %v1246 = vsel %vm1057, %v1243, %v1245
        %v1247 = vrot.slane %v704, 1
        %v1248 = vrot.slane %v705, 1
        %v1249 = vsel %vm1057, %v1247, %v1248
        %v1250 = vrot.slane %v706, 1
        %v1251 = vsel %vm1057, %v1248, %v1250
        %v1252 = vrot.slane %v707, 1
        %v1253 = vsel %vm1057, %v1250, %v1252
        %v1254 = vrot.slane %v708, 1
        %v1255 = vsel %vm1057, %v1252, %v1254
        %v1256 = vrot.slane %v709, 1
        %v1257 = vrot.slane %v710, 1
        %v1258 = vsel %vm1057, %v1256, %v1257
        %v1259 = vrot.slane %v711, 1
        %v1260 = vsel %vm1057, %v1257, %v1259
        %v1261 = vrot.slane %v712, 1
        %v1262 = vsel %vm1057, %v1259, %v1261
        %v1263 = vrot.slane %v713, 1
        %v1264 = vsel %vm1057, %v1261, %v1263
        %v1265 = vrot.slane %v714, 1
        %v1266 = vrot.slane %v715, 1
        %v1267 = vsel %vm1057, %v1265, %v1266
        %v1268 = vrot.slane %v716, 1
        %v1269 = vsel %vm1057, %v1266, %v1268
        %v1270 = vrot.slane %v717, 1
        %v1271 = vsel %vm1057, %v1268, %v1270
        %v1272 = vrot.slane %v718, 1
        %v1273 = vsel %vm1057, %v1270, %v1272
        %v1274 = vrot.slane %v719, 1
        %v1275 = vrot.slane %v720, 1
        %v1276 = vsel %vm1057, %v1274, %v1275
        %v1277 = vrot.slane %v721, 1
        %v1278 = vsel %vm1057, %v1275, %v1277
        %v1279 = vrot.slane %v722, 1
        %v1280 = vsel %vm1057, %v1277, %v1279
        %v1281 = vrot.slane %v723, 1
        %v1282 = vsel %vm1057, %v1279, %v1281
        %v1283 = vrot.slane %v724, 1
        %v1284 = vrot.slane %v725, 1
        %v1285 = vsel %vm1057, %v1283, %v1284
        %v1286 = vrot.slane %v726, 1
        %v1287 = vsel %vm1057, %v1284, %v1286
        %v1288 = vrot.slane %v727, 1
        %v1289 = vsel %vm1057, %v1286, %v1288
        %v1290 = vrot.slane %v728, 1
        %v1291 = vsel %vm1057, %v1288, %v1290
        %v1292 = vrot.slane %v729, 1
        %v1293 = vrot.slane %v730, 1
        %v1294 = vsel %vm1057, %v1292, %v1293
        %v1295 = vrot.slane %v731, 1
        %v1296 = vsel %vm1057, %v1293, %v1295
        %v1297 = vrot.slane %v732, 1
        %v1298 = vsel %vm1057, %v1295, %v1297
        %v1299 = vrot.slane %v733, 1
        %v1300 = vsel %vm1057, %v1297, %v1299
        %v1301 = vrot.slane %v734, 1
        %v1302 = vrot.slane %v735, 1
        %v1303 = vsel %vm1057, %v1301, %v1302
        %v1304 = vrot.slane %v736, 1
        %v1305 = vsel %vm1057, %v1302, %v1304
        %v1306 = vrot.slane %v737, 1
        %v1307 = vsel %vm1057, %v1304, %v1306
        %v1308 = vrot.slane %v738, 1
        %v1309 = vsel %vm1057, %v1306, %v1308
        %v1310 = vrot.slane %v739, 1
        %v1311 = vrot.slane %v740, 1
        %v1312 = vsel %vm1057, %v1310, %v1311
        %v1313 = vrot.slane %v741, 1
        %v1314 = vsel %vm1057, %v1311, %v1313
        %v1315 = vrot.slane %v742, 1
        %v1316 = vsel %vm1057, %v1313, %v1315
        %v1317 = vrot.slane %v743, 1
        %v1318 = vsel %vm1057, %v1315, %v1317
        %v1319 = vrot.slane %v744, 1
        %v1320 = vrot.slane %v745, 1
        %v1321 = vsel %vm1057, %v1319, %v1320
        %v1322 = vrot.slane %v746, 1
        %v1323 = vsel %vm1057, %v1320, %v1322
        %v1324 = vrot.slane %v747, 1
        %v1325 = vsel %vm1057, %v1322, %v1324
        %v1326 = vrot.slane %v748, 1
        %v1327 = vsel %vm1057, %v1324, %v1326
        %v1328 = vrot.slane %v749, 1
        %v1329 = vrot.slane %v750, 1
        %v1330 = vsel %vm1057, %v1328, %v1329
        %v1331 = vrot.slane %v751, 1
        %v1332 = vsel %vm1057, %v1329, %v1331
        %v1333 = vrot.slane %v752, 1
        %v1334 = vsel %vm1057, %v1331, %v1333
        %v1335 = vrot.slane %v753, 1
        %v1336 = vsel %vm1057, %v1333, %v1335
        %v1337 = vrot.slane %v754, 1
        %v1338 = vrot.slane %v755, 1
        %v1339 = vsel %vm1057, %v1337, %v1338
        %v1340 = vrot.slane %v756, 1
        %v1341 = vsel %vm1057, %v1338, %v1340
        %v1342 = vrot.slane %v757, 1
        %v1343 = vsel %vm1057, %v1340, %v1342
        %v1344 = vrot.slane %v758, 1
        %v1345 = vsel %vm1057, %v1342, %v1344
        %v1474 = vpack.c.bf16 %v1062, %v1060
        %v1475 = vpack.c.bf16 %v1066, %v1064
        %v1476 = vpack.c.bf16 %v1071, %v1069
        %v1477 = vpack.c.bf16 %v1075, %v1073
        %v1478 = vpack.c.bf16 %v1080, %v1078
        %v1479 = vpack.c.bf16 %v1084, %v1082
        %v1480 = vpack.c.bf16 %v1089, %v1087
        %v1481 = vpack.c.bf16 %v1093, %v1091
        %v1482 = vpack.c.bf16 %v1098, %v1096
        %v1483 = vpack.c.bf16 %v1102, %v1100
        %v1484 = vpack.c.bf16 %v1107, %v1105
        %v1485 = vpack.c.bf16 %v1111, %v1109
        %v1486 = vpack.c.bf16 %v1116, %v1114
        %v1487 = vpack.c.bf16 %v1120, %v1118
        %v1488 = vpack.c.bf16 %v1125, %v1123
        %v1489 = vpack.c.bf16 %v1129, %v1127
        %v1490 = vpack.c.bf16 %v1134, %v1132
        %v1491 = vpack.c.bf16 %v1138, %v1136
        %v1492 = vpack.c.bf16 %v1143, %v1141
        %v1493 = vpack.c.bf16 %v1147, %v1145
        %v1494 = vpack.c.bf16 %v1152, %v1150
        %v1495 = vpack.c.bf16 %v1156, %v1154
        %v1496 = vpack.c.bf16 %v1161, %v1159
        %v1497 = vpack.c.bf16 %v1165, %v1163
        %v1498 = vpack.c.bf16 %v1170, %v1168
        %v1499 = vpack.c.bf16 %v1174, %v1172
        %v1500 = vpack.c.bf16 %v1179, %v1177
        %v1501 = vpack.c.bf16 %v1183, %v1181
        %v1502 = vpack.c.bf16 %v1188, %v1186
        %v1503 = vpack.c.bf16 %v1192, %v1190
        %v1504 = vpack.c.bf16 %v1197, %v1195
        %v1505 = vpack.c.bf16 %v1201, %v1199
        %v1506 = vpack.c.bf16 %v1206, %v1204
        %v1507 = vpack.c.bf16 %v1210, %v1208
        %v1508 = vpack.c.bf16 %v1215, %v1213
        %v1509 = vpack.c.bf16 %v1219, %v1217
        %v1510 = vpack.c.bf16 %v1224, %v1222
        %v1511 = vpack.c.bf16 %v1228, %v1226
        %v1512 = vpack.c.bf16 %v1233, %v1231
        %v1513 = vpack.c.bf16 %v1237, %v1235
        %v1514 = vpack.c.bf16 %v1242, %v1240
        %v1515 = vpack.c.bf16 %v1246, %v1244
        %v1516 = vpack.c.bf16 %v1251, %v1249
        %v1517 = vpack.c.bf16 %v1255, %v1253
        %v1518 = vpack.c.bf16 %v1260, %v1258
        %v1519 = vpack.c.bf16 %v1264, %v1262
        %v1520 = vpack.c.bf16 %v1269, %v1267
        %v1521 = vpack.c.bf16 %v1273, %v1271
        %v1522 = vpack.c.bf16 %v1278, %v1276
        %v1523 = vpack.c.bf16 %v1282, %v1280
        %v1524 = vpack.c.bf16 %v1287, %v1285
        %v1525 = vpack.c.bf16 %v1291, %v1289
        %v1526 = vpack.c.bf16 %v1296, %v1294
        %v1527 = vpack.c.bf16 %v1300, %v1298
        %v1528 = vpack.c.bf16 %v1305, %v1303
        %v1529 = vpack.c.bf16 %v1309, %v1307
        %v1530 = vpack.c.bf16 %v1314, %v1312
        %v1531 = vpack.c.bf16 %v1318, %v1316
        %v1532 = vpack.c.bf16 %v1323, %v1321
        %v1533 = vpack.c.bf16 %v1327, %v1325
        %v1534 = vpack.c.bf16 %v1332, %v1330
        %v1535 = vpack.c.bf16 %v1336, %v1334
        %v1536 = vpack.c.bf16 %v1341, %v1339
        %v1537 = vpack.c.bf16 %v1345, %v1343
        %1602 = vrot.lane.b32.xlu0 %v1474, 3
        %v1603 = vpop.permute.xlu0 %1602
        %1604 = vrot.lane.b32.xlu0 %v1475, 3
        %v1605 = vpop.permute.xlu0 %1604
        %1606 = vrot.lane.b32.xlu0 %v1476, 3
        %v1607 = vpop.permute.xlu0 %1606
        %1608 = vrot.lane.b32.xlu0 %v1477, 3
        %v1609 = vpop.permute.xlu0 %1608
        %1610 = vrot.lane.b32.xlu0 %v1478, 3
        %v1611 = vpop.permute.xlu0 %1610
        %1612 = vrot.lane.b32.xlu0 %v1479, 3
        %v1613 = vpop.permute.xlu0 %1612
        %1614 = vrot.lane.b32.xlu0 %v1480, 3
        %v1615 = vpop.permute.xlu0 %1614
        %1616 = vrot.lane.b32.xlu0 %v1481, 3
        %v1617 = vpop.permute.xlu0 %1616
        %1618 = vrot.lane.b32.xlu0 %v1482, 3
        %v1619 = vpop.permute.xlu0 %1618
        %1620 = vrot.lane.b32.xlu0 %v1483, 3
        %v1621 = vpop.permute.xlu0 %1620
        %1622 = vrot.lane.b32.xlu0 %v1484, 3
        %v1623 = vpop.permute.xlu0 %1622
        %1624 = vrot.lane.b32.xlu0 %v1485, 3
        %v1625 = vpop.permute.xlu0 %1624
        %1626 = vrot.lane.b32.xlu0 %v1486, 3
        %v1627 = vpop.permute.xlu0 %1626
        %1628 = vrot.lane.b32.xlu0 %v1487, 3
        %v1629 = vpop.permute.xlu0 %1628
        %1630 = vrot.lane.b32.xlu0 %v1488, 3
        %v1631 = vpop.permute.xlu0 %1630
        %1632 = vrot.lane.b32.xlu0 %v1489, 3
        %v1633 = vpop.permute.xlu0 %1632
        %1634 = vrot.lane.b32.xlu0 %v1490, 3
        %v1635 = vpop.permute.xlu0 %1634
        %1636 = vrot.lane.b32.xlu0 %v1491, 3
        %v1637 = vpop.permute.xlu0 %1636
        %1638 = vrot.lane.b32.xlu0 %v1492, 3
        %v1639 = vpop.permute.xlu0 %1638
        %1640 = vrot.lane.b32.xlu0 %v1493, 3
        %v1641 = vpop.permute.xlu0 %1640
        %1642 = vrot.lane.b32.xlu0 %v1494, 3
        %v1643 = vpop.permute.xlu0 %1642
        %1644 = vrot.lane.b32.xlu0 %v1495, 3
        %v1645 = vpop.permute.xlu0 %1644
        %1646 = vrot.lane.b32.xlu0 %v1496, 3
        %v1647 = vpop.permute.xlu0 %1646
        %1648 = vrot.lane.b32.xlu0 %v1497, 3
        %v1649 = vpop.permute.xlu0 %1648
        %1650 = vrot.lane.b32.xlu0 %v1498, 3
        %v1651 = vpop.permute.xlu0 %1650
        %1652 = vrot.lane.b32.xlu0 %v1499, 3
        %v1653 = vpop.permute.xlu0 %1652
        %1654 = vrot.lane.b32.xlu0 %v1500, 3
        %v1655 = vpop.permute.xlu0 %1654
        %1656 = vrot.lane.b32.xlu0 %v1501, 3
        %v1657 = vpop.permute.xlu0 %1656
        %1658 = vrot.lane.b32.xlu0 %v1502, 3
        %v1659 = vpop.permute.xlu0 %1658
        %1660 = vrot.lane.b32.xlu0 %v1503, 3
        %v1661 = vpop.permute.xlu0 %1660
        %1662 = vrot.lane.b32.xlu0 %v1504, 3
        %v1663 = vpop.permute.xlu0 %1662
        %1664 = vrot.lane.b32.xlu0 %v1505, 3
        %v1665 = vpop.permute.xlu0 %1664
        %1666 = vrot.lane.b32.xlu0 %v1506, 3
        %v1667 = vpop.permute.xlu0 %1666
        %1668 = vrot.lane.b32.xlu0 %v1507, 3
        %v1669 = vpop.permute.xlu0 %1668
        %1670 = vrot.lane.b32.xlu0 %v1508, 3
        %v1671 = vpop.permute.xlu0 %1670
        %1672 = vrot.lane.b32.xlu0 %v1509, 3
        %v1673 = vpop.permute.xlu0 %1672
        %1674 = vrot.lane.b32.xlu0 %v1510, 3
        %v1675 = vpop.permute.xlu0 %1674
        %1676 = vrot.lane.b32.xlu0 %v1511, 3
        %v1677 = vpop.permute.xlu0 %1676
        %1678 = vrot.lane.b32.xlu0 %v1512, 3
        %v1679 = vpop.permute.xlu0 %1678
        %1680 = vrot.lane.b32.xlu0 %v1513, 3
        %v1681 = vpop.permute.xlu0 %1680
        %1682 = vrot.lane.b32.xlu0 %v1514, 3
        %v1683 = vpop.permute.xlu0 %1682
        %1684 = vrot.lane.b32.xlu0 %v1515, 3
        %v1685 = vpop.permute.xlu0 %1684
        %1686 = vrot.lane.b32.xlu0 %v1516, 3
        %v1687 = vpop.permute.xlu0 %1686
        %1688 = vrot.lane.b32.xlu0 %v1517, 3
        %v1689 = vpop.permute.xlu0 %1688
        %1690 = vrot.lane.b32.xlu0 %v1518, 3
        %v1691 = vpop.permute.xlu0 %1690
        %1692 = vrot.lane.b32.xlu0 %v1519, 3
        %v1693 = vpop.permute.xlu0 %1692
        %1694 = vrot.lane.b32.xlu0 %v1520, 3
        %v1695 = vpop.permute.xlu0 %1694
        %1696 = vrot.lane.b32.xlu0 %v1521, 3
        %v1697 = vpop.permute.xlu0 %1696
        %1698 = vrot.lane.b32.xlu0 %v1522, 3
        %v1699 = vpop.permute.xlu0 %1698
        %1700 = vrot.lane.b32.xlu0 %v1523, 3
        %v1701 = vpop.permute.xlu0 %1700
        %1702 = vrot.lane.b32.xlu0 %v1524, 3
        %v1703 = vpop.permute.xlu0 %1702
        %1704 = vrot.lane.b32.xlu0 %v1525, 3
        %v1705 = vpop.permute.xlu0 %1704
        %1706 = vrot.lane.b32.xlu0 %v1526, 3
        %v1707 = vpop.permute.xlu0 %1706
        %1708 = vrot.lane.b32.xlu0 %v1527, 3
        %v1709 = vpop.permute.xlu0 %1708
        %1710 = vrot.lane.b32.xlu0 %v1528, 3
        %v1711 = vpop.permute.xlu0 %1710
        %1712 = vrot.lane.b32.xlu0 %v1529, 3
        %v1713 = vpop.permute.xlu0 %1712
        %1714 = vrot.lane.b32.xlu0 %v1530, 3
        %v1715 = vpop.permute.xlu0 %1714
        %1716 = vrot.lane.b32.xlu0 %v1531, 3
        %v1717 = vpop.permute.xlu0 %1716
        %1718 = vrot.lane.b32.xlu0 %v1532, 3
        %v1719 = vpop.permute.xlu0 %1718
        %1720 = vrot.lane.b32.xlu0 %v1533, 3
        %v1721 = vpop.permute.xlu0 %1720
        %1722 = vrot.lane.b32.xlu0 %v1534, 3
        %v1723 = vpop.permute.xlu0 %1722
        %1724 = vrot.lane.b32.xlu0 %v1535, 3
        %v1725 = vpop.permute.xlu0 %1724
        %1726 = vrot.lane.b32.xlu0 %v1536, 3
        %v1727 = vpop.permute.xlu0 %1726
        %1728 = vrot.lane.b32.xlu0 %v1537, 3
        %v1729 = vpop.permute.xlu0 %1728
        %vm1794 = vcmask 48152
        %1795 = vst.msk [vmem:[#allocation3] sm:$0xff] %vm1794, %v1603
        %1796 = vst.msk [vmem:[#allocation3 + $0x8] sm:$0xff] %vm1794, %v1605
        %1797 = vst.msk [vmem:[#allocation3 + $0x10] sm:$0xff] %vm1794, %v1607
        %1798 = vst.msk [vmem:[#allocation3 + $0x18] sm:$0xff] %vm1794, %v1609
        %1799 = vst.msk [vmem:[#allocation3 + $0x20] sm:$0xff] %vm1794, %v1611
        %1800 = vst.msk [vmem:[#allocation3 + $0x28] sm:$0xff] %vm1794, %v1613
        %1801 = vst.msk [vmem:[#allocation3 + $0x30] sm:$0xff] %vm1794, %v1615
        %1802 = vst.msk [vmem:[#allocation3 + $0x38] sm:$0xff] %vm1794, %v1617
        %1803 = vst.msk [vmem:[#allocation3 + $0x40] sm:$0xff] %vm1794, %v1619
        %1804 = vst.msk [vmem:[#allocation3 + $0x48] sm:$0xff] %vm1794, %v1621
        %1805 = vst.msk [vmem:[#allocation3 + $0x50] sm:$0xff] %vm1794, %v1623
        %1806 = vst.msk [vmem:[#allocation3 + $0x58] sm:$0xff] %vm1794, %v1625
        %1807 = vst.msk [vmem:[#allocation3 + $0x60] sm:$0xff] %vm1794, %v1627
        %1808 = vst.msk [vmem:[#allocation3 + $0x68] sm:$0xff] %vm1794, %v1629
        %1809 = vst.msk [vmem:[#allocation3 + $0x70] sm:$0xff] %vm1794, %v1631
        %1810 = vst.msk [vmem:[#allocation3 + $0x78] sm:$0xff] %vm1794, %v1633
        %1811 = vst.msk [vmem:[#allocation3 + $0x80] sm:$0xff] %vm1794, %v1635
        %1812 = vst.msk [vmem:[#allocation3 + $0x88] sm:$0xff] %vm1794, %v1637
        %1813 = vst.msk [vmem:[#allocation3 + $0x90] sm:$0xff] %vm1794, %v1639
        %1814 = vst.msk [vmem:[#allocation3 + $0x98] sm:$0xff] %vm1794, %v1641
        %1815 = vst.msk [vmem:[#allocation3 + $0xa0] sm:$0xff] %vm1794, %v1643
        %1816 = vst.msk [vmem:[#allocation3 + $0xa8] sm:$0xff] %vm1794, %v1645
        %1817 = vst.msk [vmem:[#allocation3 + $0xb0] sm:$0xff] %vm1794, %v1647
        %1818 = vst.msk [vmem:[#allocation3 + $0xb8] sm:$0xff] %vm1794, %v1649
        %1819 = vst.msk [vmem:[#allocation3 + $0xc0] sm:$0xff] %vm1794, %v1651
        %1820 = vst.msk [vmem:[#allocation3 + $0xc8] sm:$0xff] %vm1794, %v1653
        %1821 = vst.msk [vmem:[#allocation3 + $0xd0] sm:$0xff] %vm1794, %v1655
        %1822 = vst.msk [vmem:[#allocation3 + $0xd8] sm:$0xff] %vm1794, %v1657
        %1823 = vst.msk [vmem:[#allocation3 + $0xe0] sm:$0xff] %vm1794, %v1659
        %1824 = vst.msk [vmem:[#allocation3 + $0xe8] sm:$0xff] %vm1794, %v1661
        %1825 = vst.msk [vmem:[#allocation3 + $0xf0] sm:$0xff] %vm1794, %v1663
        %1826 = vst.msk [vmem:[#allocation3 + $0xf8] sm:$0xff] %vm1794, %v1665
        %1827 = vst.msk [vmem:[#allocation3 + $0x100] sm:$0xff] %vm1794, %v1667
        %1828 = vst.msk [vmem:[#allocation3 + $0x108] sm:$0xff] %vm1794, %v1669
        %1829 = vst.msk [vmem:[#allocation3 + $0x110] sm:$0xff] %vm1794, %v1671
        %1830 = vst.msk [vmem:[#allocation3 + $0x118] sm:$0xff] %vm1794, %v1673
        %1831 = vst.msk [vmem:[#allocation3 + $0x120] sm:$0xff] %vm1794, %v1675
        %1832 = vst.msk [vmem:[#allocation3 + $0x128] sm:$0xff] %vm1794, %v1677
        %1833 = vst.msk [vmem:[#allocation3 + $0x130] sm:$0xff] %vm1794, %v1679
        %1834 = vst.msk [vmem:[#allocation3 + $0x138] sm:$0xff] %vm1794, %v1681
        %1835 = vst.msk [vmem:[#allocation3 + $0x140] sm:$0xff] %vm1794, %v1683
        %1836 = vst.msk [vmem:[#allocation3 + $0x148] sm:$0xff] %vm1794, %v1685
        %1837 = vst.msk [vmem:[#allocation3 + $0x150] sm:$0xff] %vm1794, %v1687
        %1838 = vst.msk [vmem:[#allocation3 + $0x158] sm:$0xff] %vm1794, %v1689
        %1839 = vst.msk [vmem:[#allocation3 + $0x160] sm:$0xff] %vm1794, %v1691
        %1840 = vst.msk [vmem:[#allocation3 + $0x168] sm:$0xff] %vm1794, %v1693
        %1841 = vst.msk [vmem:[#allocation3 + $0x170] sm:$0xff] %vm1794, %v1695
        %1842 = vst.msk [vmem:[#allocation3 + $0x178] sm:$0xff] %vm1794, %v1697
        %1843 = vst.msk [vmem:[#allocation3 + $0x180] sm:$0xff] %vm1794, %v1699
        %1844 = vst.msk [vmem:[#allocation3 + $0x188] sm:$0xff] %vm1794, %v1701
        %1845 = vst.msk [vmem:[#allocation3 + $0x190] sm:$0xff] %vm1794, %v1703
        %1846 = vst.msk [vmem:[#allocation3 + $0x198] sm:$0xff] %vm1794, %v1705
        %1847 = vst.msk [vmem:[#allocation3 + $0x1a0] sm:$0xff] %vm1794, %v1707
        %1848 = vst.msk [vmem:[#allocation3 + $0x1a8] sm:$0xff] %vm1794, %v1709
        %1849 = vst.msk [vmem:[#allocation3 + $0x1b0] sm:$0xff] %vm1794, %v1711
        %1850 = vst.msk [vmem:[#allocation3 + $0x1b8] sm:$0xff] %vm1794, %v1713
        %1851 = vst.msk [vmem:[#allocation3 + $0x1c0] sm:$0xff] %vm1794, %v1715
        %1852 = vst.msk [vmem:[#allocation3 + $0x1c8] sm:$0xff] %vm1794, %v1717
        %1853 = vst.msk [vmem:[#allocation3 + $0x1d0] sm:$0xff] %vm1794, %v1719
        %1854 = vst.msk [vmem:[#allocation3 + $0x1d8] sm:$0xff] %vm1794, %v1721
        %1855 = vst.msk [vmem:[#allocation3 + $0x1e0] sm:$0xff] %vm1794, %v1723
        %1856 = vst.msk [vmem:[#allocation3 + $0x1e8] sm:$0xff] %vm1794, %v1725
        %1857 = vst.msk [vmem:[#allocation3 + $0x1f0] sm:$0xff] %vm1794, %v1727
        %1858 = vst.msk [vmem:[#allocation3 + $0x1f8] sm:$0xff] %vm1794, %v1729
        %vm1859 = vcmask 1045504
        %v1860 = vrot.slane %v599, 2
        %v1861 = vrot.slane %v600, 2
        %v1862 = vsel %vm1859, %v1860, %v1861
        %v1863 = vrot.slane %v601, 2
        %v1864 = vsel %vm1859, %v1861, %v1863
        %v1865 = vrot.slane %v602, 2
        %v1866 = vsel %vm1859, %v1863, %v1865
        %v1867 = vrot.slane %v603, 2
        %v1868 = vsel %vm1859, %v1865, %v1867
        %v1869 = vrot.slane %v604, 2
        %v1870 = vrot.slane %v605, 2
        %v1871 = vsel %vm1859, %v1869, %v1870
        %v1872 = vrot.slane %v606, 2
        %v1873 = vsel %vm1859, %v1870, %v1872
        %v1874 = vrot.slane %v607, 2
        %v1875 = vsel %vm1859, %v1872, %v1874
        %v1876 = vrot.slane %v608, 2
        %v1877 = vsel %vm1859, %v1874, %v1876
        %v1878 = vrot.slane %v609, 2
        %v1879 = vrot.slane %v610, 2
        %v1880 = vsel %vm1859, %v1878, %v1879
        %v1881 = vrot.slane %v611, 2
        %v1882 = vsel %vm1859, %v1879, %v1881
        %v1883 = vrot.slane %v612, 2
        %v1884 = vsel %vm1859, %v1881, %v1883
        %v1885 = vrot.slane %v613, 2
        %v1886 = vsel %vm1859, %v1883, %v1885
        %v1887 = vrot.slane %v614, 2
        %v1888 = vrot.slane %v615, 2
        %v1889 = vsel %vm1859, %v1887, %v1888
        %v1890 = vrot.slane %v616, 2
        %v1891 = vsel %vm1859, %v1888, %v1890
        %v1892 = vrot.slane %v617, 2
        %v1893 = vsel %vm1859, %v1890, %v1892
        %v1894 = vrot.slane %v618, 2
        %v1895 = vsel %vm1859, %v1892, %v1894
        %v1896 = vrot.slane %v619, 2
        %v1897 = vrot.slane %v620, 2
        %v1898 = vsel %vm1859, %v1896, %v1897
        %v1899 = vrot.slane %v621, 2
        %v1900 = vsel %vm1859, %v1897, %v1899
        %v1901 = vrot.slane %v622, 2
        %v1902 = vsel %vm1859, %v1899, %v1901
        %v1903 = vrot.slane %v623, 2
        %v1904 = vsel %vm1859, %v1901, %v1903
        %v1905 = vrot.slane %v624, 2
        %v1906 = vrot.slane %v625, 2
        %v1907 = vsel %vm1859, %v1905, %v1906
        %v1908 = vrot.slane %v626, 2
        %v1909 = vsel %vm1859, %v1906, %v1908
        %v1910 = vrot.slane %v627, 2
        %v1911 = vsel %vm1859, %v1908, %v1910
        %v1912 = vrot.slane %v628, 2
        %v1913 = vsel %vm1859, %v1910, %v1912
        %v1914 = vrot.slane %v629, 2
        %v1915 = vrot.slane %v630, 2
        %v1916 = vsel %vm1859, %v1914, %v1915
        %v1917 = vrot.slane %v631, 2
        %v1918 = vsel %vm1859, %v1915, %v1917
        %v1919 = vrot.slane %v632, 2
        %v1920 = vsel %vm1859, %v1917, %v1919
        %v1921 = vrot.slane %v633, 2
        %v1922 = vsel %vm1859, %v1919, %v1921
        %v1923 = vrot.slane %v634, 2
        %v1924 = vrot.slane %v635, 2
        %v1925 = vsel %vm1859, %v1923, %v1924
        %v1926 = vrot.slane %v636, 2
        %v1927 = vsel %vm1859, %v1924, %v1926
        %v1928 = vrot.slane %v637, 2
        %v1929 = vsel %vm1859, %v1926, %v1928
        %v1930 = vrot.slane %v638, 2
        %v1931 = vsel %vm1859, %v1928, %v1930
        %v1932 = vrot.slane %v639, 2
        %v1933 = vrot.slane %v640, 2
        %v1934 = vsel %vm1859, %v1932, %v1933
        %v1935 = vrot.slane %v641, 2
        %v1936 = vsel %vm1859, %v1933, %v1935
        %v1937 = vrot.slane %v642, 2
        %v1938 = vsel %vm1859, %v1935, %v1937
        %v1939 = vrot.slane %v643, 2
        %v1940 = vsel %vm1859, %v1937, %v1939
        %v1941 = vrot.slane %v644, 2
        %v1942 = vrot.slane %v645, 2
        %v1943 = vsel %vm1859, %v1941, %v1942
        %v1944 = vrot.slane %v646, 2
        %v1945 = vsel %vm1859, %v1942, %v1944
        %v1946 = vrot.slane %v647, 2
        %v1947 = vsel %vm1859, %v1944, %v1946
        %v1948 = vrot.slane %v648, 2
        %v1949 = vsel %vm1859, %v1946, %v1948
        %v1950 = vrot.slane %v649, 2
        %v1951 = vrot.slane %v650, 2
        %v1952 = vsel %vm1859, %v1950, %v1951
        %v1953 = vrot.slane %v651, 2
        %v1954 = vsel %vm1859, %v1951, %v1953
        %v1955 = vrot.slane %v652, 2
        %v1956 = vsel %vm1859, %v1953, %v1955
        %v1957 = vrot.slane %v653, 2
        %v1958 = vsel %vm1859, %v1955, %v1957
        %v1959 = vrot.slane %v654, 2
        %v1960 = vrot.slane %v655, 2
        %v1961 = vsel %vm1859, %v1959, %v1960
        %v1962 = vrot.slane %v656, 2
        %v1963 = vsel %vm1859, %v1960, %v1962
        %v1964 = vrot.slane %v657, 2
        %v1965 = vsel %vm1859, %v1962, %v1964
        %v1966 = vrot.slane %v658, 2
        %v1967 = vsel %vm1859, %v1964, %v1966
        %v1968 = vrot.slane %v659, 2
        %v1969 = vrot.slane %v660, 2
        %v1970 = vsel %vm1859, %v1968, %v1969
        %v1971 = vrot.slane %v661, 2
        %v1972 = vsel %vm1859, %v1969, %v1971
        %v1973 = vrot.slane %v662, 2
        %v1974 = vsel %vm1859, %v1971, %v1973
        %v1975 = vrot.slane %v663, 2
        %v1976 = vsel %vm1859, %v1973, %v1975
        %v1977 = vrot.slane %v664, 2
        %v1978 = vrot.slane %v665, 2
        %v1979 = vsel %vm1859, %v1977, %v1978
        %v1980 = vrot.slane %v666, 2
        %v1981 = vsel %vm1859, %v1978, %v1980
        %v1982 = vrot.slane %v667, 2
        %v1983 = vsel %vm1859, %v1980, %v1982
        %v1984 = vrot.slane %v668, 2
        %v1985 = vsel %vm1859, %v1982, %v1984
        %v1986 = vrot.slane %v669, 2
        %v1987 = vrot.slane %v670, 2
        %v1988 = vsel %vm1859, %v1986, %v1987
        %v1989 = vrot.slane %v671, 2
        %v1990 = vsel %vm1859, %v1987, %v1989
        %v1991 = vrot.slane %v672, 2
        %v1992 = vsel %vm1859, %v1989, %v1991
        %v1993 = vrot.slane %v673, 2
        %v1994 = vsel %vm1859, %v1991, %v1993
        %v1995 = vrot.slane %v674, 2
        %v1996 = vrot.slane %v675, 2
        %v1997 = vsel %vm1859, %v1995, %v1996
        %v1998 = vrot.slane %v676, 2
        %v1999 = vsel %vm1859, %v1996, %v1998
        %v2000 = vrot.slane %v677, 2
        %v2001 = vsel %vm1859, %v1998, %v2000
        %v2002 = vrot.slane %v678, 2
        %v2003 = vsel %vm1859, %v2000, %v2002
        %v2004 = vrot.slane %v679, 2
        %v2005 = vrot.slane %v680, 2
        %v2006 = vsel %vm1859, %v2004, %v2005
        %v2007 = vrot.slane %v681, 2
        %v2008 = vsel %vm1859, %v2005, %v2007
        %v2009 = vrot.slane %v682, 2
        %v2010 = vsel %vm1859, %v2007, %v2009
        %v2011 = vrot.slane %v683, 2
        %v2012 = vsel %vm1859, %v2009, %v2011
        %v2013 = vrot.slane %v684, 2
        %v2014 = vrot.slane %v685, 2
        %v2015 = vsel %vm1859, %v2013, %v2014
        %v2016 = vrot.slane %v686, 2
        %v2017 = vsel %vm1859, %v2014, %v2016
        %v2018 = vrot.slane %v687, 2
        %v2019 = vsel %vm1859, %v2016, %v2018
        %v2020 = vrot.slane %v688, 2
        %v2021 = vsel %vm1859, %v2018, %v2020
        %v2022 = vrot.slane %v689, 2
        %v2023 = vrot.slane %v690, 2
        %v2024 = vsel %vm1859, %v2022, %v2023
        %v2025 = vrot.slane %v691, 2
        %v2026 = vsel %vm1859, %v2023, %v2025
        %v2027 = vrot.slane %v692, 2
        %v2028 = vsel %vm1859, %v2025, %v2027
        %v2029 = vrot.slane %v693, 2
        %v2030 = vsel %vm1859, %v2027, %v2029
        %v2031 = vrot.slane %v694, 2
        %v2032 = vrot.slane %v695, 2
        %v2033 = vsel %vm1859, %v2031, %v2032
        %v2034 = vrot.slane %v696, 2
        %v2035 = vsel %vm1859, %v2032, %v2034
        %v2036 = vrot.slane %v697, 2
        %v2037 = vsel %vm1859, %v2034, %v2036
        %v2038 = vrot.slane %v698, 2
        %v2039 = vsel %vm1859, %v2036, %v2038
        %v2040 = vrot.slane %v699, 2
        %v2041 = vrot.slane %v700, 2
        %v2042 = vsel %vm1859, %v2040, %v2041
        %v2043 = vrot.slane %v701, 2
        %v2044 = vsel %vm1859, %v2041, %v2043
        %v2045 = vrot.slane %v702, 2
        %v2046 = vsel %vm1859, %v2043, %v2045
        %v2047 = vrot.slane %v703, 2
        %v2048 = vsel %vm1859, %v2045, %v2047
        %v2049 = vrot.slane %v704, 2
        %v2050 = vrot.slane %v705, 2
        %v2051 = vsel %vm1859, %v2049, %v2050
        %v2052 = vrot.slane %v706, 2
        %v2053 = vsel %vm1859, %v2050, %v2052
        %v2054 = vrot.slane %v707, 2
        %v2055 = vsel %vm1859, %v2052, %v2054
        %v2056 = vrot.slane %v708, 2
        %v2057 = vsel %vm1859, %v2054, %v2056
        %v2058 = vrot.slane %v709, 2
        %v2059 = vrot.slane %v710, 2
        %v2060 = vsel %vm1859, %v2058, %v2059
        %v2061 = vrot.slane %v711, 2
        %v2062 = vsel %vm1859, %v2059, %v2061
        %v2063 = vrot.slane %v712, 2
        %v2064 = vsel %vm1859, %v2061, %v2063
        %v2065 = vrot.slane %v713, 2
        %v2066 = vsel %vm1859, %v2063, %v2065
        %v2067 = vrot.slane %v714, 2
        %v2068 = vrot.slane %v715, 2
        %v2069 = vsel %vm1859, %v2067, %v2068
        %v2070 = vrot.slane %v716, 2
        %v2071 = vsel %vm1859, %v2068, %v2070
        %v2072 = vrot.slane %v717, 2
        %v2073 = vsel %vm1859, %v2070, %v2072
        %v2074 = vrot.slane %v718, 2
        %v2075 = vsel %vm1859, %v2072, %v2074
        %v2076 = vrot.slane %v719, 2
        %v2077 = vrot.slane %v720, 2
        %v2078 = vsel %vm1859, %v2076, %v2077
        %v2079 = vrot.slane %v721, 2
        %v2080 = vsel %vm1859, %v2077, %v2079
        %v2081 = vrot.slane %v722, 2
        %v2082 = vsel %vm1859, %v2079, %v2081
        %v2083 = vrot.slane %v723, 2
        %v2084 = vsel %vm1859, %v2081, %v2083
        %v2085 = vrot.slane %v724, 2
        %v2086 = vrot.slane %v725, 2
        %v2087 = vsel %vm1859, %v2085, %v2086
        %v2088 = vrot.slane %v726, 2
        %v2089 = vsel %vm1859, %v2086, %v2088
        %v2090 = vrot.slane %v727, 2
        %v2091 = vsel %vm1859, %v2088, %v2090
        %v2092 = vrot.slane %v728, 2
        %v2093 = vsel %vm1859, %v2090, %v2092
        %v2094 = vrot.slane %v729, 2
        %v2095 = vrot.slane %v730, 2
        %v2096 = vsel %vm1859, %v2094, %v2095
        %v2097 = vrot.slane %v731, 2
        %v2098 = vsel %vm1859, %v2095, %v2097
        %v2099 = vrot.slane %v732, 2
        %v2100 = vsel %vm1859, %v2097, %v2099
        %v2101 = vrot.slane %v733, 2
        %v2102 = vsel %vm1859, %v2099, %v2101
        %v2103 = vrot.slane %v734, 2
        %v2104 = vrot.slane %v735, 2
        %v2105 = vsel %vm1859, %v2103, %v2104
        %v2106 = vrot.slane %v736, 2
        %v2107 = vsel %vm1859, %v2104, %v2106
        %v2108 = vrot.slane %v737, 2
        %v2109 = vsel %vm1859, %v2106, %v2108
        %v2110 = vrot.slane %v738, 2
        %v2111 = vsel %vm1859, %v2108, %v2110
        %v2112 = vrot.slane %v739, 2
        %v2113 = vrot.slane %v740, 2
        %v2114 = vsel %vm1859, %v2112, %v2113
        %v2115 = vrot.slane %v741, 2
        %v2116 = vsel %vm1859, %v2113, %v2115
        %v2117 = vrot.slane %v742, 2
        %v2118 = vsel %vm1859, %v2115, %v2117
        %v2119 = vrot.slane %v743, 2
        %v2120 = vsel %vm1859, %v2117, %v2119
        %v2121 = vrot.slane %v744, 2
        %v2122 = vrot.slane %v745, 2
        %v2123 = vsel %vm1859, %v2121, %v2122
        %v2124 = vrot.slane %v746, 2
        %v2125 = vsel %vm1859, %v2122, %v2124
        %v2126 = vrot.slane %v747, 2
        %v2127 = vsel %vm1859, %v2124, %v2126
        %v2128 = vrot.slane %v748, 2
        %v2129 = vsel %vm1859, %v2126, %v2128
        %v2130 = vrot.slane %v749, 2
        %v2131 = vrot.slane %v750, 2
        %v2132 = vsel %vm1859, %v2130, %v2131
        %v2133 = vrot.slane %v751, 2
        %v2134 = vsel %vm1859, %v2131, %v2133
        %v2135 = vrot.slane %v752, 2
        %v2136 = vsel %vm1859, %v2133, %v2135
        %v2137 = vrot.slane %v753, 2
        %v2138 = vsel %vm1859, %v2135, %v2137
        %v2139 = vrot.slane %v754, 2
        %v2140 = vrot.slane %v755, 2
        %v2141 = vsel %vm1859, %v2139, %v2140
        %v2142 = vrot.slane %v756, 2
        %v2143 = vsel %vm1859, %v2140, %v2142
        %v2144 = vrot.slane %v757, 2
        %v2145 = vsel %vm1859, %v2142, %v2144
        %v2146 = vrot.slane %v758, 2
        %v2147 = vsel %vm1859, %v2144, %v2146
        %v2276 = vpack.c.bf16 %v1864, %v1862
        %v2277 = vpack.c.bf16 %v1868, %v1866
        %v2278 = vpack.c.bf16 %v1873, %v1871
        %v2279 = vpack.c.bf16 %v1877, %v1875
        %v2280 = vpack.c.bf16 %v1882, %v1880
        %v2281 = vpack.c.bf16 %v1886, %v1884
        %v2282 = vpack.c.bf16 %v1891, %v1889
        %v2283 = vpack.c.bf16 %v1895, %v1893
        %v2284 = vpack.c.bf16 %v1900, %v1898
        %v2285 = vpack.c.bf16 %v1904, %v1902
        %v2286 = vpack.c.bf16 %v1909, %v1907
        %v2287 = vpack.c.bf16 %v1913, %v1911
        %v2288 = vpack.c.bf16 %v1918, %v1916
        %v2289 = vpack.c.bf16 %v1922, %v1920
        %v2290 = vpack.c.bf16 %v1927, %v1925
        %v2291 = vpack.c.bf16 %v1931, %v1929
        %v2292 = vpack.c.bf16 %v1936, %v1934
        %v2293 = vpack.c.bf16 %v1940, %v1938
        %v2294 = vpack.c.bf16 %v1945, %v1943
        %v2295 = vpack.c.bf16 %v1949, %v1947
        %v2296 = vpack.c.bf16 %v1954, %v1952
        %v2297 = vpack.c.bf16 %v1958, %v1956
        %v2298 = vpack.c.bf16 %v1963, %v1961
        %v2299 = vpack.c.bf16 %v1967, %v1965
        %v2300 = vpack.c.bf16 %v1972, %v1970
        %v2301 = vpack.c.bf16 %v1976, %v1974
        %v2302 = vpack.c.bf16 %v1981, %v1979
        %v2303 = vpack.c.bf16 %v1985, %v1983
        %v2304 = vpack.c.bf16 %v1990, %v1988
        %v2305 = vpack.c.bf16 %v1994, %v1992
        %v2306 = vpack.c.bf16 %v1999, %v1997
        %v2307 = vpack.c.bf16 %v2003, %v2001
        %v2308 = vpack.c.bf16 %v2008, %v2006
        %v2309 = vpack.c.bf16 %v2012, %v2010
        %v2310 = vpack.c.bf16 %v2017, %v2015
        %v2311 = vpack.c.bf16 %v2021, %v2019
        %v2312 = vpack.c.bf16 %v2026, %v2024
        %v2313 = vpack.c.bf16 %v2030, %v2028
        %v2314 = vpack.c.bf16 %v2035, %v2033
        %v2315 = vpack.c.bf16 %v2039, %v2037
        %v2316 = vpack.c.bf16 %v2044, %v2042
        %v2317 = vpack.c.bf16 %v2048, %v2046
        %v2318 = vpack.c.bf16 %v2053, %v2051
        %v2319 = vpack.c.bf16 %v2057, %v2055
        %v2320 = vpack.c.bf16 %v2062, %v2060
        %v2321 = vpack.c.bf16 %v2066, %v2064
        %v2322 = vpack.c.bf16 %v2071, %v2069
        %v2323 = vpack.c.bf16 %v2075, %v2073
        %v2324 = vpack.c.bf16 %v2080, %v2078
        %v2325 = vpack.c.bf16 %v2084, %v2082
        %v2326 = vpack.c.bf16 %v2089, %v2087
        %v2327 = vpack.c.bf16 %v2093, %v2091
        %v2328 = vpack.c.bf16 %v2098, %v2096
        %v2329 = vpack.c.bf16 %v2102, %v2100
        %v2330 = vpack.c.bf16 %v2107, %v2105
        %v2331 = vpack.c.bf16 %v2111, %v2109
        %v2332 = vpack.c.bf16 %v2116, %v2114
        %v2333 = vpack.c.bf16 %v2120, %v2118
        %v2334 = vpack.c.bf16 %v2125, %v2123
        %v2335 = vpack.c.bf16 %v2129, %v2127
        %v2336 = vpack.c.bf16 %v2134, %v2132
        %v2337 = vpack.c.bf16 %v2138, %v2136
        %v2338 = vpack.c.bf16 %v2143, %v2141
        %v2339 = vpack.c.bf16 %v2147, %v2145
        %2404 = vrot.lane.b32.xlu0 %v2276, 6
        %v2405 = vpop.permute.xlu0 %2404
        %2406 = vrot.lane.b32.xlu0 %v2277, 6
        %v2407 = vpop.permute.xlu0 %2406
        %2408 = vrot.lane.b32.xlu0 %v2278, 6
        %v2409 = vpop.permute.xlu0 %2408
        %2410 = vrot.lane.b32.xlu0 %v2279, 6
        %v2411 = vpop.permute.xlu0 %2410
        %2412 = vrot.lane.b32.xlu0 %v2280, 6
        %v2413 = vpop.permute.xlu0 %2412
        %2414 = vrot.lane.b32.xlu0 %v2281, 6
        %v2415 = vpop.permute.xlu0 %2414
        %2416 = vrot.lane.b32.xlu0 %v2282, 6
        %v2417 = vpop.permute.xlu0 %2416
        %2418 = vrot.lane.b32.xlu0 %v2283, 6
        %v2419 = vpop.permute.xlu0 %2418
        %2420 = vrot.lane.b32.xlu0 %v2284, 6
        %v2421 = vpop.permute.xlu0 %2420
        %2422 = vrot.lane.b32.xlu0 %v2285, 6
        %v2423 = vpop.permute.xlu0 %2422
        %2424 = vrot.lane.b32.xlu0 %v2286, 6
        %v2425 = vpop.permute.xlu0 %2424
        %2426 = vrot.lane.b32.xlu0 %v2287, 6
        %v2427 = vpop.permute.xlu0 %2426
        %2428 = vrot.lane.b32.xlu0 %v2288, 6
        %v2429 = vpop.permute.xlu0 %2428
        %2430 = vrot.lane.b32.xlu0 %v2289, 6
        %v2431 = vpop.permute.xlu0 %2430
        %2432 = vrot.lane.b32.xlu0 %v2290, 6
        %v2433 = vpop.permute.xlu0 %2432
        %2434 = vrot.lane.b32.xlu0 %v2291, 6
        %v2435 = vpop.permute.xlu0 %2434
        %2436 = vrot.lane.b32.xlu0 %v2292, 6
        %v2437 = vpop.permute.xlu0 %2436
        %2438 = vrot.lane.b32.xlu0 %v2293, 6
        %v2439 = vpop.permute.xlu0 %2438
        %2440 = vrot.lane.b32.xlu0 %v2294, 6
        %v2441 = vpop.permute.xlu0 %2440
        %2442 = vrot.lane.b32.xlu0 %v2295, 6
        %v2443 = vpop.permute.xlu0 %2442
        %2444 = vrot.lane.b32.xlu0 %v2296, 6
        %v2445 = vpop.permute.xlu0 %2444
        %2446 = vrot.lane.b32.xlu0 %v2297, 6
        %v2447 = vpop.permute.xlu0 %2446
        %2448 = vrot.lane.b32.xlu0 %v2298, 6
        %v2449 = vpop.permute.xlu0 %2448
        %2450 = vrot.lane.b32.xlu0 %v2299, 6
        %v2451 = vpop.permute.xlu0 %2450
        %2452 = vrot.lane.b32.xlu0 %v2300, 6
        %v2453 = vpop.permute.xlu0 %2452
        %2454 = vrot.lane.b32.xlu0 %v2301, 6
        %v2455 = vpop.permute.xlu0 %2454
        %2456 = vrot.lane.b32.xlu0 %v2302, 6
        %v2457 = vpop.permute.xlu0 %2456
        %2458 = vrot.lane.b32.xlu0 %v2303, 6
        %v2459 = vpop.permute.xlu0 %2458
        %2460 = vrot.lane.b32.xlu0 %v2304, 6
        %v2461 = vpop.permute.xlu0 %2460
        %2462 = vrot.lane.b32.xlu0 %v2305, 6
        %v2463 = vpop.permute.xlu0 %2462
        %2464 = vrot.lane.b32.xlu0 %v2306, 6
        %v2465 = vpop.permute.xlu0 %2464
        %2466 = vrot.lane.b32.xlu0 %v2307, 6
        %v2467 = vpop.permute.xlu0 %2466
        %2468 = vrot.lane.b32.xlu0 %v2308, 6
        %v2469 = vpop.permute.xlu0 %2468
        %2470 = vrot.lane.b32.xlu0 %v2309, 6
        %v2471 = vpop.permute.xlu0 %2470
        %2472 = vrot.lane.b32.xlu0 %v2310, 6
        %v2473 = vpop.permute.xlu0 %2472
        %2474 = vrot.lane.b32.xlu0 %v2311, 6
        %v2475 = vpop.permute.xlu0 %2474
        %2476 = vrot.lane.b32.xlu0 %v2312, 6
        %v2477 = vpop.permute.xlu0 %2476
        %2478 = vrot.lane.b32.xlu0 %v2313, 6
        %v2479 = vpop.permute.xlu0 %2478
        %2480 = vrot.lane.b32.xlu0 %v2314, 6
        %v2481 = vpop.permute.xlu0 %2480
        %2482 = vrot.lane.b32.xlu0 %v2315, 6
        %v2483 = vpop.permute.xlu0 %2482
        %2484 = vrot.lane.b32.xlu0 %v2316, 6
        %v2485 = vpop.permute.xlu0 %2484
        %2486 = vrot.lane.b32.xlu0 %v2317, 6
        %v2487 = vpop.permute.xlu0 %2486
        %2488 = vrot.lane.b32.xlu0 %v2318, 6
        %v2489 = vpop.permute.xlu0 %2488
        %2490 = vrot.lane.b32.xlu0 %v2319, 6
        %v2491 = vpop.permute.xlu0 %2490
        %2492 = vrot.lane.b32.xlu0 %v2320, 6
        %v2493 = vpop.permute.xlu0 %2492
        %2494 = vrot.lane.b32.xlu0 %v2321, 6
        %v2495 = vpop.permute.xlu0 %2494
        %2496 = vrot.lane.b32.xlu0 %v2322, 6
        %v2497 = vpop.permute.xlu0 %2496
        %2498 = vrot.lane.b32.xlu0 %v2323, 6
        %v2499 = vpop.permute.xlu0 %2498
        %2500 = vrot.lane.b32.xlu0 %v2324, 6
        %v2501 = vpop.permute.xlu0 %2500
        %2502 = vrot.lane.b32.xlu0 %v2325, 6
        %v2503 = vpop.permute.xlu0 %2502
        %2504 = vrot.lane.b32.xlu0 %v2326, 6
        %v2505 = vpop.permute.xlu0 %2504
        %2506 = vrot.lane.b32.xlu0 %v2327, 6
        %v2507 = vpop.permute.xlu0 %2506
        %2508 = vrot.lane.b32.xlu0 %v2328, 6
        %v2509 = vpop.permute.xlu0 %2508
        %2510 = vrot.lane.b32.xlu0 %v2329, 6
        %v2511 = vpop.permute.xlu0 %2510
        %2512 = vrot.lane.b32.xlu0 %v2330, 6
        %v2513 = vpop.permute.xlu0 %2512
        %2514 = vrot.lane.b32.xlu0 %v2331, 6
        %v2515 = vpop.permute.xlu0 %2514
        %2516 = vrot.lane.b32.xlu0 %v2332, 6
        %v2517 = vpop.permute.xlu0 %2516
        %2518 = vrot.lane.b32.xlu0 %v2333, 6
        %v2519 = vpop.permute.xlu0 %2518
        %2520 = vrot.lane.b32.xlu0 %v2334, 6
        %v2521 = vpop.permute.xlu0 %2520
        %2522 = vrot.lane.b32.xlu0 %v2335, 6
        %v2523 = vpop.permute.xlu0 %2522
        %2524 = vrot.lane.b32.xlu0 %v2336, 6
        %v2525 = vpop.permute.xlu0 %2524
        %2526 = vrot.lane.b32.xlu0 %v2337, 6
        %v2527 = vpop.permute.xlu0 %2526
        %2528 = vrot.lane.b32.xlu0 %v2338, 6
        %v2529 = vpop.permute.xlu0 %2528
        %2530 = vrot.lane.b32.xlu0 %v2339, 6
        %v2531 = vpop.permute.xlu0 %2530
        %vm2596 = vcmask 72752
        %2597 = vst.msk [vmem:[#allocation3] sm:$0xff] %vm2596, %v2405
        %2598 = vst.msk [vmem:[#allocation3 + $0x8] sm:$0xff] %vm2596, %v2407
        %2599 = vst.msk [vmem:[#allocation3 + $0x10] sm:$0xff] %vm2596, %v2409
        %2600 = vst.msk [vmem:[#allocation3 + $0x18] sm:$0xff] %vm2596, %v2411
        %2601 = vst.msk [vmem:[#allocation3 + $0x20] sm:$0xff] %vm2596, %v2413
        %2602 = vst.msk [vmem:[#allocation3 + $0x28] sm:$0xff] %vm2596, %v2415
        %2603 = vst.msk [vmem:[#allocation3 + $0x30] sm:$0xff] %vm2596, %v2417
        %2604 = vst.msk [vmem:[#allocation3 + $0x38] sm:$0xff] %vm2596, %v2419
        %2605 = vst.msk [vmem:[#allocation3 + $0x40] sm:$0xff] %vm2596, %v2421
        %2606 = vst.msk [vmem:[#allocation3 + $0x48] sm:$0xff] %vm2596, %v2423
        %2607 = vst.msk [vmem:[#allocation3 + $0x50] sm:$0xff] %vm2596, %v2425
        %2608 = vst.msk [vmem:[#allocation3 + $0x58] sm:$0xff] %vm2596, %v2427
        %2609 = vst.msk [vmem:[#allocation3 + $0x60] sm:$0xff] %vm2596, %v2429
        %2610 = vst.msk [vmem:[#allocation3 + $0x68] sm:$0xff] %vm2596, %v2431
        %2611 = vst.msk [vmem:[#allocation3 + $0x70] sm:$0xff] %vm2596, %v2433
        %2612 = vst.msk [vmem:[#allocation3 + $0x78] sm:$0xff] %vm2596, %v2435
        %2613 = vst.msk [vmem:[#allocation3 + $0x80] sm:$0xff] %vm2596, %v2437
        %2614 = vst.msk [vmem:[#allocation3 + $0x88] sm:$0xff] %vm2596, %v2439
        %2615 = vst.msk [vmem:[#allocation3 + $0x90] sm:$0xff] %vm2596, %v2441
        %2616 = vst.msk [vmem:[#allocation3 + $0x98] sm:$0xff] %vm2596, %v2443
        %2617 = vst.msk [vmem:[#allocation3 + $0xa0] sm:$0xff] %vm2596, %v2445
        %2618 = vst.msk [vmem:[#allocation3 + $0xa8] sm:$0xff] %vm2596, %v2447
        %2619 = vst.msk [vmem:[#allocation3 + $0xb0] sm:$0xff] %vm2596, %v2449
        %2620 = vst.msk [vmem:[#allocation3 + $0xb8] sm:$0xff] %vm2596, %v2451
        %2621 = vst.msk [vmem:[#allocation3 + $0xc0] sm:$0xff] %vm2596, %v2453
        %2622 = vst.msk [vmem:[#allocation3 + $0xc8] sm:$0xff] %vm2596, %v2455
        %2623 = vst.msk [vmem:[#allocation3 + $0xd0] sm:$0xff] %vm2596, %v2457
        %2624 = vst.msk [vmem:[#allocation3 + $0xd8] sm:$0xff] %vm2596, %v2459
        %2625 = vst.msk [vmem:[#allocation3 + $0xe0] sm:$0xff] %vm2596, %v2461
        %2626 = vst.msk [vmem:[#allocation3 + $0xe8] sm:$0xff] %vm2596, %v2463
        %2627 = vst.msk [vmem:[#allocation3 + $0xf0] sm:$0xff] %vm2596, %v2465
        %2628 = vst.msk [vmem:[#allocation3 + $0xf8] sm:$0xff] %vm2596, %v2467
        %2629 = vst.msk [vmem:[#allocation3 + $0x100] sm:$0xff] %vm2596, %v2469
        %2630 = vst.msk [vmem:[#allocation3 + $0x108] sm:$0xff] %vm2596, %v2471
        %2631 = vst.msk [vmem:[#allocation3 + $0x110] sm:$0xff] %vm2596, %v2473
        %2632 = vst.msk [vmem:[#allocation3 + $0x118] sm:$0xff] %vm2596, %v2475
        %2633 = vst.msk [vmem:[#allocation3 + $0x120] sm:$0xff] %vm2596, %v2477
        %2634 = vst.msk [vmem:[#allocation3 + $0x128] sm:$0xff] %vm2596, %v2479
        %2635 = vst.msk [vmem:[#allocation3 + $0x130] sm:$0xff] %vm2596, %v2481
        %2636 = vst.msk [vmem:[#allocation3 + $0x138] sm:$0xff] %vm2596, %v2483
        %2637 = vst.msk [vmem:[#allocation3 + $0x140] sm:$0xff] %vm2596, %v2485
        %2638 = vst.msk [vmem:[#allocation3 + $0x148] sm:$0xff] %vm2596, %v2487
        %2639 = vst.msk [vmem:[#allocation3 + $0x150] sm:$0xff] %vm2596, %v2489
        %2640 = vst.msk [vmem:[#allocation3 + $0x158] sm:$0xff] %vm2596, %v2491
        %2641 = vst.msk [vmem:[#allocation3 + $0x160] sm:$0xff] %vm2596, %v2493
        %2642 = vst.msk [vmem:[#allocation3 + $0x168] sm:$0xff] %vm2596, %v2495
        %2643 = vst.msk [vmem:[#allocation3 + $0x170] sm:$0xff] %vm2596, %v2497
        %2644 = vst.msk [vmem:[#allocation3 + $0x178] sm:$0xff] %vm2596, %v2499
        %2645 = vst.msk [vmem:[#allocation3 + $0x180] sm:$0xff] %vm2596, %v2501
        %2646 = vst.msk [vmem:[#allocation3 + $0x188] sm:$0xff] %vm2596, %v2503
        %2647 = vst.msk [vmem:[#allocation3 + $0x190] sm:$0xff] %vm2596, %v2505
        %2648 = vst.msk [vmem:[#allocation3 + $0x198] sm:$0xff] %vm2596, %v2507
        %2649 = vst.msk [vmem:[#allocation3 + $0x1a0] sm:$0xff] %vm2596, %v2509
        %2650 = vst.msk [vmem:[#allocation3 + $0x1a8] sm:$0xff] %vm2596, %v2511
        %2651 = vst.msk [vmem:[#allocation3 + $0x1b0] sm:$0xff] %vm2596, %v2513
        %2652 = vst.msk [vmem:[#allocation3 + $0x1b8] sm:$0xff] %vm2596, %v2515
        %2653 = vst.msk [vmem:[#allocation3 + $0x1c0] sm:$0xff] %vm2596, %v2517
        %2654 = vst.msk [vmem:[#allocation3 + $0x1c8] sm:$0xff] %vm2596, %v2519
        %2655 = vst.msk [vmem:[#allocation3 + $0x1d0] sm:$0xff] %vm2596, %v2521
        %2656 = vst.msk [vmem:[#allocation3 + $0x1d8] sm:$0xff] %vm2596, %v2523
        %2657 = vst.msk [vmem:[#allocation3 + $0x1e0] sm:$0xff] %vm2596, %v2525
        %2658 = vst.msk [vmem:[#allocation3 + $0x1e8] sm:$0xff] %vm2596, %v2527
        %2659 = vst.msk [vmem:[#allocation3 + $0x1f0] sm:$0xff] %vm2596, %v2529
        %2660 = vst.msk [vmem:[#allocation3 + $0x1f8] sm:$0xff] %vm2596, %v2531
        %v2661 = vpack.c.bf16 %v760, %v759
        %v2662 = vpack.c.bf16 %v762, %v761
        %2727 = vrot.lane.b32.xlu0 %v771, 9
        %v2728 = vpop.permute.xlu0 %2727
        %2729 = vrot.lane.b32.xlu0 %v772, 9
        %v2730 = vpop.permute.xlu0 %2729
        %2731 = vrot.lane.b32.xlu0 %v773, 9
        %v2732 = vpop.permute.xlu0 %2731
        %2733 = vrot.lane.b32.xlu0 %v774, 9
        %v2734 = vpop.permute.xlu0 %2733
        %2735 = vrot.lane.b32.xlu0 %v775, 9
        %v2736 = vpop.permute.xlu0 %2735
        %2737 = vrot.lane.b32.xlu0 %v776, 9
        %v2738 = vpop.permute.xlu0 %2737
        %2739 = vrot.lane.b32.xlu0 %v777, 9
        %v2740 = vpop.permute.xlu0 %2739
        %2741 = vrot.lane.b32.xlu0 %v778, 9
        %v2742 = vpop.permute.xlu0 %2741
        %2743 = vrot.lane.b32.xlu0 %v779, 9
        %v2744 = vpop.permute.xlu0 %2743
        %2745 = vrot.lane.b32.xlu0 %v780, 9
        %v2746 = vpop.permute.xlu0 %2745
        %2747 = vrot.lane.b32.xlu0 %v781, 9
        %v2748 = vpop.permute.xlu0 %2747
        %2749 = vrot.lane.b32.xlu0 %v782, 9
        %v2750 = vpop.permute.xlu0 %2749
        %2751 = vrot.lane.b32.xlu0 %v783, 9
        %v2752 = vpop.permute.xlu0 %2751
        %2753 = vrot.lane.b32.xlu0 %v784, 9
        %v2754 = vpop.permute.xlu0 %2753
        %2755 = vrot.lane.b32.xlu0 %v785, 9
        %v2756 = vpop.permute.xlu0 %2755
        %2757 = vrot.lane.b32.xlu0 %v786, 9
        %v2758 = vpop.permute.xlu0 %2757
        %2759 = vrot.lane.b32.xlu0 %v787, 9
        %v2760 = vpop.permute.xlu0 %2759
        %2761 = vrot.lane.b32.xlu0 %v788, 9
        %v2762 = vpop.permute.xlu0 %2761
        %2763 = vrot.lane.b32.xlu0 %v789, 9
        %v2764 = vpop.permute.xlu0 %2763
        %2765 = vrot.lane.b32.xlu0 %v790, 9
        %v2766 = vpop.permute.xlu0 %2765
        %2767 = vrot.lane.b32.xlu0 %v791, 9
        %v2768 = vpop.permute.xlu0 %2767
        %2769 = vrot.lane.b32.xlu0 %v792, 9
        %v2770 = vpop.permute.xlu0 %2769
        %2771 = vrot.lane.b32.xlu0 %v793, 9
        %v2772 = vpop.permute.xlu0 %2771
        %2773 = vrot.lane.b32.xlu0 %v794, 9
        %v2774 = vpop.permute.xlu0 %2773
        %2775 = vrot.lane.b32.xlu0 %v795, 9
        %v2776 = vpop.permute.xlu0 %2775
        %2777 = vrot.lane.b32.xlu0 %v796, 9
        %v2778 = vpop.permute.xlu0 %2777
        %2779 = vrot.lane.b32.xlu0 %v797, 9
        %v2780 = vpop.permute.xlu0 %2779
        %2781 = vrot.lane.b32.xlu0 %v798, 9
        %v2782 = vpop.permute.xlu0 %2781
        %2783 = vrot.lane.b32.xlu0 %v799, 9
        %v2784 = vpop.permute.xlu0 %2783
        %2785 = vrot.lane.b32.xlu0 %v800, 9
        %v2786 = vpop.permute.xlu0 %2785
        %2787 = vrot.lane.b32.xlu0 %v801, 9
        %v2788 = vpop.permute.xlu0 %2787
        %2789 = vrot.lane.b32.xlu0 %v802, 9
        %v2790 = vpop.permute.xlu0 %2789
        %2791 = vrot.lane.b32.xlu0 %v803, 9
        %v2792 = vpop.permute.xlu0 %2791
        %2793 = vrot.lane.b32.xlu0 %v804, 9
        %v2794 = vpop.permute.xlu0 %2793
        %2795 = vrot.lane.b32.xlu0 %v805, 9
        %v2796 = vpop.permute.xlu0 %2795
        %2797 = vrot.lane.b32.xlu0 %v806, 9
        %v2798 = vpop.permute.xlu0 %2797
        %2799 = vrot.lane.b32.xlu0 %v807, 9
        %v2800 = vpop.permute.xlu0 %2799
        %2801 = vrot.lane.b32.xlu0 %v808, 9
        %v2802 = vpop.permute.xlu0 %2801
        %2803 = vrot.lane.b32.xlu0 %v809, 9
        %v2804 = vpop.permute.xlu0 %2803
        %2805 = vrot.lane.b32.xlu0 %v810, 9
        %v2806 = vpop.permute.xlu0 %2805
        %2807 = vrot.lane.b32.xlu0 %v811, 9
        %v2808 = vpop.permute.xlu0 %2807
        %2809 = vrot.lane.b32.xlu0 %v812, 9
        %v2810 = vpop.permute.xlu0 %2809
        %2811 = vrot.lane.b32.xlu0 %v813, 9
        %v2812 = vpop.permute.xlu0 %2811
        %2813 = vrot.lane.b32.xlu0 %v814, 9
        %v2814 = vpop.permute.xlu0 %2813
        %2815 = vrot.lane.b32.xlu0 %v815, 9
        %v2816 = vpop.permute.xlu0 %2815
        %2817 = vrot.lane.b32.xlu0 %v816, 9
        %v2818 = vpop.permute.xlu0 %2817
        %2819 = vrot.lane.b32.xlu0 %v817, 9
        %v2820 = vpop.permute.xlu0 %2819
        %2821 = vrot.lane.b32.xlu0 %v818, 9
        %v2822 = vpop.permute.xlu0 %2821
        %2823 = vrot.lane.b32.xlu0 %v819, 9
        %v2824 = vpop.permute.xlu0 %2823
        %2825 = vrot.lane.b32.xlu0 %v820, 9
        %v2826 = vpop.permute.xlu0 %2825
        %2827 = vrot.lane.b32.xlu0 %v821, 9
        %v2828 = vpop.permute.xlu0 %2827
        %2829 = vrot.lane.b32.xlu0 %v822, 9
        %v2830 = vpop.permute.xlu0 %2829
        %2831 = vrot.lane.b32.xlu0 %v823, 9
        %v2832 = vpop.permute.xlu0 %2831
        %2833 = vrot.lane.b32.xlu0 %v824, 9
        %v2834 = vpop.permute.xlu0 %2833
        %2835 = vrot.lane.b32.xlu0 %v825, 9
        %v2836 = vpop.permute.xlu0 %2835
        %2837 = vrot.lane.b32.xlu0 %v826, 9
        %v2838 = vpop.permute.xlu0 %2837
        %2839 = vrot.lane.b32.xlu0 %v827, 9
        %v2840 = vpop.permute.xlu0 %2839
        %2841 = vrot.lane.b32.xlu0 %v828, 9
        %v2842 = vpop.permute.xlu0 %2841
        %2843 = vrot.lane.b32.xlu0 %v829, 9
        %v2844 = vpop.permute.xlu0 %2843
        %2845 = vrot.lane.b32.xlu0 %v830, 9
        %v2846 = vpop.permute.xlu0 %2845
        %2847 = vrot.lane.b32.xlu0 %v831, 9
        %v2848 = vpop.permute.xlu0 %2847
        %2849 = vrot.lane.b32.xlu0 %v832, 9
        %v2850 = vpop.permute.xlu0 %2849
        %2851 = vrot.lane.b32.xlu0 %v2661, 9
        %v2852 = vpop.permute.xlu0 %2851
        %2853 = vrot.lane.b32.xlu0 %v2662, 9
        %v2854 = vpop.permute.xlu0 %2853
        %vm2919 = vcmask 97352
        %2920 = vst.msk [vmem:[#allocation3] sm:$0xff] %vm2919, %v2728
        %2921 = vst.msk [vmem:[#allocation3 + $0x8] sm:$0xff] %vm2919, %v2730
        %2922 = vst.msk [vmem:[#allocation3 + $0x10] sm:$0xff] %vm2919, %v2732
        %2923 = vst.msk [vmem:[#allocation3 + $0x18] sm:$0xff] %vm2919, %v2734
        %2924 = vst.msk [vmem:[#allocation3 + $0x20] sm:$0xff] %vm2919, %v2736
        %2925 = vst.msk [vmem:[#allocation3 + $0x28] sm:$0xff] %vm2919, %v2738
        %2926 = vst.msk [vmem:[#allocation3 + $0x30] sm:$0xff] %vm2919, %v2740
        %2927 = vst.msk [vmem:[#allocation3 + $0x38] sm:$0xff] %vm2919, %v2742
        %2928 = vst.msk [vmem:[#allocation3 + $0x40] sm:$0xff] %vm2919, %v2744
        %2929 = vst.msk [vmem:[#allocation3 + $0x48] sm:$0xff] %vm2919, %v2746
        %2930 = vst.msk [vmem:[#allocation3 + $0x50] sm:$0xff] %vm2919, %v2748
        %2931 = vst.msk [vmem:[#allocation3 + $0x58] sm:$0xff] %vm2919, %v2750
        %2932 = vst.msk [vmem:[#allocation3 + $0x60] sm:$0xff] %vm2919, %v2752
        %2933 = vst.msk [vmem:[#allocation3 + $0x68] sm:$0xff] %vm2919, %v2754
        %2934 = vst.msk [vmem:[#allocation3 + $0x70] sm:$0xff] %vm2919, %v2756
        %2935 = vst.msk [vmem:[#allocation3 + $0x78] sm:$0xff] %vm2919, %v2758
        %2936 = vst.msk [vmem:[#allocation3 + $0x80] sm:$0xff] %vm2919, %v2760
        %2937 = vst.msk [vmem:[#allocation3 + $0x88] sm:$0xff] %vm2919, %v2762
        %2938 = vst.msk [vmem:[#allocation3 + $0x90] sm:$0xff] %vm2919, %v2764
        %2939 = vst.msk [vmem:[#allocation3 + $0x98] sm:$0xff] %vm2919, %v2766
        %2940 = vst.msk [vmem:[#allocation3 + $0xa0] sm:$0xff] %vm2919, %v2768
        %2941 = vst.msk [vmem:[#allocation3 + $0xa8] sm:$0xff] %vm2919, %v2770
        %2942 = vst.msk [vmem:[#allocation3 + $0xb0] sm:$0xff] %vm2919, %v2772
        %2943 = vst.msk [vmem:[#allocation3 + $0xb8] sm:$0xff] %vm2919, %v2774
        %2944 = vst.msk [vmem:[#allocation3 + $0xc0] sm:$0xff] %vm2919, %v2776
        %2945 = vst.msk [vmem:[#allocation3 + $0xc8] sm:$0xff] %vm2919, %v2778
        %2946 = vst.msk [vmem:[#allocation3 + $0xd0] sm:$0xff] %vm2919, %v2780
        %2947 = vst.msk [vmem:[#allocation3 + $0xd8] sm:$0xff] %vm2919, %v2782
        %2948 = vst.msk [vmem:[#allocation3 + $0xe0] sm:$0xff] %vm2919, %v2784
        %2949 = vst.msk [vmem:[#allocation3 + $0xe8] sm:$0xff] %vm2919, %v2786
        %2950 = vst.msk [vmem:[#allocation3 + $0xf0] sm:$0xff] %vm2919, %v2788
        %2951 = vst.msk [vmem:[#allocation3 + $0xf8] sm:$0xff] %vm2919, %v2790
        %2952 = vst.msk [vmem:[#allocation3 + $0x100] sm:$0xff] %vm2919, %v2792
        %2953 = vst.msk [vmem:[#allocation3 + $0x108] sm:$0xff] %vm2919, %v2794
        %2954 = vst.msk [vmem:[#allocation3 + $0x110] sm:$0xff] %vm2919, %v2796
        %2955 = vst.msk [vmem:[#allocation3 + $0x118] sm:$0xff] %vm2919, %v2798
        %2956 = vst.msk [vmem:[#allocation3 + $0x120] sm:$0xff] %vm2919, %v2800
        %2957 = vst.msk [vmem:[#allocation3 + $0x128] sm:$0xff] %vm2919, %v2802
        %2958 = vst.msk [vmem:[#allocation3 + $0x130] sm:$0xff] %vm2919, %v2804
        %2959 = vst.msk [vmem:[#allocation3 + $0x138] sm:$0xff] %vm2919, %v2806
        %2960 = vst.msk [vmem:[#allocation3 + $0x140] sm:$0xff] %vm2919, %v2808
        %2961 = vst.msk [vmem:[#allocation3 + $0x148] sm:$0xff] %vm2919, %v2810
        %2962 = vst.msk [vmem:[#allocation3 + $0x150] sm:$0xff] %vm2919, %v2812
        %2963 = vst.msk [vmem:[#allocation3 + $0x158] sm:$0xff] %vm2919, %v2814
        %2964 = vst.msk [vmem:[#allocation3 + $0x160] sm:$0xff] %vm2919, %v2816
        %2965 = vst.msk [vmem:[#allocation3 + $0x168] sm:$0xff] %vm2919, %v2818
        %2966 = vst.msk [vmem:[#allocation3 + $0x170] sm:$0xff] %vm2919, %v2820
        %2967 = vst.msk [vmem:[#allocation3 + $0x178] sm:$0xff] %vm2919, %v2822
        %2968 = vst.msk [vmem:[#allocation3 + $0x180] sm:$0xff] %vm2919, %v2824
        %2969 = vst.msk [vmem:[#allocation3 + $0x188] sm:$0xff] %vm2919, %v2826
        %2970 = vst.msk [vmem:[#allocation3 + $0x190] sm:$0xff] %vm2919, %v2828
        %2971 = vst.msk [vmem:[#allocation3 + $0x198] sm:$0xff] %vm2919, %v2830
        %2972 = vst.msk [vmem:[#allocation3 + $0x1a0] sm:$0xff] %vm2919, %v2832
        %2973 = vst.msk [vmem:[#allocation3 + $0x1a8] sm:$0xff] %vm2919, %v2834
        %2974 = vst.msk [vmem:[#allocation3 + $0x1b0] sm:$0xff] %vm2919, %v2836
        %2975 = vst.msk [vmem:[#allocation3 + $0x1b8] sm:$0xff] %vm2919, %v2838
        %2976 = vst.msk [vmem:[#allocation3 + $0x1c0] sm:$0xff] %vm2919, %v2840
        %2977 = vst.msk [vmem:[#allocation3 + $0x1c8] sm:$0xff] %vm2919, %v2842
        %2978 = vst.msk [vmem:[#allocation3 + $0x1d0] sm:$0xff] %vm2919, %v2844
        %2979 = vst.msk [vmem:[#allocation3 + $0x1d8] sm:$0xff] %vm2919, %v2846
        %2980 = vst.msk [vmem:[#allocation3 + $0x1e0] sm:$0xff] %vm2919, %v2848
        %2981 = vst.msk [vmem:[#allocation3 + $0x1e8] sm:$0xff] %vm2919, %v2850
        %2982 = vst.msk [vmem:[#allocation3 + $0x1f0] sm:$0xff] %vm2919, %v2852
        %2983 = vst.msk [vmem:[#allocation3 + $0x1f8] sm:$0xff] %vm2919, %v2854
        %v2989 = vrot.slane %v759, 1
        %v2990 = vrot.slane %v760, 1
        %v2991 = vsel %vm1057, %v2989, %v2990
        %v2992 = vrot.slane %v761, 1
        %v2993 = vsel %vm1057, %v2990, %v2992
        %v2994 = vrot.slane %v762, 1
        %v2995 = vsel %vm1057, %v2992, %v2994
        %v2996 = vrot.slane %v763, 1
        %v2997 = vsel %vm1057, %v2994, %v2996
        %v3002 = vpack.c.bf16 %v2993, %v2991
        %v3003 = vpack.c.bf16 %v2997, %v2995
        %3006 = vrot.lane.b32.xlu0 %v1476, 12
        %v3007 = vpop.permute.xlu0 %3006
        %3008 = vrot.lane.b32.xlu0 %v1477, 12
        %v3009 = vpop.permute.xlu0 %3008
        %3010 = vrot.lane.b32.xlu0 %v1478, 12
        %v3011 = vpop.permute.xlu0 %3010
        %3012 = vrot.lane.b32.xlu0 %v1479, 12
        %v3013 = vpop.permute.xlu0 %3012
        %3014 = vrot.lane.b32.xlu0 %v1480, 12
        %v3015 = vpop.permute.xlu0 %3014
        %3016 = vrot.lane.b32.xlu0 %v1481, 12
        %v3017 = vpop.permute.xlu0 %3016
        %3018 = vrot.lane.b32.xlu0 %v1482, 12
        %v3019 = vpop.permute.xlu0 %3018
        %3020 = vrot.lane.b32.xlu0 %v1483, 12
        %v3021 = vpop.permute.xlu0 %3020
        %3022 = vrot.lane.b32.xlu0 %v1484, 12
        %v3023 = vpop.permute.xlu0 %3022
        %3024 = vrot.lane.b32.xlu0 %v1485, 12
        %v3025 = vpop.permute.xlu0 %3024
        %3026 = vrot.lane.b32.xlu0 %v1486, 12
        %v3027 = vpop.permute.xlu0 %3026
        %3028 = vrot.lane.b32.xlu0 %v1487, 12
        %v3029 = vpop.permute.xlu0 %3028
        %3030 = vrot.lane.b32.xlu0 %v1488, 12
        %v3031 = vpop.permute.xlu0 %3030
        %3032 = vrot.lane.b32.xlu0 %v1489, 12
        %v3033 = vpop.permute.xlu0 %3032
        %3034 = vrot.lane.b32.xlu0 %v1490, 12
        %v3035 = vpop.permute.xlu0 %3034
        %3036 = vrot.lane.b32.xlu0 %v1491, 12
        %v3037 = vpop.permute.xlu0 %3036
        %3038 = vrot.lane.b32.xlu0 %v1492, 12
        %v3039 = vpop.permute.xlu0 %3038
        %3040 = vrot.lane.b32.xlu0 %v1493, 12
        %v3041 = vpop.permute.xlu0 %3040
        %3042 = vrot.lane.b32.xlu0 %v1494, 12
        %v3043 = vpop.permute.xlu0 %3042
        %3044 = vrot.lane.b32.xlu0 %v1495, 12
        %v3045 = vpop.permute.xlu0 %3044
        %3046 = vrot.lane.b32.xlu0 %v1496, 12
        %v3047 = vpop.permute.xlu0 %3046
        %3048 = vrot.lane.b32.xlu0 %v1497, 12
        %v3049 = vpop.permute.xlu0 %3048
        %3050 = vrot.lane.b32.xlu0 %v1498, 12
        %v3051 = vpop.permute.xlu0 %3050
        %3052 = vrot.lane.b32.xlu0 %v1499, 12
        %v3053 = vpop.permute.xlu0 %3052
        %3054 = vrot.lane.b32.xlu0 %v1500, 12
        %v3055 = vpop.permute.xlu0 %3054
        %3056 = vrot.lane.b32.xlu0 %v1501, 12
        %v3057 = vpop.permute.xlu0 %3056
        %3058 = vrot.lane.b32.xlu0 %v1502, 12
        %v3059 = vpop.permute.xlu0 %3058
        %3060 = vrot.lane.b32.xlu0 %v1503, 12
        %v3061 = vpop.permute.xlu0 %3060
        %3062 = vrot.lane.b32.xlu0 %v1504, 12
        %v3063 = vpop.permute.xlu0 %3062
        %3064 = vrot.lane.b32.xlu0 %v1505, 12
        %v3065 = vpop.permute.xlu0 %3064
        %3066 = vrot.lane.b32.xlu0 %v1506, 12
        %v3067 = vpop.permute.xlu0 %3066
        %3068 = vrot.lane.b32.xlu0 %v1507, 12
        %v3069 = vpop.permute.xlu0 %3068
        %3070 = vrot.lane.b32.xlu0 %v1508, 12
        %v3071 = vpop.permute.xlu0 %3070
        %3072 = vrot.lane.b32.xlu0 %v1509, 12
        %v3073 = vpop.permute.xlu0 %3072
        %3074 = vrot.lane.b32.xlu0 %v1510, 12
        %v3075 = vpop.permute.xlu0 %3074
        %3076 = vrot.lane.b32.xlu0 %v1511, 12
        %v3077 = vpop.permute.xlu0 %3076
        %3078 = vrot.lane.b32.xlu0 %v1512, 12
        %v3079 = vpop.permute.xlu0 %3078
        %3080 = vrot.lane.b32.xlu0 %v1513, 12
        %v3081 = vpop.permute.xlu0 %3080
        %3082 = vrot.lane.b32.xlu0 %v1514, 12
        %v3083 = vpop.permute.xlu0 %3082
        %3084 = vrot.lane.b32.xlu0 %v1515, 12
        %v3085 = vpop.permute.xlu0 %3084
        %3086 = vrot.lane.b32.xlu0 %v1516, 12
        %v3087 = vpop.permute.xlu0 %3086
        %3088 = vrot.lane.b32.xlu0 %v1517, 12
        %v3089 = vpop.permute.xlu0 %3088
        %3090 = vrot.lane.b32.xlu0 %v1518, 12
        %v3091 = vpop.permute.xlu0 %3090
        %3092 = vrot.lane.b32.xlu0 %v1519, 12
        %v3093 = vpop.permute.xlu0 %3092
        %3094 = vrot.lane.b32.xlu0 %v1520, 12
        %v3095 = vpop.permute.xlu0 %3094
        %3096 = vrot.lane.b32.xlu0 %v1521, 12
        %v3097 = vpop.permute.xlu0 %3096
        %3098 = vrot.lane.b32.xlu0 %v1522, 12
        %v3099 = vpop.permute.xlu0 %3098
        %3100 = vrot.lane.b32.xlu0 %v1523, 12
        %v3101 = vpop.permute.xlu0 %3100
        %3102 = vrot.lane.b32.xlu0 %v1524, 12
        %v3103 = vpop.permute.xlu0 %3102
        %3104 = vrot.lane.b32.xlu0 %v1525, 12
        %v3105 = vpop.permute.xlu0 %3104
        %3106 = vrot.lane.b32.xlu0 %v1526, 12
        %v3107 = vpop.permute.xlu0 %3106
        %3108 = vrot.lane.b32.xlu0 %v1527, 12
        %v3109 = vpop.permute.xlu0 %3108
        %3110 = vrot.lane.b32.xlu0 %v1528, 12
        %v3111 = vpop.permute.xlu0 %3110
        %3112 = vrot.lane.b32.xlu0 %v1529, 12
        %v3113 = vpop.permute.xlu0 %3112
        %3114 = vrot.lane.b32.xlu0 %v1530, 12
        %v3115 = vpop.permute.xlu0 %3114
        %3116 = vrot.lane.b32.xlu0 %v1531, 12
        %v3117 = vpop.permute.xlu0 %3116
        %3118 = vrot.lane.b32.xlu0 %v1532, 12
        %v3119 = vpop.permute.xlu0 %3118
        %3120 = vrot.lane.b32.xlu0 %v1533, 12
        %v3121 = vpop.permute.xlu0 %3120
        %3122 = vrot.lane.b32.xlu0 %v1534, 12
        %v3123 = vpop.permute.xlu0 %3122
        %3124 = vrot.lane.b32.xlu0 %v1535, 12
        %v3125 = vpop.permute.xlu0 %3124
        %3126 = vrot.lane.b32.xlu0 %v1536, 12
        %v3127 = vpop.permute.xlu0 %3126
        %3128 = vrot.lane.b32.xlu0 %v1537, 12
        %v3129 = vpop.permute.xlu0 %3128
        %3130 = vrot.lane.b32.xlu0 %v3002, 12
        %v3131 = vpop.permute.xlu0 %3130
        %3132 = vrot.lane.b32.xlu0 %v3003, 12
        %v3133 = vpop.permute.xlu0 %3132
        %vm3198 = vcmask 121952
        %3199 = vst.msk [vmem:[#allocation3] sm:$0xff] %vm3198, %v3007
        %3200 = vst.msk [vmem:[#allocation3 + $0x8] sm:$0xff] %vm3198, %v3009
        %3201 = vst.msk [vmem:[#allocation3 + $0x10] sm:$0xff] %vm3198, %v3011
        %3202 = vst.msk [vmem:[#allocation3 + $0x18] sm:$0xff] %vm3198, %v3013
        %3203 = vst.msk [vmem:[#allocation3 + $0x20] sm:$0xff] %vm3198, %v3015
        %3204 = vst.msk [vmem:[#allocation3 + $0x28] sm:$0xff] %vm3198, %v3017
        %3205 = vst.msk [vmem:[#allocation3 + $0x30] sm:$0xff] %vm3198, %v3019
        %3206 = vst.msk [vmem:[#allocation3 + $0x38] sm:$0xff] %vm3198, %v3021
        %3207 = vst.msk [vmem:[#allocation3 + $0x40] sm:$0xff] %vm3198, %v3023
        %3208 = vst.msk [vmem:[#allocation3 + $0x48] sm:$0xff] %vm3198, %v3025
        %3209 = vst.msk [vmem:[#allocation3 + $0x50] sm:$0xff] %vm3198, %v3027
        %3210 = vst.msk [vmem:[#allocation3 + $0x58] sm:$0xff] %vm3198, %v3029
        %3211 = vst.msk [vmem:[#allocation3 + $0x60] sm:$0xff] %vm3198, %v3031
        %3212 = vst.msk [vmem:[#allocation3 + $0x68] sm:$0xff] %vm3198, %v3033
        %3213 = vst.msk [vmem:[#allocation3 + $0x70] sm:$0xff] %vm3198, %v3035
        %3214 = vst.msk [vmem:[#allocation3 + $0x78] sm:$0xff] %vm3198, %v3037
        %3215 = vst.msk [vmem:[#allocation3 + $0x80] sm:$0xff] %vm3198, %v3039
        %3216 = vst.msk [vmem:[#allocation3 + $0x88] sm:$0xff] %vm3198, %v3041
        %3217 = vst.msk [vmem:[#allocation3 + $0x90] sm:$0xff] %vm3198, %v3043
        %3218 = vst.msk [vmem:[#allocation3 + $0x98] sm:$0xff] %vm3198, %v3045
        %3219 = vst.msk [vmem:[#allocation3 + $0xa0] sm:$0xff] %vm3198, %v3047
        %3220 = vst.msk [vmem:[#allocation3 + $0xa8] sm:$0xff] %vm3198, %v3049
        %3221 = vst.msk [vmem:[#allocation3 + $0xb0] sm:$0xff] %vm3198, %v3051
        %3222 = vst.msk [vmem:[#allocation3 + $0xb8] sm:$0xff] %vm3198, %v3053
        %3223 = vst.msk [vmem:[#allocation3 + $0xc0] sm:$0xff] %vm3198, %v3055
        %3224 = vst.msk [vmem:[#allocation3 + $0xc8] sm:$0xff] %vm3198, %v3057
        %3225 = vst.msk [vmem:[#allocation3 + $0xd0] sm:$0xff] %vm3198, %v3059
        %3226 = vst.msk [vmem:[#allocation3 + $0xd8] sm:$0xff] %vm3198, %v3061
        %3227 = vst.msk [vmem:[#allocation3 + $0xe0] sm:$0xff] %vm3198, %v3063
        %3228 = vst.msk [vmem:[#allocation3 + $0xe8] sm:$0xff] %vm3198, %v3065
        %3229 = vst.msk [vmem:[#allocation3 + $0xf0] sm:$0xff] %vm3198, %v3067
        %3230 = vst.msk [vmem:[#allocation3 + $0xf8] sm:$0xff] %vm3198, %v3069
        %3231 = vst.msk [vmem:[#allocation3 + $0x100] sm:$0xff] %vm3198, %v3071
        %3232 = vst.msk [vmem:[#allocation3 + $0x108] sm:$0xff] %vm3198, %v3073
        %3233 = vst.msk [vmem:[#allocation3 + $0x110] sm:$0xff] %vm3198, %v3075
        %3234 = vst.msk [vmem:[#allocation3 + $0x118] sm:$0xff] %vm3198, %v3077
        %3235 = vst.msk [vmem:[#allocation3 + $0x120] sm:$0xff] %vm3198, %v3079
        %3236 = vst.msk [vmem:[#allocation3 + $0x128] sm:$0xff] %vm3198, %v3081
        %3237 = vst.msk [vmem:[#allocation3 + $0x130] sm:$0xff] %vm3198, %v3083
        %3238 = vst.msk [vmem:[#allocation3 + $0x138] sm:$0xff] %vm3198, %v3085
        %3239 = vst.msk [vmem:[#allocation3 + $0x140] sm:$0xff] %vm3198, %v3087
        %3240 = vst.msk [vmem:[#allocation3 + $0x148] sm:$0xff] %vm3198, %v3089
        %3241 = vst.msk [vmem:[#allocation3 + $0x150] sm:$0xff] %vm3198, %v3091
        %3242 = vst.msk [vmem:[#allocation3 + $0x158] sm:$0xff] %vm3198, %v3093
        %3243 = vst.msk [vmem:[#allocation3 + $0x160] sm:$0xff] %vm3198, %v3095
        %3244 = vst.msk [vmem:[#allocation3 + $0x168] sm:$0xff] %vm3198, %v3097
        %3245 = vst.msk [vmem:[#allocation3 + $0x170] sm:$0xff] %vm3198, %v3099
        %3246 = vst.msk [vmem:[#allocation3 + $0x178] sm:$0xff] %vm3198, %v3101
        %3247 = vst.msk [vmem:[#allocation3 + $0x180] sm:$0xff] %vm3198, %v3103
        %3248 = vst.msk [vmem:[#allocation3 + $0x188] sm:$0xff] %vm3198, %v3105
        %3249 = vst.msk [vmem:[#allocation3 + $0x190] sm:$0xff] %vm3198, %v3107
        %3250 = vst.msk [vmem:[#allocation3 + $0x198] sm:$0xff] %vm3198, %v3109
        %3251 = vst.msk [vmem:[#allocation3 + $0x1a0] sm:$0xff] %vm3198, %v3111
        %3252 = vst.msk [vmem:[#allocation3 + $0x1a8] sm:$0xff] %vm3198, %v3113
        %3253 = vst.msk [vmem:[#allocation3 + $0x1b0] sm:$0xff] %vm3198, %v3115
        %3254 = vst.msk [vmem:[#allocation3 + $0x1b8] sm:$0xff] %vm3198, %v3117
        %3255 = vst.msk [vmem:[#allocation3 + $0x1c0] sm:$0xff] %vm3198, %v3119
        %3256 = vst.msk [vmem:[#allocation3 + $0x1c8] sm:$0xff] %vm3198, %v3121
        %3257 = vst.msk [vmem:[#allocation3 + $0x1d0] sm:$0xff] %vm3198, %v3123
        %3258 = vst.msk [vmem:[#allocation3 + $0x1d8] sm:$0xff] %vm3198, %v3125
        %3259 = vst.msk [vmem:[#allocation3 + $0x1e0] sm:$0xff] %vm3198, %v3127
        %3260 = vst.msk [vmem:[#allocation3 + $0x1e8] sm:$0xff] %vm3198, %v3129
        %3261 = vst.msk [vmem:[#allocation3 + $0x1f0] sm:$0xff] %vm3198, %v3131
        %3262 = vst.msk [vmem:[#allocation3 + $0x1f8] sm:$0xff] %vm3198, %v3133
        %v3263 = vrot.slane %v759, 2
        %v3264 = vrot.slane %v760, 2
        %v3265 = vsel %vm1859, %v3263, %v3264
        %v3266 = vrot.slane %v761, 2
        %v3267 = vsel %vm1859, %v3264, %v3266
        %v3268 = vrot.slane %v762, 2
        %v3269 = vsel %vm1859, %v3266, %v3268
        %v3270 = vrot.slane %v763, 2
        %v3271 = vsel %vm1859, %v3268, %v3270
        %v3276 = vpack.c.bf16 %v3267, %v3265
        %v3277 = vpack.c.bf16 %v3271, %v3269
        %3280 = vrot.lane.b32.xlu0 %v2278, 15
        %v3281 = vpop.permute.xlu0 %3280
        %3282 = vrot.lane.b32.xlu0 %v2279, 15
        %v3283 = vpop.permute.xlu0 %3282
        %3284 = vrot.lane.b32.xlu0 %v2280, 15
        %v3285 = vpop.permute.xlu0 %3284
        %3286 = vrot.lane.b32.xlu0 %v2281, 15
        %v3287 = vpop.permute.xlu0 %3286
        %3288 = vrot.lane.b32.xlu0 %v2282, 15
        %v3289 = vpop.permute.xlu0 %3288
        %3290 = vrot.lane.b32.xlu0 %v2283, 15
        %v3291 = vpop.permute.xlu0 %3290
        %3292 = vrot.lane.b32.xlu0 %v2284, 15
        %v3293 = vpop.permute.xlu0 %3292
        %3294 = vrot.lane.b32.xlu0 %v2285, 15
        %v3295 = vpop.permute.xlu0 %3294
        %3296 = vrot.lane.b32.xlu0 %v2286, 15
        %v3297 = vpop.permute.xlu0 %3296
        %3298 = vrot.lane.b32.xlu0 %v2287, 15
        %v3299 = vpop.permute.xlu0 %3298
        %3300 = vrot.lane.b32.xlu0 %v2288, 15
        %v3301 = vpop.permute.xlu0 %3300
        %3302 = vrot.lane.b32.xlu0 %v2289, 15
        %v3303 = vpop.permute.xlu0 %3302
        %3304 = vrot.lane.b32.xlu0 %v2290, 15
        %v3305 = vpop.permute.xlu0 %3304
        %3306 = vrot.lane.b32.xlu0 %v2291, 15
        %v3307 = vpop.permute.xlu0 %3306
        %3308 = vrot.lane.b32.xlu0 %v2292, 15
        %v3309 = vpop.permute.xlu0 %3308
        %3310 = vrot.lane.b32.xlu0 %v2293, 15
        %v3311 = vpop.permute.xlu0 %3310
        %3312 = vrot.lane.b32.xlu0 %v2294, 15
        %v3313 = vpop.permute.xlu0 %3312
        %3314 = vrot.lane.b32.xlu0 %v2295, 15
        %v3315 = vpop.permute.xlu0 %3314
        %3316 = vrot.lane.b32.xlu0 %v2296, 15
        %v3317 = vpop.permute.xlu0 %3316
        %3318 = vrot.lane.b32.xlu0 %v2297, 15
        %v3319 = vpop.permute.xlu0 %3318
        %3320 = vrot.lane.b32.xlu0 %v2298, 15
        %v3321 = vpop.permute.xlu0 %3320
        %3322 = vrot.lane.b32.xlu0 %v2299, 15
        %v3323 = vpop.permute.xlu0 %3322
        %3324 = vrot.lane.b32.xlu0 %v2300, 15
        %v3325 = vpop.permute.xlu0 %3324
        %3326 = vrot.lane.b32.xlu0 %v2301, 15
        %v3327 = vpop.permute.xlu0 %3326
        %3328 = vrot.lane.b32.xlu0 %v2302, 15
        %v3329 = vpop.permute.xlu0 %3328
        %3330 = vrot.lane.b32.xlu0 %v2303, 15
        %v3331 = vpop.permute.xlu0 %3330
        %3332 = vrot.lane.b32.xlu0 %v2304, 15
        %v3333 = vpop.permute.xlu0 %3332
        %3334 = vrot.lane.b32.xlu0 %v2305, 15
        %v3335 = vpop.permute.xlu0 %3334
        %3336 = vrot.lane.b32.xlu0 %v2306, 15
        %v3337 = vpop.permute.xlu0 %3336
        %3338 = vrot.lane.b32.xlu0 %v2307, 15
        %v3339 = vpop.permute.xlu0 %3338
        %3340 = vrot.lane.b32.xlu0 %v2308, 15
        %v3341 = vpop.permute.xlu0 %3340
        %3342 = vrot.lane.b32.xlu0 %v2309, 15
        %v3343 = vpop.permute.xlu0 %3342
        %3344 = vrot.lane.b32.xlu0 %v2310, 15
        %v3345 = vpop.permute.xlu0 %3344
        %3346 = vrot.lane.b32.xlu0 %v2311, 15
        %v3347 = vpop.permute.xlu0 %3346
        %3348 = vrot.lane.b32.xlu0 %v2312, 15
        %v3349 = vpop.permute.xlu0 %3348
        %3350 = vrot.lane.b32.xlu0 %v2313, 15
        %v3351 = vpop.permute.xlu0 %3350
        %3352 = vrot.lane.b32.xlu0 %v2314, 15
        %v3353 = vpop.permute.xlu0 %3352
        %3354 = vrot.lane.b32.xlu0 %v2315, 15
        %v3355 = vpop.permute.xlu0 %3354
        %3356 = vrot.lane.b32.xlu0 %v2316, 15
        %v3357 = vpop.permute.xlu0 %3356
        %3358 = vrot.lane.b32.xlu0 %v2317, 15
        %v3359 = vpop.permute.xlu0 %3358
        %3360 = vrot.lane.b32.xlu0 %v2318, 15
        %v3361 = vpop.permute.xlu0 %3360
        %3362 = vrot.lane.b32.xlu0 %v2319, 15
        %v3363 = vpop.permute.xlu0 %3362
        %3364 = vrot.lane.b32.xlu0 %v2320, 15
        %v3365 = vpop.permute.xlu0 %3364
        %3366 = vrot.lane.b32.xlu0 %v2321, 15
        %v3367 = vpop.permute.xlu0 %3366
        %3368 = vrot.lane.b32.xlu0 %v2322, 15
        %v3369 = vpop.permute.xlu0 %3368
        %3370 = vrot.lane.b32.xlu0 %v2323, 15
        %v3371 = vpop.permute.xlu0 %3370
        %3372 = vrot.lane.b32.xlu0 %v2324, 15
        %v3373 = vpop.permute.xlu0 %3372
        %3374 = vrot.lane.b32.xlu0 %v2325, 15
        %v3375 = vpop.permute.xlu0 %3374
        %3376 = vrot.lane.b32.xlu0 %v2326, 15
        %v3377 = vpop.permute.xlu0 %3376
        %3378 = vrot.lane.b32.xlu0 %v2327, 15
        %v3379 = vpop.permute.xlu0 %3378
        %3380 = vrot.lane.b32.xlu0 %v2328, 15
        %v3381 = vpop.permute.xlu0 %3380
        %3382 = vrot.lane.b32.xlu0 %v2329, 15
        %v3383 = vpop.permute.xlu0 %3382
        %3384 = vrot.lane.b32.xlu0 %v2330, 15
        %v3385 = vpop.permute.xlu0 %3384
        %3386 = vrot.lane.b32.xlu0 %v2331, 15
        %v3387 = vpop.permute.xlu0 %3386
        %3388 = vrot.lane.b32.xlu0 %v2332, 15
        %v3389 = vpop.permute.xlu0 %3388
        %3390 = vrot.lane.b32.xlu0 %v2333, 15
        %v3391 = vpop.permute.xlu0 %3390
        %3392 = vrot.lane.b32.xlu0 %v2334, 15
        %v3393 = vpop.permute.xlu0 %3392
        %3394 = vrot.lane.b32.xlu0 %v2335, 15
        %v3395 = vpop.permute.xlu0 %3394
        %3396 = vrot.lane.b32.xlu0 %v2336, 15
        %v3397 = vpop.permute.xlu0 %3396
        %3398 = vrot.lane.b32.xlu0 %v2337, 15
        %v3399 = vpop.permute.xlu0 %3398
        %3400 = vrot.lane.b32.xlu0 %v2338, 15
        %v3401 = vpop.permute.xlu0 %3400
        %3402 = vrot.lane.b32.xlu0 %v2339, 15
        %v3403 = vpop.permute.xlu0 %3402
        %3404 = vrot.lane.b32.xlu0 %v3276, 15
        %v3405 = vpop.permute.xlu0 %3404
        %3406 = vrot.lane.b32.xlu0 %v3277, 15
        %v3407 = vpop.permute.xlu0 %3406
        %vm3472 = vcmask 146552
        %3473 = vst.msk [vmem:[#allocation3] sm:$0xff] %vm3472, %v3281
        %3474 = vst.msk [vmem:[#allocation3 + $0x8] sm:$0xff] %vm3472, %v3283
        %3475 = vst.msk [vmem:[#allocation3 + $0x10] sm:$0xff] %vm3472, %v3285
        %3476 = vst.msk [vmem:[#allocation3 + $0x18] sm:$0xff] %vm3472, %v3287
        %3477 = vst.msk [vmem:[#allocation3 + $0x20] sm:$0xff] %vm3472, %v3289
        %3478 = vst.msk [vmem:[#allocation3 + $0x28] sm:$0xff] %vm3472, %v3291
        %3479 = vst.msk [vmem:[#allocation3 + $0x30] sm:$0xff] %vm3472, %v3293
        %3480 = vst.msk [vmem:[#allocation3 + $0x38] sm:$0xff] %vm3472, %v3295
        %3481 = vst.msk [vmem:[#allocation3 + $0x40] sm:$0xff] %vm3472, %v3297
        %3482 = vst.msk [vmem:[#allocation3 + $0x48] sm:$0xff] %vm3472, %v3299
        %3483 = vst.msk [vmem:[#allocation3 + $0x50] sm:$0xff] %vm3472, %v3301
        %3484 = vst.msk [vmem:[#allocation3 + $0x58] sm:$0xff] %vm3472, %v3303
        %3485 = vst.msk [vmem:[#allocation3 + $0x60] sm:$0xff] %vm3472, %v3305
        %3486 = vst.msk [vmem:[#allocation3 + $0x68] sm:$0xff] %vm3472, %v3307
        %3487 = vst.msk [vmem:[#allocation3 + $0x70] sm:$0xff] %vm3472, %v3309
        %3488 = vst.msk [vmem:[#allocation3 + $0x78] sm:$0xff] %vm3472, %v3311
        %3489 = vst.msk [vmem:[#allocation3 + $0x80] sm:$0xff] %vm3472, %v3313
        %3490 = vst.msk [vmem:[#allocation3 + $0x88] sm:$0xff] %vm3472, %v3315
        %3491 = vst.msk [vmem:[#allocation3 + $0x90] sm:$0xff] %vm3472, %v3317
        %3492 = vst.msk [vmem:[#allocation3 + $0x98] sm:$0xff] %vm3472, %v3319
        %3493 = vst.msk [vmem:[#allocation3 + $0xa0] sm:$0xff] %vm3472, %v3321
        %3494 = vst.msk [vmem:[#allocation3 + $0xa8] sm:$0xff] %vm3472, %v3323
        %3495 = vst.msk [vmem:[#allocation3 + $0xb0] sm:$0xff] %vm3472, %v3325
        %3496 = vst.msk [vmem:[#allocation3 + $0xb8] sm:$0xff] %vm3472, %v3327
        %3497 = vst.msk [vmem:[#allocation3 + $0xc0] sm:$0xff] %vm3472, %v3329
        %3498 = vst.msk [vmem:[#allocation3 + $0xc8] sm:$0xff] %vm3472, %v3331
        %3499 = vst.msk [vmem:[#allocation3 + $0xd0] sm:$0xff] %vm3472, %v3333
        %3500 = vst.msk [vmem:[#allocation3 + $0xd8] sm:$0xff] %vm3472, %v3335
        %3501 = vst.msk [vmem:[#allocation3 + $0xe0] sm:$0xff] %vm3472, %v3337
        %3502 = vst.msk [vmem:[#allocation3 + $0xe8] sm:$0xff] %vm3472, %v3339
        %3503 = vst.msk [vmem:[#allocation3 + $0xf0] sm:$0xff] %vm3472, %v3341
        %3504 = vst.msk [vmem:[#allocation3 + $0xf8] sm:$0xff] %vm3472, %v3343
        %3505 = vst.msk [vmem:[#allocation3 + $0x100] sm:$0xff] %vm3472, %v3345
        %3506 = vst.msk [vmem:[#allocation3 + $0x108] sm:$0xff] %vm3472, %v3347
        %3507 = vst.msk [vmem:[#allocation3 + $0x110] sm:$0xff] %vm3472, %v3349
        %3508 = vst.msk [vmem:[#allocation3 + $0x118] sm:$0xff] %vm3472, %v3351
        %3509 = vst.msk [vmem:[#allocation3 + $0x120] sm:$0xff] %vm3472, %v3353
        %3510 = vst.msk [vmem:[#allocation3 + $0x128] sm:$0xff] %vm3472, %v3355
        %3511 = vst.msk [vmem:[#allocation3 + $0x130] sm:$0xff] %vm3472, %v3357
        %3512 = vst.msk [vmem:[#allocation3 + $0x138] sm:$0xff] %vm3472, %v3359
        %3513 = vst.msk [vmem:[#allocation3 + $0x140] sm:$0xff] %vm3472, %v3361
        %3514 = vst.msk [vmem:[#allocation3 + $0x148] sm:$0xff] %vm3472, %v3363
        %3515 = vst.msk [vmem:[#allocation3 + $0x150] sm:$0xff] %vm3472, %v3365
        %3516 = vst.msk [vmem:[#allocation3 + $0x158] sm:$0xff] %vm3472, %v3367
        %3517 = vst.msk [vmem:[#allocation3 + $0x160] sm:$0xff] %vm3472, %v3369
        %3518 = vst.msk [vmem:[#allocation3 + $0x168] sm:$0xff] %vm3472, %v3371
        %3519 = vst.msk [vmem:[#allocation3 + $0x170] sm:$0xff] %vm3472, %v3373
        %3520 = vst.msk [vmem:[#allocation3 + $0x178] sm:$0xff] %vm3472, %v3375
        %3521 = vst.msk [vmem:[#allocation3 + $0x180] sm:$0xff] %vm3472, %v3377
        %3522 = vst.msk [vmem:[#allocation3 + $0x188] sm:$0xff] %vm3472, %v3379
        %3523 = vst.msk [vmem:[#allocation3 + $0x190] sm:$0xff] %vm3472, %v3381
        %3524 = vst.msk [vmem:[#allocation3 + $0x198] sm:$0xff] %vm3472, %v3383
        %3525 = vst.msk [vmem:[#allocation3 + $0x1a0] sm:$0xff] %vm3472, %v3385
        %3526 = vst.msk [vmem:[#allocation3 + $0x1a8] sm:$0xff] %vm3472, %v3387
        %3527 = vst.msk [vmem:[#allocation3 + $0x1b0] sm:$0xff] %vm3472, %v3389
        %3528 = vst.msk [vmem:[#allocation3 + $0x1b8] sm:$0xff] %vm3472, %v3391
        %3529 = vst.msk [vmem:[#allocation3 + $0x1c0] sm:$0xff] %vm3472, %v3393
        %3530 = vst.msk [vmem:[#allocation3 + $0x1c8] sm:$0xff] %vm3472, %v3395
        %3531 = vst.msk [vmem:[#allocation3 + $0x1d0] sm:$0xff] %vm3472, %v3397
        %3532 = vst.msk [vmem:[#allocation3 + $0x1d8] sm:$0xff] %vm3472, %v3399
        %3533 = vst.msk [vmem:[#allocation3 + $0x1e0] sm:$0xff] %vm3472, %v3401
        %3534 = vst.msk [vmem:[#allocation3 + $0x1e8] sm:$0xff] %vm3472, %v3403
        %3535 = vst.msk [vmem:[#allocation3 + $0x1f0] sm:$0xff] %vm3472, %v3405
        %3536 = vst.msk [vmem:[#allocation3 + $0x1f8] sm:$0xff] %vm3472, %v3407
        %v3537 = vpack.c.bf16 %v765, %v764
        %v3538 = vpack.c.bf16 %v767, %v766
        %3541 = vrot.lane.b32.xlu0 %v773, 18
        %v3542 = vpop.permute.xlu0 %3541
        %3543 = vrot.lane.b32.xlu0 %v774, 18
        %v3544 = vpop.permute.xlu0 %3543
        %3545 = vrot.lane.b32.xlu0 %v775, 18
        %v3546 = vpop.permute.xlu0 %3545
        %3547 = vrot.lane.b32.xlu0 %v776, 18
        %v3548 = vpop.permute.xlu0 %3547
        %3549 = vrot.lane.b32.xlu0 %v777, 18
        %v3550 = vpop.permute.xlu0 %3549
        %3551 = vrot.lane.b32.xlu0 %v778, 18
        %v3552 = vpop.permute.xlu0 %3551
        %3553 = vrot.lane.b32.xlu0 %v779, 18
        %v3554 = vpop.permute.xlu0 %3553
        %3555 = vrot.lane.b32.xlu0 %v780, 18
        %v3556 = vpop.permute.xlu0 %3555
        %3557 = vrot.lane.b32.xlu0 %v781, 18
        %v3558 = vpop.permute.xlu0 %3557
        %3559 = vrot.lane.b32.xlu0 %v782, 18
        %v3560 = vpop.permute.xlu0 %3559
        %3561 = vrot.lane.b32.xlu0 %v783, 18
        %v3562 = vpop.permute.xlu0 %3561
        %3563 = vrot.lane.b32.xlu0 %v784, 18
        %v3564 = vpop.permute.xlu0 %3563
        %3565 = vrot.lane.b32.xlu0 %v785, 18
        %v3566 = vpop.permute.xlu0 %3565
        %3567 = vrot.lane.b32.xlu0 %v786, 18
        %v3568 = vpop.permute.xlu0 %3567
        %3569 = vrot.lane.b32.xlu0 %v787, 18
        %v3570 = vpop.permute.xlu0 %3569
        %3571 = vrot.lane.b32.xlu0 %v788, 18
        %v3572 = vpop.permute.xlu0 %3571
        %3573 = vrot.lane.b32.xlu0 %v789, 18
        %v3574 = vpop.permute.xlu0 %3573
        %3575 = vrot.lane.b32.xlu0 %v790, 18
        %v3576 = vpop.permute.xlu0 %3575
        %3577 = vrot.lane.b32.xlu0 %v791, 18
        %v3578 = vpop.permute.xlu0 %3577
        %3579 = vrot.lane.b32.xlu0 %v792, 18
        %v3580 = vpop.permute.xlu0 %3579
        %3581 = vrot.lane.b32.xlu0 %v793, 18
        %v3582 = vpop.permute.xlu0 %3581
        %3583 = vrot.lane.b32.xlu0 %v794, 18
        %v3584 = vpop.permute.xlu0 %3583
        %3585 = vrot.lane.b32.xlu0 %v795, 18
        %v3586 = vpop.permute.xlu0 %3585
        %3587 = vrot.lane.b32.xlu0 %v796, 18
        %v3588 = vpop.permute.xlu0 %3587
        %3589 = vrot.lane.b32.xlu0 %v797, 18
        %v3590 = vpop.permute.xlu0 %3589
        %3591 = vrot.lane.b32.xlu0 %v798, 18
        %v3592 = vpop.permute.xlu0 %3591
        %3593 = vrot.lane.b32.xlu0 %v799, 18
        %v3594 = vpop.permute.xlu0 %3593
        %3595 = vrot.lane.b32.xlu0 %v800, 18
        %v3596 = vpop.permute.xlu0 %3595
        %3597 = vrot.lane.b32.xlu0 %v801, 18
        %v3598 = vpop.permute.xlu0 %3597
        %3599 = vrot.lane.b32.xlu0 %v802, 18
        %v3600 = vpop.permute.xlu0 %3599
        %3601 = vrot.lane.b32.xlu0 %v803, 18
        %v3602 = vpop.permute.xlu0 %3601
        %3603 = vrot.lane.b32.xlu0 %v804, 18
        %v3604 = vpop.permute.xlu0 %3603
        %3605 = vrot.lane.b32.xlu0 %v805, 18
        %v3606 = vpop.permute.xlu0 %3605
        %3607 = vrot.lane.b32.xlu0 %v806, 18
        %v3608 = vpop.permute.xlu0 %3607
        %3609 = vrot.lane.b32.xlu0 %v807, 18
        %v3610 = vpop.permute.xlu0 %3609
        %3611 = vrot.lane.b32.xlu0 %v808, 18
        %v3612 = vpop.permute.xlu0 %3611
        %3613 = vrot.lane.b32.xlu0 %v809, 18
        %v3614 = vpop.permute.xlu0 %3613
        %3615 = vrot.lane.b32.xlu0 %v810, 18
        %v3616 = vpop.permute.xlu0 %3615
        %3617 = vrot.lane.b32.xlu0 %v811, 18
        %v3618 = vpop.permute.xlu0 %3617
        %3619 = vrot.lane.b32.xlu0 %v812, 18
        %v3620 = vpop.permute.xlu0 %3619
        %3621 = vrot.lane.b32.xlu0 %v813, 18
        %v3622 = vpop.permute.xlu0 %3621
        %3623 = vrot.lane.b32.xlu0 %v814, 18
        %v3624 = vpop.permute.xlu0 %3623
        %3625 = vrot.lane.b32.xlu0 %v815, 18
        %v3626 = vpop.permute.xlu0 %3625
        %3627 = vrot.lane.b32.xlu0 %v816, 18
        %v3628 = vpop.permute.xlu0 %3627
        %3629 = vrot.lane.b32.xlu0 %v817, 18
        %v3630 = vpop.permute.xlu0 %3629
        %3631 = vrot.lane.b32.xlu0 %v818, 18
        %v3632 = vpop.permute.xlu0 %3631
        %3633 = vrot.lane.b32.xlu0 %v819, 18
        %v3634 = vpop.permute.xlu0 %3633
        %3635 = vrot.lane.b32.xlu0 %v820, 18
        %v3636 = vpop.permute.xlu0 %3635
        %3637 = vrot.lane.b32.xlu0 %v821, 18
        %v3638 = vpop.permute.xlu0 %3637
        %3639 = vrot.lane.b32.xlu0 %v822, 18
        %v3640 = vpop.permute.xlu0 %3639
        %3641 = vrot.lane.b32.xlu0 %v823, 18
        %v3642 = vpop.permute.xlu0 %3641
        %3643 = vrot.lane.b32.xlu0 %v824, 18
        %v3644 = vpop.permute.xlu0 %3643
        %3645 = vrot.lane.b32.xlu0 %v825, 18
        %v3646 = vpop.permute.xlu0 %3645
        %3647 = vrot.lane.b32.xlu0 %v826, 18
        %v3648 = vpop.permute.xlu0 %3647
        %3649 = vrot.lane.b32.xlu0 %v827, 18
        %v3650 = vpop.permute.xlu0 %3649
        %3651 = vrot.lane.b32.xlu0 %v828, 18
        %v3652 = vpop.permute.xlu0 %3651
        %3653 = vrot.lane.b32.xlu0 %v829, 18
        %v3654 = vpop.permute.xlu0 %3653
        %3655 = vrot.lane.b32.xlu0 %v830, 18
        %v3656 = vpop.permute.xlu0 %3655
        %3657 = vrot.lane.b32.xlu0 %v831, 18
        %v3658 = vpop.permute.xlu0 %3657
        %3659 = vrot.lane.b32.xlu0 %v832, 18
        %v3660 = vpop.permute.xlu0 %3659
        %3661 = vrot.lane.b32.xlu0 %v2661, 18
        %v3662 = vpop.permute.xlu0 %3661
        %3663 = vrot.lane.b32.xlu0 %v2662, 18
        %v3664 = vpop.permute.xlu0 %3663
        %3665 = vrot.lane.b32.xlu0 %v3537, 18
        %v3666 = vpop.permute.xlu0 %3665
        %3667 = vrot.lane.b32.xlu0 %v3538, 18
        %v3668 = vpop.permute.xlu0 %3667
        %vm3733 = vcmask 171152
        %3734 = vst.msk [vmem:[#allocation3] sm:$0xff] %vm3733, %v3542
        %3735 = vst.msk [vmem:[#allocation3 + $0x8] sm:$0xff] %vm3733, %v3544
        %3736 = vst.msk [vmem:[#allocation3 + $0x10] sm:$0xff] %vm3733, %v3546
        %3737 = vst.msk [vmem:[#allocation3 + $0x18] sm:$0xff] %vm3733, %v3548
        %3738 = vst.msk [vmem:[#allocation3 + $0x20] sm:$0xff] %vm3733, %v3550
        %3739 = vst.msk [vmem:[#allocation3 + $0x28] sm:$0xff] %vm3733, %v3552
        %3740 = vst.msk [vmem:[#allocation3 + $0x30] sm:$0xff] %vm3733, %v3554
        %3741 = vst.msk [vmem:[#allocation3 + $0x38] sm:$0xff] %vm3733, %v3556
        %3742 = vst.msk [vmem:[#allocation3 + $0x40] sm:$0xff] %vm3733, %v3558
        %3743 = vst.msk [vmem:[#allocation3 + $0x48] sm:$0xff] %vm3733, %v3560
        %3744 = vst.msk [vmem:[#allocation3 + $0x50] sm:$0xff] %vm3733, %v3562
        %3745 = vst.msk [vmem:[#allocation3 + $0x58] sm:$0xff] %vm3733, %v3564
        %3746 = vst.msk [vmem:[#allocation3 + $0x60] sm:$0xff] %vm3733, %v3566
        %3747 = vst.msk [vmem:[#allocation3 + $0x68] sm:$0xff] %vm3733, %v3568
        %3748 = vst.msk [vmem:[#allocation3 + $0x70] sm:$0xff] %vm3733, %v3570
        %3749 = vst.msk [vmem:[#allocation3 + $0x78] sm:$0xff] %vm3733, %v3572
        %3750 = vst.msk [vmem:[#allocation3 + $0x80] sm:$0xff] %vm3733, %v3574
        %3751 = vst.msk [vmem:[#allocation3 + $0x88] sm:$0xff] %vm3733, %v3576
        %3752 = vst.msk [vmem:[#allocation3 + $0x90] sm:$0xff] %vm3733, %v3578
        %3753 = vst.msk [vmem:[#allocation3 + $0x98] sm:$0xff] %vm3733, %v3580
        %3754 = vst.msk [vmem:[#allocation3 + $0xa0] sm:$0xff] %vm3733, %v3582
        %3755 = vst.msk [vmem:[#allocation3 + $0xa8] sm:$0xff] %vm3733, %v3584
        %3756 = vst.msk [vmem:[#allocation3 + $0xb0] sm:$0xff] %vm3733, %v3586
        %3757 = vst.msk [vmem:[#allocation3 + $0xb8] sm:$0xff] %vm3733, %v3588
        %3758 = vst.msk [vmem:[#allocation3 + $0xc0] sm:$0xff] %vm3733, %v3590
        %3759 = vst.msk [vmem:[#allocation3 + $0xc8] sm:$0xff] %vm3733, %v3592
        %3760 = vst.msk [vmem:[#allocation3 + $0xd0] sm:$0xff] %vm3733, %v3594
        %3761 = vst.msk [vmem:[#allocation3 + $0xd8] sm:$0xff] %vm3733, %v3596
        %3762 = vst.msk [vmem:[#allocation3 + $0xe0] sm:$0xff] %vm3733, %v3598
        %3763 = vst.msk [vmem:[#allocation3 + $0xe8] sm:$0xff] %vm3733, %v3600
        %3764 = vst.msk [vmem:[#allocation3 + $0xf0] sm:$0xff] %vm3733, %v3602
        %3765 = vst.msk [vmem:[#allocation3 + $0xf8] sm:$0xff] %vm3733, %v3604
        %3766 = vst.msk [vmem:[#allocation3 + $0x100] sm:$0xff] %vm3733, %v3606
        %3767 = vst.msk [vmem:[#allocation3 + $0x108] sm:$0xff] %vm3733, %v3608
        %3768 = vst.msk [vmem:[#allocation3 + $0x110] sm:$0xff] %vm3733, %v3610
        %3769 = vst.msk [vmem:[#allocation3 + $0x118] sm:$0xff] %vm3733, %v3612
        %3770 = vst.msk [vmem:[#allocation3 + $0x120] sm:$0xff] %vm3733, %v3614
        %3771 = vst.msk [vmem:[#allocation3 + $0x128] sm:$0xff] %vm3733, %v3616
        %3772 = vst.msk [vmem:[#allocation3 + $0x130] sm:$0xff] %vm3733, %v3618
        %3773 = vst.msk [vmem:[#allocation3 + $0x138] sm:$0xff] %vm3733, %v3620
        %3774 = vst.msk [vmem:[#allocation3 + $0x140] sm:$0xff] %vm3733, %v3622
        %3775 = vst.msk [vmem:[#allocation3 + $0x148] sm:$0xff] %vm3733, %v3624
        %3776 = vst.msk [vmem:[#allocation3 + $0x150] sm:$0xff] %vm3733, %v3626
        %3777 = vst.msk [vmem:[#allocation3 + $0x158] sm:$0xff] %vm3733, %v3628
        %3778 = vst.msk [vmem:[#allocation3 + $0x160] sm:$0xff] %vm3733, %v3630
        %3779 = vst.msk [vmem:[#allocation3 + $0x168] sm:$0xff] %vm3733, %v3632
        %3780 = vst.msk [vmem:[#allocation3 + $0x170] sm:$0xff] %vm3733, %v3634
        %3781 = vst.msk [vmem:[#allocation3 + $0x178] sm:$0xff] %vm3733, %v3636
        %3782 = vst.msk [vmem:[#allocation3 + $0x180] sm:$0xff] %vm3733, %v3638
        %3783 = vst.msk [vmem:[#allocation3 + $0x188] sm:$0xff] %vm3733, %v3640
        %3784 = vst.msk [vmem:[#allocation3 + $0x190] sm:$0xff] %vm3733, %v3642
        %3785 = vst.msk [vmem:[#allocation3 + $0x198] sm:$0xff] %vm3733, %v3644
        %3786 = vst.msk [vmem:[#allocation3 + $0x1a0] sm:$0xff] %vm3733, %v3646
        %3787 = vst.msk [vmem:[#allocation3 + $0x1a8] sm:$0xff] %vm3733, %v3648
        %3788 = vst.msk [vmem:[#allocation3 + $0x1b0] sm:$0xff] %vm3733, %v3650
        %3789 = vst.msk [vmem:[#allocation3 + $0x1b8] sm:$0xff] %vm3733, %v3652
        %3790 = vst.msk [vmem:[#allocation3 + $0x1c0] sm:$0xff] %vm3733, %v3654
        %3791 = vst.msk [vmem:[#allocation3 + $0x1c8] sm:$0xff] %vm3733, %v3656
        %3792 = vst.msk [vmem:[#allocation3 + $0x1d0] sm:$0xff] %vm3733, %v3658
        %3793 = vst.msk [vmem:[#allocation3 + $0x1d8] sm:$0xff] %vm3733, %v3660
        %3794 = vst.msk [vmem:[#allocation3 + $0x1e0] sm:$0xff] %vm3733, %v3662
        %3795 = vst.msk [vmem:[#allocation3 + $0x1e8] sm:$0xff] %vm3733, %v3664
        %3796 = vst.msk [vmem:[#allocation3 + $0x1f0] sm:$0xff] %vm3733, %v3666
        %3797 = vst.msk [vmem:[#allocation3 + $0x1f8] sm:$0xff] %vm3733, %v3668
        %v3803 = vrot.slane %v764, 1
        %v3804 = vrot.slane %v765, 1
        %v3805 = vsel %vm1057, %v3803, %v3804
        %v3806 = vrot.slane %v766, 1
        %v3807 = vsel %vm1057, %v3804, %v3806
        %v3808 = vrot.slane %v767, 1
        %v3809 = vsel %vm1057, %v3806, %v3808
        %v3810 = vrot.slane %v768, 1
        %v3811 = vsel %vm1057, %v3808, %v3810
        %v3816 = vpack.c.bf16 %v3807, %v3805
        %v3817 = vpack.c.bf16 %v3811, %v3809
        %3820 = vrot.lane.b32.xlu0 %v1478, 21
        %v3821 = vpop.permute.xlu0 %3820
        %3822 = vrot.lane.b32.xlu0 %v1479, 21
        %v3823 = vpop.permute.xlu0 %3822
        %3824 = vrot.lane.b32.xlu0 %v1480, 21
        %v3825 = vpop.permute.xlu0 %3824
        %3826 = vrot.lane.b32.xlu0 %v1481, 21
        %v3827 = vpop.permute.xlu0 %3826
        %3828 = vrot.lane.b32.xlu0 %v1482, 21
        %v3829 = vpop.permute.xlu0 %3828
        %3830 = vrot.lane.b32.xlu0 %v1483, 21
        %v3831 = vpop.permute.xlu0 %3830
        %3832 = vrot.lane.b32.xlu0 %v1484, 21
        %v3833 = vpop.permute.xlu0 %3832
        %3834 = vrot.lane.b32.xlu0 %v1485, 21
        %v3835 = vpop.permute.xlu0 %3834
        %3836 = vrot.lane.b32.xlu0 %v1486, 21
        %v3837 = vpop.permute.xlu0 %3836
        %3838 = vrot.lane.b32.xlu0 %v1487, 21
        %v3839 = vpop.permute.xlu0 %3838
        %3840 = vrot.lane.b32.xlu0 %v1488, 21
        %v3841 = vpop.permute.xlu0 %3840
        %3842 = vrot.lane.b32.xlu0 %v1489, 21
        %v3843 = vpop.permute.xlu0 %3842
        %3844 = vrot.lane.b32.xlu0 %v1490, 21
        %v3845 = vpop.permute.xlu0 %3844
        %3846 = vrot.lane.b32.xlu0 %v1491, 21
        %v3847 = vpop.permute.xlu0 %3846
        %3848 = vrot.lane.b32.xlu0 %v1492, 21
        %v3849 = vpop.permute.xlu0 %3848
        %3850 = vrot.lane.b32.xlu0 %v1493, 21
        %v3851 = vpop.permute.xlu0 %3850
        %3852 = vrot.lane.b32.xlu0 %v1494, 21
        %v3853 = vpop.permute.xlu0 %3852
        %3854 = vrot.lane.b32.xlu0 %v1495, 21
        %v3855 = vpop.permute.xlu0 %3854
        %3856 = vrot.lane.b32.xlu0 %v1496, 21
        %v3857 = vpop.permute.xlu0 %3856
        %3858 = vrot.lane.b32.xlu0 %v1497, 21
        %v3859 = vpop.permute.xlu0 %3858
        %3860 = vrot.lane.b32.xlu0 %v1498, 21
        %v3861 = vpop.permute.xlu0 %3860
        %3862 = vrot.lane.b32.xlu0 %v1499, 21
        %v3863 = vpop.permute.xlu0 %3862
        %3864 = vrot.lane.b32.xlu0 %v1500, 21
        %v3865 = vpop.permute.xlu0 %3864
        %3866 = vrot.lane.b32.xlu0 %v1501, 21
        %v3867 = vpop.permute.xlu0 %3866
        %3868 = vrot.lane.b32.xlu0 %v1502, 21
        %v3869 = vpop.permute.xlu0 %3868
        %3870 = vrot.lane.b32.xlu0 %v1503, 21
        %v3871 = vpop.permute.xlu0 %3870
        %3872 = vrot.lane.b32.xlu0 %v1504, 21
        %v3873 = vpop.permute.xlu0 %3872
        %3874 = vrot.lane.b32.xlu0 %v1505, 21
        %v3875 = vpop.permute.xlu0 %3874
        %3876 = vrot.lane.b32.xlu0 %v1506, 21
        %v3877 = vpop.permute.xlu0 %3876
        %3878 = vrot.lane.b32.xlu0 %v1507, 21
        %v3879 = vpop.permute.xlu0 %3878
        %3880 = vrot.lane.b32.xlu0 %v1508, 21
        %v3881 = vpop.permute.xlu0 %3880
        %3882 = vrot.lane.b32.xlu0 %v1509, 21
        %v3883 = vpop.permute.xlu0 %3882
        %3884 = vrot.lane.b32.xlu0 %v1510, 21
        %v3885 = vpop.permute.xlu0 %3884
        %3886 = vrot.lane.b32.xlu0 %v1511, 21
        %v3887 = vpop.permute.xlu0 %3886
        %3888 = vrot.lane.b32.xlu0 %v1512, 21
        %v3889 = vpop.permute.xlu0 %3888
        %3890 = vrot.lane.b32.xlu0 %v1513, 21
        %v3891 = vpop.permute.xlu0 %3890
        %3892 = vrot.lane.b32.xlu0 %v1514, 21
        %v3893 = vpop.permute.xlu0 %3892
        %3894 = vrot.lane.b32.xlu0 %v1515, 21
        %v3895 = vpop.permute.xlu0 %3894
        %3896 = vrot.lane.b32.xlu0 %v1516, 21
        %v3897 = vpop.permute.xlu0 %3896
        %3898 = vrot.lane.b32.xlu0 %v1517, 21
        %v3899 = vpop.permute.xlu0 %3898
        %3900 = vrot.lane.b32.xlu0 %v1518, 21
        %v3901 = vpop.permute.xlu0 %3900
        %3902 = vrot.lane.b32.xlu0 %v1519, 21
        %v3903 = vpop.permute.xlu0 %3902
        %3904 = vrot.lane.b32.xlu0 %v1520, 21
        %v3905 = vpop.permute.xlu0 %3904
        %3906 = vrot.lane.b32.xlu0 %v1521, 21
        %v3907 = vpop.permute.xlu0 %3906
        %3908 = vrot.lane.b32.xlu0 %v1522, 21
        %v3909 = vpop.permute.xlu0 %3908
        %3910 = vrot.lane.b32.xlu0 %v1523, 21
        %v3911 = vpop.permute.xlu0 %3910
        %3912 = vrot.lane.b32.xlu0 %v1524, 21
        %v3913 = vpop.permute.xlu0 %3912
        %3914 = vrot.lane.b32.xlu0 %v1525, 21
        %v3915 = vpop.permute.xlu0 %3914
        %3916 = vrot.lane.b32.xlu0 %v1526, 21
        %v3917 = vpop.permute.xlu0 %3916
        %3918 = vrot.lane.b32.xlu0 %v1527, 21
        %v3919 = vpop.permute.xlu0 %3918
        %3920 = vrot.lane.b32.xlu0 %v1528, 21
        %v3921 = vpop.permute.xlu0 %3920
        %3922 = vrot.lane.b32.xlu0 %v1529, 21
        %v3923 = vpop.permute.xlu0 %3922
        %3924 = vrot.lane.b32.xlu0 %v1530, 21
        %v3925 = vpop.permute.xlu0 %3924
        %3926 = vrot.lane.b32.xlu0 %v1531, 21
        %v3927 = vpop.permute.xlu0 %3926
        %3928 = vrot.lane.b32.xlu0 %v1532, 21
        %v3929 = vpop.permute.xlu0 %3928
        %3930 = vrot.lane.b32.xlu0 %v1533, 21
        %v3931 = vpop.permute.xlu0 %3930
        %3932 = vrot.lane.b32.xlu0 %v1534, 21
        %v3933 = vpop.permute.xlu0 %3932
        %3934 = vrot.lane.b32.xlu0 %v1535, 21
        %v3935 = vpop.permute.xlu0 %3934
        %3936 = vrot.lane.b32.xlu0 %v1536, 21
        %v3937 = vpop.permute.xlu0 %3936
        %3938 = vrot.lane.b32.xlu0 %v1537, 21
        %v3939 = vpop.permute.xlu0 %3938
        %3940 = vrot.lane.b32.xlu0 %v3002, 21
        %v3941 = vpop.permute.xlu0 %3940
        %3942 = vrot.lane.b32.xlu0 %v3003, 21
        %v3943 = vpop.permute.xlu0 %3942
        %3944 = vrot.lane.b32.xlu0 %v3816, 21
        %v3945 = vpop.permute.xlu0 %3944
        %3946 = vrot.lane.b32.xlu0 %v3817, 21
        %v3947 = vpop.permute.xlu0 %3946
        %vm4012 = vcmask 195752
        %4013 = vst.msk [vmem:[#allocation3] sm:$0xff] %vm4012, %v3821
        %4014 = vst.msk [vmem:[#allocation3 + $0x8] sm:$0xff] %vm4012, %v3823
        %4015 = vst.msk [vmem:[#allocation3 + $0x10] sm:$0xff] %vm4012, %v3825
        %4016 = vst.msk [vmem:[#allocation3 + $0x18] sm:$0xff] %vm4012, %v3827
        %4017 = vst.msk [vmem:[#allocation3 + $0x20] sm:$0xff] %vm4012, %v3829
        %4018 = vst.msk [vmem:[#allocation3 + $0x28] sm:$0xff] %vm4012, %v3831
        %4019 = vst.msk [vmem:[#allocation3 + $0x30] sm:$0xff] %vm4012, %v3833
        %4020 = vst.msk [vmem:[#allocation3 + $0x38] sm:$0xff] %vm4012, %v3835
        %4021 = vst.msk [vmem:[#allocation3 + $0x40] sm:$0xff] %vm4012, %v3837
        %4022 = vst.msk [vmem:[#allocation3 + $0x48] sm:$0xff] %vm4012, %v3839
        %4023 = vst.msk [vmem:[#allocation3 + $0x50] sm:$0xff] %vm4012, %v3841
        %4024 = vst.msk [vmem:[#allocation3 + $0x58] sm:$0xff] %vm4012, %v3843
        %4025 = vst.msk [vmem:[#allocation3 + $0x60] sm:$0xff] %vm4012, %v3845
        %4026 = vst.msk [vmem:[#allocation3 + $0x68] sm:$0xff] %vm4012, %v3847
        %4027 = vst.msk [vmem:[#allocation3 + $0x70] sm:$0xff] %vm4012, %v3849
        %4028 = vst.msk [vmem:[#allocation3 + $0x78] sm:$0xff] %vm4012, %v3851
        %4029 = vst.msk [vmem:[#allocation3 + $0x80] sm:$0xff] %vm4012, %v3853
        %4030 = vst.msk [vmem:[#allocation3 + $0x88] sm:$0xff] %vm4012, %v3855
        %4031 = vst.msk [vmem:[#allocation3 + $0x90] sm:$0xff] %vm4012, %v3857
        %4032 = vst.msk [vmem:[#allocation3 + $0x98] sm:$0xff] %vm4012, %v3859
        %4033 = vst.msk [vmem:[#allocation3 + $0xa0] sm:$0xff] %vm4012, %v3861
        %4034 = vst.msk [vmem:[#allocation3 + $0xa8] sm:$0xff] %vm4012, %v3863
        %4035 = vst.msk [vmem:[#allocation3 + $0xb0] sm:$0xff] %vm4012, %v3865
        %4036 = vst.msk [vmem:[#allocation3 + $0xb8] sm:$0xff] %vm4012, %v3867
        %4037 = vst.msk [vmem:[#allocation3 + $0xc0] sm:$0xff] %vm4012, %v3869
        %4038 = vst.msk [vmem:[#allocation3 + $0xc8] sm:$0xff] %vm4012, %v3871
        %4039 = vst.msk [vmem:[#allocation3 + $0xd0] sm:$0xff] %vm4012, %v3873
        %4040 = vst.msk [vmem:[#allocation3 + $0xd8] sm:$0xff] %vm4012, %v3875
        %4041 = vst.msk [vmem:[#allocation3 + $0xe0] sm:$0xff] %vm4012, %v3877
        %4042 = vst.msk [vmem:[#allocation3 + $0xe8] sm:$0xff] %vm4012, %v3879
        %4043 = vst.msk [vmem:[#allocation3 + $0xf0] sm:$0xff] %vm4012, %v3881
        %4044 = vst.msk [vmem:[#allocation3 + $0xf8] sm:$0xff] %vm4012, %v3883
        %4045 = vst.msk [vmem:[#allocation3 + $0x100] sm:$0xff] %vm4012, %v3885
        %4046 = vst.msk [vmem:[#allocation3 + $0x108] sm:$0xff] %vm4012, %v3887
        %4047 = vst.msk [vmem:[#allocation3 + $0x110] sm:$0xff] %vm4012, %v3889
        %4048 = vst.msk [vmem:[#allocation3 + $0x118] sm:$0xff] %vm4012, %v3891
        %4049 = vst.msk [vmem:[#allocation3 + $0x120] sm:$0xff] %vm4012, %v3893
        %4050 = vst.msk [vmem:[#allocation3 + $0x128] sm:$0xff] %vm4012, %v3895
        %4051 = vst.msk [vmem:[#allocation3 + $0x130] sm:$0xff] %vm4012, %v3897
        %4052 = vst.msk [vmem:[#allocation3 + $0x138] sm:$0xff] %vm4012, %v3899
        %4053 = vst.msk [vmem:[#allocation3 + $0x140] sm:$0xff] %vm4012, %v3901
        %4054 = vst.msk [vmem:[#allocation3 + $0x148] sm:$0xff] %vm4012, %v3903
        %4055 = vst.msk [vmem:[#allocation3 + $0x150] sm:$0xff] %vm4012, %v3905
        %4056 = vst.msk [vmem:[#allocation3 + $0x158] sm:$0xff] %vm4012, %v3907
        %4057 = vst.msk [vmem:[#allocation3 + $0x160] sm:$0xff] %vm4012, %v3909
        %4058 = vst.msk [vmem:[#allocation3 + $0x168] sm:$0xff] %vm4012, %v3911
        %4059 = vst.msk [vmem:[#allocation3 + $0x170] sm:$0xff] %vm4012, %v3913
        %4060 = vst.msk [vmem:[#allocation3 + $0x178] sm:$0xff] %vm4012, %v3915
        %4061 = vst.msk [vmem:[#allocation3 + $0x180] sm:$0xff] %vm4012, %v3917
        %4062 = vst.msk [vmem:[#allocation3 + $0x188] sm:$0xff] %vm4012, %v3919
        %4063 = vst.msk [vmem:[#allocation3 + $0x190] sm:$0xff] %vm4012, %v3921
        %4064 = vst.msk [vmem:[#allocation3 + $0x198] sm:$0xff] %vm4012, %v3923
        %4065 = vst.msk [vmem:[#allocation3 + $0x1a0] sm:$0xff] %vm4012, %v3925
        %4066 = vst.msk [vmem:[#allocation3 + $0x1a8] sm:$0xff] %vm4012, %v3927
        %4067 = vst.msk [vmem:[#allocation3 + $0x1b0] sm:$0xff] %vm4012, %v3929
        %4068 = vst.msk [vmem:[#allocation3 + $0x1b8] sm:$0xff] %vm4012, %v3931
        %4069 = vst.msk [vmem:[#allocation3 + $0x1c0] sm:$0xff] %vm4012, %v3933
        %4070 = vst.msk [vmem:[#allocation3 + $0x1c8] sm:$0xff] %vm4012, %v3935
        %4071 = vst.msk [vmem:[#allocation3 + $0x1d0] sm:$0xff] %vm4012, %v3937
        %4072 = vst.msk [vmem:[#allocation3 + $0x1d8] sm:$0xff] %vm4012, %v3939
        %4073 = vst.msk [vmem:[#allocation3 + $0x1e0] sm:$0xff] %vm4012, %v3941
        %4074 = vst.msk [vmem:[#allocation3 + $0x1e8] sm:$0xff] %vm4012, %v3943
        %4075 = vst.msk [vmem:[#allocation3 + $0x1f0] sm:$0xff] %vm4012, %v3945
        %4076 = vst.msk [vmem:[#allocation3 + $0x1f8] sm:$0xff] %vm4012, %v3947
        %v4077 = vrot.slane %v764, 2
        %v4078 = vrot.slane %v765, 2
        %v4079 = vsel %vm1859, %v4077, %v4078
        %v4080 = vrot.slane %v766, 2
        %v4081 = vsel %vm1859, %v4078, %v4080
        %v4082 = vrot.slane %v767, 2
        %v4083 = vsel %vm1859, %v4080, %v4082
        %v4084 = vrot.slane %v768, 2
        %v4085 = vsel %vm1859, %v4082, %v4084
        %v4090 = vpack.c.bf16 %v4081, %v4079
        %v4091 = vpack.c.bf16 %v4085, %v4083
        %4094 = vrot.lane.b32.xlu0 %v2280, 24
        %v4095 = vpop.permute.xlu0 %4094
        %4096 = vrot.lane.b32.xlu0 %v2281, 24
        %v4097 = vpop.permute.xlu0 %4096
        %4098 = vrot.lane.b32.xlu0 %v2282, 24
        %v4099 = vpop.permute.xlu0 %4098
        %4100 = vrot.lane.b32.xlu0 %v2283, 24
        %v4101 = vpop.permute.xlu0 %4100
        %4102 = vrot.lane.b32.xlu0 %v2284, 24
        %v4103 = vpop.permute.xlu0 %4102
        %4104 = vrot.lane.b32.xlu0 %v2285, 24
        %v4105 = vpop.permute.xlu0 %4104
        %4106 = vrot.lane.b32.xlu0 %v2286, 24
        %v4107 = vpop.permute.xlu0 %4106
        %4108 = vrot.lane.b32.xlu0 %v2287, 24
        %v4109 = vpop.permute.xlu0 %4108
        %4110 = vrot.lane.b32.xlu0 %v2288, 24
        %v4111 = vpop.permute.xlu0 %4110
        %4112 = vrot.lane.b32.xlu0 %v2289, 24
        %v4113 = vpop.permute.xlu0 %4112
        %4114 = vrot.lane.b32.xlu0 %v2290, 24
        %v4115 = vpop.permute.xlu0 %4114
        %4116 = vrot.lane.b32.xlu0 %v2291, 24
        %v4117 = vpop.permute.xlu0 %4116
        %4118 = vrot.lane.b32.xlu0 %v2292, 24
        %v4119 = vpop.permute.xlu0 %4118
        %4120 = vrot.lane.b32.xlu0 %v2293, 24
        %v4121 = vpop.permute.xlu0 %4120
        %4122 = vrot.lane.b32.xlu0 %v2294, 24
        %v4123 = vpop.permute.xlu0 %4122
        %4124 = vrot.lane.b32.xlu0 %v2295, 24
        %v4125 = vpop.permute.xlu0 %4124
        %4126 = vrot.lane.b32.xlu0 %v2296, 24
        %v4127 = vpop.permute.xlu0 %4126
        %4128 = vrot.lane.b32.xlu0 %v2297, 24
        %v4129 = vpop.permute.xlu0 %4128
        %4130 = vrot.lane.b32.xlu0 %v2298, 24
        %v4131 = vpop.permute.xlu0 %4130
        %4132 = vrot.lane.b32.xlu0 %v2299, 24
        %v4133 = vpop.permute.xlu0 %4132
        %4134 = vrot.lane.b32.xlu0 %v2300, 24
        %v4135 = vpop.permute.xlu0 %4134
        %4136 = vrot.lane.b32.xlu0 %v2301, 24
        %v4137 = vpop.permute.xlu0 %4136
        %4138 = vrot.lane.b32.xlu0 %v2302, 24
        %v4139 = vpop.permute.xlu0 %4138
        %4140 = vrot.lane.b32.xlu0 %v2303, 24
        %v4141 = vpop.permute.xlu0 %4140
        %4142 = vrot.lane.b32.xlu0 %v2304, 24
        %v4143 = vpop.permute.xlu0 %4142
        %4144 = vrot.lane.b32.xlu0 %v2305, 24
        %v4145 = vpop.permute.xlu0 %4144
        %4146 = vrot.lane.b32.xlu0 %v2306, 24
        %v4147 = vpop.permute.xlu0 %4146
        %4148 = vrot.lane.b32.xlu0 %v2307, 24
        %v4149 = vpop.permute.xlu0 %4148
        %4150 = vrot.lane.b32.xlu0 %v2308, 24
        %v4151 = vpop.permute.xlu0 %4150
        %4152 = vrot.lane.b32.xlu0 %v2309, 24
        %v4153 = vpop.permute.xlu0 %4152
        %4154 = vrot.lane.b32.xlu0 %v2310, 24
        %v4155 = vpop.permute.xlu0 %4154
        %4156 = vrot.lane.b32.xlu0 %v2311, 24
        %v4157 = vpop.permute.xlu0 %4156
        %4158 = vrot.lane.b32.xlu0 %v2312, 24
        %v4159 = vpop.permute.xlu0 %4158
        %4160 = vrot.lane.b32.xlu0 %v2313, 24
        %v4161 = vpop.permute.xlu0 %4160
        %4162 = vrot.lane.b32.xlu0 %v2314, 24
        %v4163 = vpop.permute.xlu0 %4162
        %4164 = vrot.lane.b32.xlu0 %v2315, 24
        %v4165 = vpop.permute.xlu0 %4164
        %4166 = vrot.lane.b32.xlu0 %v2316, 24
        %v4167 = vpop.permute.xlu0 %4166
        %4168 = vrot.lane.b32.xlu0 %v2317, 24
        %v4169 = vpop.permute.xlu0 %4168
        %4170 = vrot.lane.b32.xlu0 %v2318, 24
        %v4171 = vpop.permute.xlu0 %4170
        %4172 = vrot.lane.b32.xlu0 %v2319, 24
        %v4173 = vpop.permute.xlu0 %4172
        %4174 = vrot.lane.b32.xlu0 %v2320, 24
        %v4175 = vpop.permute.xlu0 %4174
        %4176 = vrot.lane.b32.xlu0 %v2321, 24
        %v4177 = vpop.permute.xlu0 %4176
        %4178 = vrot.lane.b32.xlu0 %v2322, 24
        %v4179 = vpop.permute.xlu0 %4178
        %4180 = vrot.lane.b32.xlu0 %v2323, 24
        %v4181 = vpop.permute.xlu0 %4180
        %4182 = vrot.lane.b32.xlu0 %v2324, 24
        %v4183 = vpop.permute.xlu0 %4182
        %4184 = vrot.lane.b32.xlu0 %v2325, 24
        %v4185 = vpop.permute.xlu0 %4184
        %4186 = vrot.lane.b32.xlu0 %v2326, 24
        %v4187 = vpop.permute.xlu0 %4186
        %4188 = vrot.lane.b32.xlu0 %v2327, 24
        %v4189 = vpop.permute.xlu0 %4188
        %4190 = vrot.lane.b32.xlu0 %v2328, 24
        %v4191 = vpop.permute.xlu0 %4190
        %4192 = vrot.lane.b32.xlu0 %v2329, 24
        %v4193 = vpop.permute.xlu0 %4192
        %4194 = vrot.lane.b32.xlu0 %v2330, 24
        %v4195 = vpop.permute.xlu0 %4194
        %4196 = vrot.lane.b32.xlu0 %v2331, 24
        %v4197 = vpop.permute.xlu0 %4196
        %4198 = vrot.lane.b32.xlu0 %v2332, 24
        %v4199 = vpop.permute.xlu0 %4198
        %4200 = vrot.lane.b32.xlu0 %v2333, 24
        %v4201 = vpop.permute.xlu0 %4200
        %4202 = vrot.lane.b32.xlu0 %v2334, 24
        %v4203 = vpop.permute.xlu0 %4202
        %4204 = vrot.lane.b32.xlu0 %v2335, 24
        %v4205 = vpop.permute.xlu0 %4204
        %4206 = vrot.lane.b32.xlu0 %v2336, 24
        %v4207 = vpop.permute.xlu0 %4206
        %4208 = vrot.lane.b32.xlu0 %v2337, 24
        %v4209 = vpop.permute.xlu0 %4208
        %4210 = vrot.lane.b32.xlu0 %v2338, 24
        %v4211 = vpop.permute.xlu0 %4210
        %4212 = vrot.lane.b32.xlu0 %v2339, 24
        %v4213 = vpop.permute.xlu0 %4212
        %4214 = vrot.lane.b32.xlu0 %v3276, 24
        %v4215 = vpop.permute.xlu0 %4214
        %4216 = vrot.lane.b32.xlu0 %v3277, 24
        %v4217 = vpop.permute.xlu0 %4216
        %4218 = vrot.lane.b32.xlu0 %v4090, 24
        %v4219 = vpop.permute.xlu0 %4218
        %4220 = vrot.lane.b32.xlu0 %v4091, 24
        %v4221 = vpop.permute.xlu0 %4220
        %vm4286 = vcmask 220352
        %4287 = vst.msk [vmem:[#allocation3] sm:$0xff] %vm4286, %v4095
        %4288 = vst.msk [vmem:[#allocation3 + $0x8] sm:$0xff] %vm4286, %v4097
        %4289 = vst.msk [vmem:[#allocation3 + $0x10] sm:$0xff] %vm4286, %v4099
        %4290 = vst.msk [vmem:[#allocation3 + $0x18] sm:$0xff] %vm4286, %v4101
        %4291 = vst.msk [vmem:[#allocation3 + $0x20] sm:$0xff] %vm4286, %v4103
        %4292 = vst.msk [vmem:[#allocation3 + $0x28] sm:$0xff] %vm4286, %v4105
        %4293 = vst.msk [vmem:[#allocation3 + $0x30] sm:$0xff] %vm4286, %v4107
        %4294 = vst.msk [vmem:[#allocation3 + $0x38] sm:$0xff] %vm4286, %v4109
        %4295 = vst.msk [vmem:[#allocation3 + $0x40] sm:$0xff] %vm4286, %v4111
        %4296 = vst.msk [vmem:[#allocation3 + $0x48] sm:$0xff] %vm4286, %v4113
        %4297 = vst.msk [vmem:[#allocation3 + $0x50] sm:$0xff] %vm4286, %v4115
        %4298 = vst.msk [vmem:[#allocation3 + $0x58] sm:$0xff] %vm4286, %v4117
        %4299 = vst.msk [vmem:[#allocation3 + $0x60] sm:$0xff] %vm4286, %v4119
        %4300 = vst.msk [vmem:[#allocation3 + $0x68] sm:$0xff] %vm4286, %v4121
        %4301 = vst.msk [vmem:[#allocation3 + $0x70] sm:$0xff] %vm4286, %v4123
        %4302 = vst.msk [vmem:[#allocation3 + $0x78] sm:$0xff] %vm4286, %v4125
        %4303 = vst.msk [vmem:[#allocation3 + $0x80] sm:$0xff] %vm4286, %v4127
        %4304 = vst.msk [vmem:[#allocation3 + $0x88] sm:$0xff] %vm4286, %v4129
        %4305 = vst.msk [vmem:[#allocation3 + $0x90] sm:$0xff] %vm4286, %v4131
        %4306 = vst.msk [vmem:[#allocation3 + $0x98] sm:$0xff] %vm4286, %v4133
        %4307 = vst.msk [vmem:[#allocation3 + $0xa0] sm:$0xff] %vm4286, %v4135
        %4308 = vst.msk [vmem:[#allocation3 + $0xa8] sm:$0xff] %vm4286, %v4137
        %4309 = vst.msk [vmem:[#allocation3 + $0xb0] sm:$0xff] %vm4286, %v4139
        %4310 = vst.msk [vmem:[#allocation3 + $0xb8] sm:$0xff] %vm4286, %v4141
        %4311 = vst.msk [vmem:[#allocation3 + $0xc0] sm:$0xff] %vm4286, %v4143
        %4312 = vst.msk [vmem:[#allocation3 + $0xc8] sm:$0xff] %vm4286, %v4145
        %4313 = vst.msk [vmem:[#allocation3 + $0xd0] sm:$0xff] %vm4286, %v4147
        %4314 = vst.msk [vmem:[#allocation3 + $0xd8] sm:$0xff] %vm4286, %v4149
        %4315 = vst.msk [vmem:[#allocation3 + $0xe0] sm:$0xff] %vm4286, %v4151
        %4316 = vst.msk [vmem:[#allocation3 + $0xe8] sm:$0xff] %vm4286, %v4153
        %4317 = vst.msk [vmem:[#allocation3 + $0xf0] sm:$0xff] %vm4286, %v4155
        %4318 = vst.msk [vmem:[#allocation3 + $0xf8] sm:$0xff] %vm4286, %v4157
        %4319 = vst.msk [vmem:[#allocation3 + $0x100] sm:$0xff] %vm4286, %v4159
        %4320 = vst.msk [vmem:[#allocation3 + $0x108] sm:$0xff] %vm4286, %v4161
        %4321 = vst.msk [vmem:[#allocation3 + $0x110] sm:$0xff] %vm4286, %v4163
        %4322 = vst.msk [vmem:[#allocation3 + $0x118] sm:$0xff] %vm4286, %v4165
        %4323 = vst.msk [vmem:[#allocation3 + $0x120] sm:$0xff] %vm4286, %v4167
        %4324 = vst.msk [vmem:[#allocation3 + $0x128] sm:$0xff] %vm4286, %v4169
        %4325 = vst.msk [vmem:[#allocation3 + $0x130] sm:$0xff] %vm4286, %v4171
        %4326 = vst.msk [vmem:[#allocation3 + $0x138] sm:$0xff] %vm4286, %v4173
        %4327 = vst.msk [vmem:[#allocation3 + $0x140] sm:$0xff] %vm4286, %v4175
        %4328 = vst.msk [vmem:[#allocation3 + $0x148] sm:$0xff] %vm4286, %v4177
        %4329 = vst.msk [vmem:[#allocation3 + $0x150] sm:$0xff] %vm4286, %v4179
        %4330 = vst.msk [vmem:[#allocation3 + $0x158] sm:$0xff] %vm4286, %v4181
        %4331 = vst.msk [vmem:[#allocation3 + $0x160] sm:$0xff] %vm4286, %v4183
        %4332 = vst.msk [vmem:[#allocation3 + $0x168] sm:$0xff] %vm4286, %v4185
        %4333 = vst.msk [vmem:[#allocation3 + $0x170] sm:$0xff] %vm4286, %v4187
        %4334 = vst.msk [vmem:[#allocation3 + $0x178] sm:$0xff] %vm4286, %v4189
        %4335 = vst.msk [vmem:[#allocation3 + $0x180] sm:$0xff] %vm4286, %v4191
        %4336 = vst.msk [vmem:[#allocation3 + $0x188] sm:$0xff] %vm4286, %v4193
        %4337 = vst.msk [vmem:[#allocation3 + $0x190] sm:$0xff] %vm4286, %v4195
        %4338 = vst.msk [vmem:[#allocation3 + $0x198] sm:$0xff] %vm4286, %v4197
        %4339 = vst.msk [vmem:[#allocation3 + $0x1a0] sm:$0xff] %vm4286, %v4199
        %4340 = vst.msk [vmem:[#allocation3 + $0x1a8] sm:$0xff] %vm4286, %v4201
        %4341 = vst.msk [vmem:[#allocation3 + $0x1b0] sm:$0xff] %vm4286, %v4203
        %4342 = vst.msk [vmem:[#allocation3 + $0x1b8] sm:$0xff] %vm4286, %v4205
        %4343 = vst.msk [vmem:[#allocation3 + $0x1c0] sm:$0xff] %vm4286, %v4207
        %4344 = vst.msk [vmem:[#allocation3 + $0x1c8] sm:$0xff] %vm4286, %v4209
        %4345 = vst.msk [vmem:[#allocation3 + $0x1d0] sm:$0xff] %vm4286, %v4211
        %4346 = vst.msk [vmem:[#allocation3 + $0x1d8] sm:$0xff] %vm4286, %v4213
        %4347 = vst.msk [vmem:[#allocation3 + $0x1e0] sm:$0xff] %vm4286, %v4215
        %4348 = vst.msk [vmem:[#allocation3 + $0x1e8] sm:$0xff] %vm4286, %v4217
        %4349 = vst.msk [vmem:[#allocation3 + $0x1f0] sm:$0xff] %vm4286, %v4219
        %4350 = vst.msk [vmem:[#allocation3 + $0x1f8] sm:$0xff] %vm4286, %v4221
        %v4351 = vld [vmem:[#allocation3] sm:$0xff]
        %v4352 = vld [vmem:[#allocation3 + $0x8] sm:$0xff]
        %v4353 = vld [vmem:[#allocation3 + $0x10] sm:$0xff]
        %v4354 = vld [vmem:[#allocation3 + $0x18] sm:$0xff]
        %v4355 = vld [vmem:[#allocation3 + $0x20] sm:$0xff]
        %v4356 = vld [vmem:[#allocation3 + $0x28] sm:$0xff]
        %v4357 = vld [vmem:[#allocation3 + $0x30] sm:$0xff]
        %v4358 = vld [vmem:[#allocation3 + $0x38] sm:$0xff]
        %v4359 = vld [vmem:[#allocation3 + $0x40] sm:$0xff]
        %v4360 = vld [vmem:[#allocation3 + $0x48] sm:$0xff]
        %v4361 = vld [vmem:[#allocation3 + $0x50] sm:$0xff]
        %v4362 = vld [vmem:[#allocation3 + $0x58] sm:$0xff]
        %v4363 = vld [vmem:[#allocation3 + $0x60] sm:$0xff]
        %v4364 = vld [vmem:[#allocation3 + $0x68] sm:$0xff]
        %v4365 = vld [vmem:[#allocation3 + $0x70] sm:$0xff]
        %v4366 = vld [vmem:[#allocation3 + $0x78] sm:$0xff]
        %v4367 = vld [vmem:[#allocation3 + $0x80] sm:$0xff]
        %v4368 = vld [vmem:[#allocation3 + $0x88] sm:$0xff]
        %v4369 = vld [vmem:[#allocation3 + $0x90] sm:$0xff]
        %v4370 = vld [vmem:[#allocation3 + $0x98] sm:$0xff]
        %v4371 = vld [vmem:[#allocation3 + $0xa0] sm:$0xff]
        %v4372 = vld [vmem:[#allocation3 + $0xa8] sm:$0xff]
        %v4373 = vld [vmem:[#allocation3 + $0xb0] sm:$0xff]
        %v4374 = vld [vmem:[#allocation3 + $0xb8] sm:$0xff]
        %v4375 = vld [vmem:[#allocation3 + $0xc0] sm:$0xff]
        %v4376 = vld [vmem:[#allocation3 + $0xc8] sm:$0xff]
        %v4377 = vld [vmem:[#allocation3 + $0xd0] sm:$0xff]
        %v4378 = vld [vmem:[#allocation3 + $0xd8] sm:$0xff]
        %v4379 = vld [vmem:[#allocation3 + $0xe0] sm:$0xff]
        %v4380 = vld [vmem:[#allocation3 + $0xe8] sm:$0xff]
        %v4381 = vld [vmem:[#allocation3 + $0xf0] sm:$0xff]
        %v4382 = vld [vmem:[#allocation3 + $0xf8] sm:$0xff]
        %v4383 = vld [vmem:[#allocation3 + $0x100] sm:$0xff]
        %v4384 = vld [vmem:[#allocation3 + $0x108] sm:$0xff]
        %v4385 = vld [vmem:[#allocation3 + $0x110] sm:$0xff]
        %v4386 = vld [vmem:[#allocation3 + $0x118] sm:$0xff]
        %v4387 = vld [vmem:[#allocation3 + $0x120] sm:$0xff]
        %v4388 = vld [vmem:[#allocation3 + $0x128] sm:$0xff]
        %v4389 = vld [vmem:[#allocation3 + $0x130] sm:$0xff]
        %v4390 = vld [vmem:[#allocation3 + $0x138] sm:$0xff]
        %v4391 = vld [vmem:[#allocation3 + $0x140] sm:$0xff]
        %v4392 = vld [vmem:[#allocation3 + $0x148] sm:$0xff]
        %v4393 = vld [vmem:[#allocation3 + $0x150] sm:$0xff]
        %v4394 = vld [vmem:[#allocation3 + $0x158] sm:$0xff]
        %v4395 = vld [vmem:[#allocation3 + $0x160] sm:$0xff]
        %v4396 = vld [vmem:[#allocation3 + $0x168] sm:$0xff]
        %v4397 = vld [vmem:[#allocation3 + $0x170] sm:$0xff]
        %v4398 = vld [vmem:[#allocation3 + $0x178] sm:$0xff]
        %v4399 = vld [vmem:[#allocation3 + $0x180] sm:$0xff]
        %v4400 = vld [vmem:[#allocation3 + $0x188] sm:$0xff]
        %v4401 = vld [vmem:[#allocation3 + $0x190] sm:$0xff]
        %v4402 = vld [vmem:[#allocation3 + $0x198] sm:$0xff]
        %v4403 = vld [vmem:[#allocation3 + $0x1a0] sm:$0xff]
        %v4404 = vld [vmem:[#allocation3 + $0x1a8] sm:$0xff]
        %v4405 = vld [vmem:[#allocation3 + $0x1b0] sm:$0xff]
        %v4406 = vld [vmem:[#allocation3 + $0x1b8] sm:$0xff]
        %v4407 = vld [vmem:[#allocation3 + $0x1c0] sm:$0xff]
        %v4408 = vld [vmem:[#allocation3 + $0x1c8] sm:$0xff]
        %v4409 = vld [vmem:[#allocation3 + $0x1d0] sm:$0xff]
        %v4410 = vld [vmem:[#allocation3 + $0x1d8] sm:$0xff]
        %v4411 = vld [vmem:[#allocation3 + $0x1e0] sm:$0xff]
        %v4412 = vld [vmem:[#allocation3 + $0x1e8] sm:$0xff]
        %v4413 = vld [vmem:[#allocation3 + $0x1f0] sm:$0xff]
        %v4414 = vld [vmem:[#allocation3 + $0x1f8] sm:$0xff]
        %v4415 = vld [vmem:[%s1] sm:$0xf]
        %v4416 = vld [vmem:[%s1 + $0x4] sm:$0xf]
        %v4417 = vld [vmem:[%s1 + $0x8] sm:$0xf]
        %v4418 = vld [vmem:[%s1 + $0xc] sm:$0x3]
        %v4419 = vld [vmem:[%s2] sm:$0x1]
        %v4421 = vlaneseq
        %v4422 = vshrl.u32 %v4421, 7
        %v4423 = vsub.s32 0, %v4422
        %v4424 = vrot.slane %v4419, %v4423
        %v4430 = vunpack.c.l.b16 %v4415
        %v4431 = vunpack.c.l.b16 %v4416
        %v4432 = vunpack.c.l.b16 %v4417
        %v4433 = vunpack.c.l.b16 %v4418
        %v4434 = vpack.c.b16 %v4431, %v4430
        %v4435 = vpack.c.b16 %v4433, %v4432
        %vm4437 = vcmask 220160
        %v4439 = vsel %vm4437, %v4351, 0
        %v4442 = vsel %vm4437, %v4352, 0
        %v4445 = vsel %vm4437, %v4353, 0
        %v4448 = vsel %vm4437, %v4354, 0
        %v4451 = vsel %vm4437, %v4355, 0
        %v4454 = vsel %vm4437, %v4356, 0
        %v4457 = vsel %vm4437, %v4357, 0
        %v4460 = vsel %vm4437, %v4358, 0
        %v4463 = vsel %vm4437, %v4359, 0
        %v4466 = vsel %vm4437, %v4360, 0
        %v4469 = vsel %vm4437, %v4361, 0
        %v4472 = vsel %vm4437, %v4362, 0
        %v4475 = vsel %vm4437, %v4363, 0
        %v4478 = vsel %vm4437, %v4364, 0
        %v4481 = vsel %vm4437, %v4365, 0
        %v4484 = vsel %vm4437, %v4366, 0
        %v4487 = vsel %vm4437, %v4367, 0
        %v4490 = vsel %vm4437, %v4368, 0
        %v4493 = vsel %vm4437, %v4369, 0
        %v4496 = vsel %vm4437, %v4370, 0
        %v4499 = vsel %vm4437, %v4371, 0
        %v4502 = vsel %vm4437, %v4372, 0
        %v4505 = vsel %vm4437, %v4373, 0
        %v4508 = vsel %vm4437, %v4374, 0
        %v4511 = vsel %vm4437, %v4375, 0
        %v4514 = vsel %vm4437, %v4376, 0
        %v4517 = vsel %vm4437, %v4377, 0
        %v4520 = vsel %vm4437, %v4378, 0
        %v4523 = vsel %vm4437, %v4379, 0
        %v4526 = vsel %vm4437, %v4380, 0
        %v4529 = vsel %vm4437, %v4381, 0
        %v4532 = vsel %vm4437, %v4382, 0
        %v4535 = vsel %vm4437, %v4383, 0
        %v4538 = vsel %vm4437, %v4384, 0
        %v4541 = vsel %vm4437, %v4385, 0
        %v4544 = vsel %vm4437, %v4386, 0
        %v4547 = vsel %vm4437, %v4387, 0
        %v4550 = vsel %vm4437, %v4388, 0
        %v4553 = vsel %vm4437, %v4389, 0
        %v4556 = vsel %vm4437, %v4390, 0
        %v4559 = vsel %vm4437, %v4391, 0
        %v4562 = vsel %vm4437, %v4392, 0
        %v4565 = vsel %vm4437, %v4393, 0
        %v4568 = vsel %vm4437, %v4394, 0
        %v4571 = vsel %vm4437, %v4395, 0
        %v4574 = vsel %vm4437, %v4396, 0
        %v4577 = vsel %vm4437, %v4397, 0
        %v4580 = vsel %vm4437, %v4398, 0
        %v4583 = vsel %vm4437, %v4399, 0
        %v4586 = vsel %vm4437, %v4400, 0
        %v4589 = vsel %vm4437, %v4401, 0
        %v4592 = vsel %vm4437, %v4402, 0
        %v4595 = vsel %vm4437, %v4403, 0
        %v4598 = vsel %vm4437, %v4404, 0
        %v4601 = vsel %vm4437, %v4405, 0
        %v4604 = vsel %vm4437, %v4406, 0
        %v4607 = vsel %vm4437, %v4407, 0
        %v4610 = vsel %vm4437, %v4408, 0
        %v4613 = vsel %vm4437, %v4409, 0
        %v4616 = vsel %vm4437, %v4410, 0
        %v4619 = vsel %vm4437, %v4411, 0
        %v4622 = vsel %vm4437, %v4412, 0
        %v4625 = vsel %vm4437, %v4413, 0
        %v4628 = vsel %vm4437, %v4414, 0
        %vm4630 = vcmask 1044480
        %v4631 = vsel %vm4630, 4294967295, 65535
        %v4632 = vsel %vm1859, %v4631, 0
        %v4634 = vand.u32 %v4435, %v4632
        %4636 = vmatprep.subr.bf16.mxu0 0
        %4637 = vmatpush1.bf16.msra.mxu0 %v4434
        %4638 = vmatprep.subr.bf16.mxu0 0
        %4639 = vmatpush1.bf16.msra.mxu0 %v4634
        %4640 = vmatprep.subr.bf16.mxu0 0
        %4641 = vmatpush1.bf16.msra.mxu0 0
        %4642 = vmatprep.subr.bf16.mxu0 0
        %4643 = vmatpush1.bf16.msra.mxu0 0
        %4644 = vmatprep.subr.bf16.mxu0 0
        %4645 = vmatpush1.bf16.msra.mxu0 0
        %4646 = vmatprep.subr.bf16.mxu0 0
        %4647 = vmatpush1.bf16.msra.mxu0 0
        %4648 = vmatprep.subr.bf16.mxu0 0
        %4649 = vmatpush1.bf16.msra.mxu0 0
        %4650 = vmatprep.subr.bf16.mxu0 0
        %4651 = vmatpush1.bf16.msra.mxu0 0
        %4652 = vmatprep.subr.bf16.mxu0 0
        %4653 = vmatpush1.bf16.msra.mxu0 0
        %4654 = vmatprep.subr.bf16.mxu0 0
        %4655 = vmatpush1.bf16.msra.mxu0 0
        %4656 = vmatprep.subr.bf16.mxu0 0
        %4657 = vmatpush1.bf16.msra.mxu0 0
        %4658 = vmatprep.subr.bf16.mxu0 0
        %4659 = vmatpush1.bf16.msra.mxu0 0
        %4660 = vmatprep.subr.bf16.mxu0 0
        %4661 = vmatpush1.bf16.msra.mxu0 0
        %4662 = vmatprep.subr.bf16.mxu0 0
        %4663 = vmatpush1.bf16.msra.mxu0 0
        %4664 = vmatprep.subr.bf16.mxu0 0
        %4665 = vmatpush1.bf16.msra.mxu0 0
        %4666 = vmatprep.subr.bf16.mxu0 0
        %4667 = vmatpush1.bf16.msra.mxu0 0
        %4668 = vmatprep.mubr.bf16.mxu0 0
        %4669 = vmatmul.mubr.bf16.gmra.mrb[0].mxu0 %v4439
        %v4670 = vpop.f32.mrb[0].mxu0
        %v4671 = vadd.f32 %v4424, %v4670
        %v4672 = vpop.f32.mrb[0].mxu0
        %v4673 = vpop.f32.mrb[0].mxu0
        %v4674 = vadd.f32 %v4424, %v4673
        %v4675 = vpop.f32.mrb[0].mxu0
        %4676 = vmatprep.mubr.bf16.mxu0 0
        %4677 = vmatmul.mubr.bf16.gmra.mrb[0].mxu0 %v4442
        %v4678 = vpop.f32.mrb[0].mxu0
        %v4679 = vadd.f32 %v4424, %v4678
        %v4680 = vpop.f32.mrb[0].mxu0
        %v4681 = vpop.f32.mrb[0].mxu0
        %v4682 = vadd.f32 %v4424, %v4681
        %v4683 = vpop.f32.mrb[0].mxu0
        %4684 = vmatprep.mubr.bf16.mxu0 0
        %4685 = vmatmul.mubr.bf16.gmra.mrb[0].mxu0 %v4445
        %v4686 = vpop.f32.mrb[0].mxu0
        %v4687 = vadd.f32 %v4424, %v4686
        %v4688 = vpop.f32.mrb[0].mxu0
        %v4689 = vpop.f32.mrb[0].mxu0
        %v4690 = vadd.f32 %v4424, %v4689
        %v4691 = vpop.f32.mrb[0].mxu0
        %4692 = vmatprep.mubr.bf16.mxu0 0
        %4693 = vmatmul.mubr.bf16.gmra.mrb[0].mxu0 %v4448
        %v4694 = vpop.f32.mrb[0].mxu0
        %v4695 = vadd.f32 %v4424, %v4694
        %v4696 = vpop.f32.mrb[0].mxu0
        %v4697 = vpop.f32.mrb[0].mxu0
        %v4698 = vadd.f32 %v4424, %v4697
        %v4699 = vpop.f32.mrb[0].mxu0
        %4700 = vmatprep.mubr.bf16.mxu0 0
        %4701 = vmatmul.mubr.bf16.gmra.mrb[0].mxu0 %v4451
        %v4702 = vpop.f32.mrb[0].mxu0
        %v4703 = vadd.f32 %v4424, %v4702
        %v4704 = vpop.f32.mrb[0].mxu0
        %v4705 = vpop.f32.mrb[0].mxu0
        %v4706 = vadd.f32 %v4424, %v4705
        %v4707 = vpop.f32.mrb[0].mxu0
        %4708 = vmatprep.mubr.bf16.mxu0 0
        %4709 = vmatmul.mubr.bf16.gmra.mrb[0].mxu0 %v4454
        %v4710 = vpop.f32.mrb[0].mxu0
        %v4711 = vadd.f32 %v4424, %v4710
        %v4712 = vpop.f32.mrb[0].mxu0
        %v4713 = vpop.f32.mrb[0].mxu0
        %v4714 = vadd.f32 %v4424, %v4713
        %v4715 = vpop.f32.mrb[0].mxu0
        %4716 = vmatprep.mubr.bf16.mxu0 0
        %4717 = vmatmul.mubr.bf16.gmra.mrb[0].mxu0 %v4457
        %v4718 = vpop.f32.mrb[0].mxu0
        %v4719 = vadd.f32 %v4424, %v4718
        %v4720 = vpop.f32.mrb[0].mxu0
        %v4721 = vpop.f32.mrb[0].mxu0
        %v4722 = vadd.f32 %v4424, %v4721
        %v4723 = vpop.f32.mrb[0].mxu0
        %4724 = vmatprep.mubr.bf16.mxu0 0
        %4725 = vmatmul.mubr.bf16.gmra.mrb[0].mxu0 %v4460
        %v4726 = vpop.f32.mrb[0].mxu0
        %v4727 = vadd.f32 %v4424, %v4726
        %v4728 = vpop.f32.mrb[0].mxu0
        %v4729 = vpop.f32.mrb[0].mxu0
        %v4730 = vadd.f32 %v4424, %v4729
        %v4731 = vpop.f32.mrb[0].mxu0
        %4732 = vmatprep.mubr.bf16.mxu0 0
        %4733 = vmatmul.mubr.bf16.gmra.mrb[0].mxu0 %v4463
        %v4734 = vpop.f32.mrb[0].mxu0
        %v4735 = vadd.f32 %v4424, %v4734
        %v4736 = vpop.f32.mrb[0].mxu0
        %v4737 = vpop.f32.mrb[0].mxu0
        %v4738 = vadd.f32 %v4424, %v4737
        %v4739 = vpop.f32.mrb[0].mxu0
        %4740 = vmatprep.mubr.bf16.mxu0 0
        %4741 = vmatmul.mubr.bf16.gmra.mrb[0].mxu0 %v4466
        %v4742 = vpop.f32.mrb[0].mxu0
        %v4743 = vadd.f32 %v4424, %v4742
        %v4744 = vpop.f32.mrb[0].mxu0
        %v4745 = vpop.f32.mrb[0].mxu0
        %v4746 = vadd.f32 %v4424, %v4745
        %v4747 = vpop.f32.mrb[0].mxu0
        %4748 = vmatprep.mubr.bf16.mxu0 0
        %4749 = vmatmul.mubr.bf16.gmra.mrb[0].mxu0 %v4469
        %v4750 = vpop.f32.mrb[0].mxu0
        %v4751 = vadd.f32 %v4424, %v4750
        %v4752 = vpop.f32.mrb[0].mxu0
        %v4753 = vpop.f32.mrb[0].mxu0
        %v4754 = vadd.f32 %v4424, %v4753
        %v4755 = vpop.f32.mrb[0].mxu0
        %4756 = vmatprep.mubr.bf16.mxu0 0
        %4757 = vmatmul.mubr.bf16.gmra.mrb[0].mxu0 %v4472
        %v4758 = vpop.f32.mrb[0].mxu0
        %v4759 = vadd.f32 %v4424, %v4758
        %v4760 = vpop.f32.mrb[0].mxu0
        %v4761 = vpop.f32.mrb[0].mxu0
        %v4762 = vadd.f32 %v4424, %v4761
        %v4763 = vpop.f32.mrb[0].mxu0
        %4764 = vmatprep.mubr.bf16.mxu0 0
        %4765 = vmatmul.mubr.bf16.gmra.mrb[0].mxu0 %v4475
        %v4766 = vpop.f32.mrb[0].mxu0
        %v4767 = vadd.f32 %v4424, %v4766
        %v4768 = vpop.f32.mrb[0].mxu0
        %v4769 = vpop.f32.mrb[0].mxu0
        %v4770 = vadd.f32 %v4424, %v4769
        %v4771 = vpop.f32.mrb[0].mxu0
        %4772 = vmatprep.mubr.bf16.mxu0 0
        %4773 = vmatmul.mubr.bf16.gmra.mrb[0].mxu0 %v4478
        %v4774 = vpop.f32.mrb[0].mxu0
        %v4775 = vadd.f32 %v4424, %v4774
        %v4776 = vpop.f32.mrb[0].mxu0
        %v4777 = vpop.f32.mrb[0].mxu0
        %v4778 = vadd.f32 %v4424, %v4777
        %v4779 = vpop.f32.mrb[0].mxu0
        %4780 = vmatprep.mubr.bf16.mxu0 0
        %4781 = vmatmul.mubr.bf16.gmra.mrb[0].mxu0 %v4481
        %v4782 = vpop.f32.mrb[0].mxu0
        %v4783 = vadd.f32 %v4424, %v4782
        %v4784 = vpop.f32.mrb[0].mxu0
        %v4785 = vpop.f32.mrb[0].mxu0
        %v4786 = vadd.f32 %v4424, %v4785
        %v4787 = vpop.f32.mrb[0].mxu0
        %4788 = vmatprep.mubr.bf16.mxu0 0
        %4789 = vmatmul.mubr.bf16.gmra.mrb[0].mxu0 %v4484
        %v4790 = vpop.f32.mrb[0].mxu0
        %v4791 = vadd.f32 %v4424, %v4790
        %v4792 = vpop.f32.mrb[0].mxu0
        %v4793 = vpop.f32.mrb[0].mxu0
        %v4794 = vadd.f32 %v4424, %v4793
        %v4795 = vpop.f32.mrb[0].mxu0
        %4796 = vmatprep.mubr.bf16.mxu0 0
        %4797 = vmatmul.mubr.bf16.gmra.mrb[0].mxu0 %v4487
        %v4798 = vpop.f32.mrb[0].mxu0
        %v4799 = vadd.f32 %v4424, %v4798
        %v4800 = vpop.f32.mrb[0].mxu0
        %v4801 = vpop.f32.mrb[0].mxu0
        %v4802 = vadd.f32 %v4424, %v4801
        %v4803 = vpop.f32.mrb[0].mxu0
        %4804 = vmatprep.mubr.bf16.mxu0 0
        %4805 = vmatmul.mubr.bf16.gmra.mrb[0].mxu0 %v4490
        %v4806 = vpop.f32.mrb[0].mxu0
        %v4807 = vadd.f32 %v4424, %v4806
        %v4808 = vpop.f32.mrb[0].mxu0
        %v4809 = vpop.f32.mrb[0].mxu0
        %v4810 = vadd.f32 %v4424, %v4809
        %v4811 = vpop.f32.mrb[0].mxu0
        %4812 = vmatprep.mubr.bf16.mxu0 0
        %4813 = vmatmul.mubr.bf16.gmra.mrb[0].mxu0 %v4493
        %v4814 = vpop.f32.mrb[0].mxu0
        %v4815 = vadd.f32 %v4424, %v4814
        %v4816 = vpop.f32.mrb[0].mxu0
        %v4817 = vpop.f32.mrb[0].mxu0
        %v4818 = vadd.f32 %v4424, %v4817
        %v4819 = vpop.f32.mrb[0].mxu0
        %4820 = vmatprep.mubr.bf16.mxu0 0
        %4821 = vmatmul.mubr.bf16.gmra.mrb[0].mxu0 %v4496
        %v4822 = vpop.f32.mrb[0].mxu0
        %v4823 = vadd.f32 %v4424, %v4822
        %v4824 = vpop.f32.mrb[0].mxu0
        %v4825 = vpop.f32.mrb[0].mxu0
        %v4826 = vadd.f32 %v4424, %v4825
        %v4827 = vpop.f32.mrb[0].mxu0
        %4828 = vmatprep.mubr.bf16.mxu0 0
        %4829 = vmatmul.mubr.bf16.gmra.mrb[0].mxu0 %v4499
        %v4830 = vpop.f32.mrb[0].mxu0
        %v4831 = vadd.f32 %v4424, %v4830
        %v4832 = vpop.f32.mrb[0].mxu0
        %v4833 = vpop.f32.mrb[0].mxu0
        %v4834 = vadd.f32 %v4424, %v4833
        %v4835 = vpop.f32.mrb[0].mxu0
        %4836 = vmatprep.mubr.bf16.mxu0 0
        %4837 = vmatmul.mubr.bf16.gmra.mrb[0].mxu0 %v4502
        %v4838 = vpop.f32.mrb[0].mxu0
        %v4839 = vadd.f32 %v4424, %v4838
        %v4840 = vpop.f32.mrb[0].mxu0
        %v4841 = vpop.f32.mrb[0].mxu0
        %v4842 = vadd.f32 %v4424, %v4841
        %v4843 = vpop.f32.mrb[0].mxu0
        %4844 = vmatprep.mubr.bf16.mxu0 0
        %4845 = vmatmul.mubr.bf16.gmra.mrb[0].mxu0 %v4505
        %v4846 = vpop.f32.mrb[0].mxu0
        %v4847 = vadd.f32 %v4424, %v4846
        %v4848 = vpop.f32.mrb[0].mxu0
        %v4849 = vpop.f32.mrb[0].mxu0
        %v4850 = vadd.f32 %v4424, %v4849
        %v4851 = vpop.f32.mrb[0].mxu0
        %4852 = vmatprep.mubr.bf16.mxu0 0
        %4853 = vmatmul.mubr.bf16.gmra.mrb[0].mxu0 %v4508
        %v4854 = vpop.f32.mrb[0].mxu0
        %v4855 = vadd.f32 %v4424, %v4854
        %v4856 = vpop.f32.mrb[0].mxu0
        %v4857 = vpop.f32.mrb[0].mxu0
        %v4858 = vadd.f32 %v4424, %v4857
        %v4859 = vpop.f32.mrb[0].mxu0
        %4860 = vmatprep.mubr.bf16.mxu0 0
        %4861 = vmatmul.mubr.bf16.gmra.mrb[0].mxu0 %v4511
        %v4862 = vpop.f32.mrb[0].mxu0
        %v4863 = vadd.f32 %v4424, %v4862
        %v4864 = vpop.f32.mrb[0].mxu0
        %v4865 = vpop.f32.mrb[0].mxu0
        %v4866 = vadd.f32 %v4424, %v4865
        %v4867 = vpop.f32.mrb[0].mxu0
        %4868 = vmatprep.mubr.bf16.mxu0 0
        %4869 = vmatmul.mubr.bf16.gmra.mrb[0].mxu0 %v4514
        %v4870 = vpop.f32.mrb[0].mxu0
        %v4871 = vadd.f32 %v4424, %v4870
        %v4872 = vpop.f32.mrb[0].mxu0
        %v4873 = vpop.f32.mrb[0].mxu0
        %v4874 = vadd.f32 %v4424, %v4873
        %v4875 = vpop.f32.mrb[0].mxu0
        %4876 = vmatprep.mubr.bf16.mxu0 0
        %4877 = vmatmul.mubr.bf16.gmra.mrb[0].mxu0 %v4517
        %v4878 = vpop.f32.mrb[0].mxu0
        %v4879 = vadd.f32 %v4424, %v4878
        %v4880 = vpop.f32.mrb[0].mxu0
        %v4881 = vpop.f32.mrb[0].mxu0
        %v4882 = vadd.f32 %v4424, %v4881
        %v4883 = vpop.f32.mrb[0].mxu0
        %4884 = vmatprep.mubr.bf16.mxu0 0
        %4885 = vmatmul.mubr.bf16.gmra.mrb[0].mxu0 %v4520
        %v4886 = vpop.f32.mrb[0].mxu0
        %v4887 = vadd.f32 %v4424, %v4886
        %v4888 = vpop.f32.mrb[0].mxu0
        %v4889 = vpop.f32.mrb[0].mxu0
        %v4890 = vadd.f32 %v4424, %v4889
        %v4891 = vpop.f32.mrb[0].mxu0
        %4892 = vmatprep.mubr.bf16.mxu0 0
        %4893 = vmatmul.mubr.bf16.gmra.mrb[0].mxu0 %v4523
        %v4894 = vpop.f32.mrb[0].mxu0
        %v4895 = vadd.f32 %v4424, %v4894
        %v4896 = vpop.f32.mrb[0].mxu0
        %v4897 = vpop.f32.mrb[0].mxu0
        %v4898 = vadd.f32 %v4424, %v4897
        %v4899 = vpop.f32.mrb[0].mxu0
        %4900 = vmatprep.mubr.bf16.mxu0 0
        %4901 = vmatmul.mubr.bf16.gmra.mrb[0].mxu0 %v4526
        %v4902 = vpop.f32.mrb[0].mxu0
        %v4903 = vadd.f32 %v4424, %v4902
        %v4904 = vpop.f32.mrb[0].mxu0
        %v4905 = vpop.f32.mrb[0].mxu0
        %v4906 = vadd.f32 %v4424, %v4905
        %v4907 = vpop.f32.mrb[0].mxu0
        %4908 = vmatprep.mubr.bf16.mxu0 0
        %4909 = vmatmul.mubr.bf16.gmra.mrb[0].mxu0 %v4529
        %v4910 = vpop.f32.mrb[0].mxu0
        %v4911 = vadd.f32 %v4424, %v4910
        %v4912 = vpop.f32.mrb[0].mxu0
        %v4913 = vpop.f32.mrb[0].mxu0
        %v4914 = vadd.f32 %v4424, %v4913
        %v4915 = vpop.f32.mrb[0].mxu0
        %4916 = vmatprep.mubr.bf16.mxu0 0
        %4917 = vmatmul.mubr.bf16.gmra.mrb[0].mxu0 %v4532
        %v4918 = vpop.f32.mrb[0].mxu0
        %v4919 = vadd.f32 %v4424, %v4918
        %v4920 = vpop.f32.mrb[0].mxu0
        %v4921 = vpop.f32.mrb[0].mxu0
        %v4922 = vadd.f32 %v4424, %v4921
        %v4923 = vpop.f32.mrb[0].mxu0
        %4924 = vmatprep.mubr.bf16.mxu0 0
        %4925 = vmatmul.mubr.bf16.gmra.mrb[0].mxu0 %v4535
        %v4926 = vpop.f32.mrb[0].mxu0
        %v4927 = vadd.f32 %v4424, %v4926
        %v4928 = vpop.f32.mrb[0].mxu0
        %v4929 = vpop.f32.mrb[0].mxu0
        %v4930 = vadd.f32 %v4424, %v4929
        %v4931 = vpop.f32.mrb[0].mxu0
        %4932 = vmatprep.mubr.bf16.mxu0 0
        %4933 = vmatmul.mubr.bf16.gmra.mrb[0].mxu0 %v4538
        %v4934 = vpop.f32.mrb[0].mxu0
        %v4935 = vadd.f32 %v4424, %v4934
        %v4936 = vpop.f32.mrb[0].mxu0
        %v4937 = vpop.f32.mrb[0].mxu0
        %v4938 = vadd.f32 %v4424, %v4937
        %v4939 = vpop.f32.mrb[0].mxu0
        %4940 = vmatprep.mubr.bf16.mxu0 0
        %4941 = vmatmul.mubr.bf16.gmra.mrb[0].mxu0 %v4541
        %v4942 = vpop.f32.mrb[0].mxu0
        %v4943 = vadd.f32 %v4424, %v4942
        %v4944 = vpop.f32.mrb[0].mxu0
        %v4945 = vpop.f32.mrb[0].mxu0
        %v4946 = vadd.f32 %v4424, %v4945
        %v4947 = vpop.f32.mrb[0].mxu0
        %4948 = vmatprep.mubr.bf16.mxu0 0
        %4949 = vmatmul.mubr.bf16.gmra.mrb[0].mxu0 %v4544
        %v4950 = vpop.f32.mrb[0].mxu0
        %v4951 = vadd.f32 %v4424, %v4950
        %v4952 = vpop.f32.mrb[0].mxu0
        %v4953 = vpop.f32.mrb[0].mxu0
        %v4954 = vadd.f32 %v4424, %v4953
        %v4955 = vpop.f32.mrb[0].mxu0
        %4956 = vmatprep.mubr.bf16.mxu0 0
        %4957 = vmatmul.mubr.bf16.gmra.mrb[0].mxu0 %v4547
        %v4958 = vpop.f32.mrb[0].mxu0
        %v4959 = vadd.f32 %v4424, %v4958
        %v4960 = vpop.f32.mrb[0].mxu0
        %v4961 = vpop.f32.mrb[0].mxu0
        %v4962 = vadd.f32 %v4424, %v4961
        %v4963 = vpop.f32.mrb[0].mxu0
        %4964 = vmatprep.mubr.bf16.mxu0 0
        %4965 = vmatmul.mubr.bf16.gmra.mrb[0].mxu0 %v4550
        %v4966 = vpop.f32.mrb[0].mxu0
        %v4967 = vadd.f32 %v4424, %v4966
        %v4968 = vpop.f32.mrb[0].mxu0
        %v4969 = vpop.f32.mrb[0].mxu0
        %v4970 = vadd.f32 %v4424, %v4969
        %v4971 = vpop.f32.mrb[0].mxu0
        %4972 = vmatprep.mubr.bf16.mxu0 0
        %4973 = vmatmul.mubr.bf16.gmra.mrb[0].mxu0 %v4553
        %v4974 = vpop.f32.mrb[0].mxu0
        %v4975 = vadd.f32 %v4424, %v4974
        %v4976 = vpop.f32.mrb[0].mxu0
        %v4977 = vpop.f32.mrb[0].mxu0
        %v4978 = vadd.f32 %v4424, %v4977
        %v4979 = vpop.f32.mrb[0].mxu0
        %4980 = vmatprep.mubr.bf16.mxu0 0
        %4981 = vmatmul.mubr.bf16.gmra.mrb[0].mxu0 %v4556
        %v4982 = vpop.f32.mrb[0].mxu0
        %v4983 = vadd.f32 %v4424, %v4982
        %v4984 = vpop.f32.mrb[0].mxu0
        %v4985 = vpop.f32.mrb[0].mxu0
        %v4986 = vadd.f32 %v4424, %v4985
        %v4987 = vpop.f32.mrb[0].mxu0
        %4988 = vmatprep.mubr.bf16.mxu0 0
        %4989 = vmatmul.mubr.bf16.gmra.mrb[0].mxu0 %v4559
        %v4990 = vpop.f32.mrb[0].mxu0
        %v4991 = vadd.f32 %v4424, %v4990
        %v4992 = vpop.f32.mrb[0].mxu0
        %v4993 = vpop.f32.mrb[0].mxu0
        %v4994 = vadd.f32 %v4424, %v4993
        %v4995 = vpop.f32.mrb[0].mxu0
        %4996 = vmatprep.mubr.bf16.mxu0 0
        %4997 = vmatmul.mubr.bf16.gmra.mrb[0].mxu0 %v4562
        %v4998 = vpop.f32.mrb[0].mxu0
        %v4999 = vadd.f32 %v4424, %v4998
        %v5000 = vpop.f32.mrb[0].mxu0
        %v5001 = vpop.f32.mrb[0].mxu0
        %v5002 = vadd.f32 %v4424, %v5001
        %v5003 = vpop.f32.mrb[0].mxu0
        %5004 = vmatprep.mubr.bf16.mxu0 0
        %5005 = vmatmul.mubr.bf16.gmra.mrb[0].mxu0 %v4565
        %v5006 = vpop.f32.mrb[0].mxu0
        %v5007 = vadd.f32 %v4424, %v5006
        %v5008 = vpop.f32.mrb[0].mxu0
        %v5009 = vpop.f32.mrb[0].mxu0
        %v5010 = vadd.f32 %v4424, %v5009
        %v5011 = vpop.f32.mrb[0].mxu0
        %5012 = vmatprep.mubr.bf16.mxu0 0
        %5013 = vmatmul.mubr.bf16.gmra.mrb[0].mxu0 %v4568
        %v5014 = vpop.f32.mrb[0].mxu0
        %v5015 = vadd.f32 %v4424, %v5014
        %v5016 = vpop.f32.mrb[0].mxu0
        %v5017 = vpop.f32.mrb[0].mxu0
        %v5018 = vadd.f32 %v4424, %v5017
        %v5019 = vpop.f32.mrb[0].mxu0
        %5020 = vmatprep.mubr.bf16.mxu0 0
        %5021 = vmatmul.mubr.bf16.gmra.mrb[0].mxu0 %v4571
        %v5022 = vpop.f32.mrb[0].mxu0
        %v5023 = vadd.f32 %v4424, %v5022
        %v5024 = vpop.f32.mrb[0].mxu0
        %v5025 = vpop.f32.mrb[0].mxu0
        %v5026 = vadd.f32 %v4424, %v5025
        %v5027 = vpop.f32.mrb[0].mxu0
        %5028 = vmatprep.mubr.bf16.mxu0 0
        %5029 = vmatmul.mubr.bf16.gmra.mrb[0].mxu0 %v4574
        %v5030 = vpop.f32.mrb[0].mxu0
        %v5031 = vadd.f32 %v4424, %v5030
        %v5032 = vpop.f32.mrb[0].mxu0
        %v5033 = vpop.f32.mrb[0].mxu0
        %v5034 = vadd.f32 %v4424, %v5033
        %v5035 = vpop.f32.mrb[0].mxu0
        %5036 = vmatprep.mubr.bf16.mxu0 0
        %5037 = vmatmul.mubr.bf16.gmra.mrb[0].mxu0 %v4577
        %v5038 = vpop.f32.mrb[0].mxu0
        %v5039 = vadd.f32 %v4424, %v5038
        %v5040 = vpop.f32.mrb[0].mxu0
        %v5041 = vpop.f32.mrb[0].mxu0
        %v5042 = vadd.f32 %v4424, %v5041
        %v5043 = vpop.f32.mrb[0].mxu0
        %5044 = vmatprep.mubr.bf16.mxu0 0
        %5045 = vmatmul.mubr.bf16.gmra.mrb[0].mxu0 %v4580
        %v5046 = vpop.f32.mrb[0].mxu0
        %v5047 = vadd.f32 %v4424, %v5046
        %v5048 = vpop.f32.mrb[0].mxu0
        %v5049 = vpop.f32.mrb[0].mxu0
        %v5050 = vadd.f32 %v4424, %v5049
        %v5051 = vpop.f32.mrb[0].mxu0
        %5052 = vmatprep.mubr.bf16.mxu0 0
        %5053 = vmatmul.mubr.bf16.gmra.mrb[0].mxu0 %v4583
        %v5054 = vpop.f32.mrb[0].mxu0
        %v5055 = vadd.f32 %v4424, %v5054
        %v5056 = vpop.f32.mrb[0].mxu0
        %v5057 = vpop.f32.mrb[0].mxu0
        %v5058 = vadd.f32 %v4424, %v5057
        %v5059 = vpop.f32.mrb[0].mxu0
        %5060 = vmatprep.mubr.bf16.mxu0 0
        %5061 = vmatmul.mubr.bf16.gmra.mrb[0].mxu0 %v4586
        %v5062 = vpop.f32.mrb[0].mxu0
        %v5063 = vadd.f32 %v4424, %v5062
        %v5064 = vpop.f32.mrb[0].mxu0
        %v5065 = vpop.f32.mrb[0].mxu0
        %v5066 = vadd.f32 %v4424, %v5065
        %v5067 = vpop.f32.mrb[0].mxu0
        %5068 = vmatprep.mubr.bf16.mxu0 0
        %5069 = vmatmul.mubr.bf16.gmra.mrb[0].mxu0 %v4589
        %v5070 = vpop.f32.mrb[0].mxu0
        %v5071 = vadd.f32 %v4424, %v5070
        %v5072 = vpop.f32.mrb[0].mxu0
        %v5073 = vpop.f32.mrb[0].mxu0
        %v5074 = vadd.f32 %v4424, %v5073
        %v5075 = vpop.f32.mrb[0].mxu0
        %5076 = vmatprep.mubr.bf16.mxu0 0
        %5077 = vmatmul.mubr.bf16.gmra.mrb[0].mxu0 %v4592
        %v5078 = vpop.f32.mrb[0].mxu0
        %v5079 = vadd.f32 %v4424, %v5078
        %v5080 = vpop.f32.mrb[0].mxu0
        %v5081 = vpop.f32.mrb[0].mxu0
        %v5082 = vadd.f32 %v4424, %v5081
        %v5083 = vpop.f32.mrb[0].mxu0
        %5084 = vmatprep.mubr.bf16.mxu0 0
        %5085 = vmatmul.mubr.bf16.gmra.mrb[0].mxu0 %v4595
        %v5086 = vpop.f32.mrb[0].mxu0
        %v5087 = vadd.f32 %v4424, %v5086
        %v5088 = vpop.f32.mrb[0].mxu0
        %v5089 = vpop.f32.mrb[0].mxu0
        %v5090 = vadd.f32 %v4424, %v5089
        %v5091 = vpop.f32.mrb[0].mxu0
        %5092 = vmatprep.mubr.bf16.mxu0 0
        %5093 = vmatmul.mubr.bf16.gmra.mrb[0].mxu0 %v4598
        %v5094 = vpop.f32.mrb[0].mxu0
        %v5095 = vadd.f32 %v4424, %v5094
        %v5096 = vpop.f32.mrb[0].mxu0
        %v5097 = vpop.f32.mrb[0].mxu0
        %v5098 = vadd.f32 %v4424, %v5097
        %v5099 = vpop.f32.mrb[0].mxu0
        %5100 = vmatprep.mubr.bf16.mxu0 0
        %5101 = vmatmul.mubr.bf16.gmra.mrb[0].mxu0 %v4601
        %v5102 = vpop.f32.mrb[0].mxu0
        %v5103 = vadd.f32 %v4424, %v5102
        %v5104 = vpop.f32.mrb[0].mxu0
        %v5105 = vpop.f32.mrb[0].mxu0
        %v5106 = vadd.f32 %v4424, %v5105
        %v5107 = vpop.f32.mrb[0].mxu0
        %5108 = vmatprep.mubr.bf16.mxu0 0
        %5109 = vmatmul.mubr.bf16.gmra.mrb[0].mxu0 %v4604
        %v5110 = vpop.f32.mrb[0].mxu0
        %v5111 = vadd.f32 %v4424, %v5110
        %v5112 = vpop.f32.mrb[0].mxu0
        %v5113 = vpop.f32.mrb[0].mxu0
        %v5114 = vadd.f32 %v4424, %v5113
        %v5115 = vpop.f32.mrb[0].mxu0
        %5116 = vmatprep.mubr.bf16.mxu0 0
        %5117 = vmatmul.mubr.bf16.gmra.mrb[0].mxu0 %v4607
        %v5118 = vpop.f32.mrb[0].mxu0
        %v5119 = vadd.f32 %v4424, %v5118
        %v5120 = vpop.f32.mrb[0].mxu0
        %v5121 = vpop.f32.mrb[0].mxu0
        %v5122 = vadd.f32 %v4424, %v5121
        %v5123 = vpop.f32.mrb[0].mxu0
        %5124 = vmatprep.mubr.bf16.mxu0 0
        %5125 = vmatmul.mubr.bf16.gmra.mrb[0].mxu0 %v4610
        %v5126 = vpop.f32.mrb[0].mxu0
        %v5127 = vadd.f32 %v4424, %v5126
        %v5128 = vpop.f32.mrb[0].mxu0
        %v5129 = vpop.f32.mrb[0].mxu0
        %v5130 = vadd.f32 %v4424, %v5129
        %v5131 = vpop.f32.mrb[0].mxu0
        %5132 = vmatprep.mubr.bf16.mxu0 0
        %5133 = vmatmul.mubr.bf16.gmra.mrb[0].mxu0 %v4613
        %v5134 = vpop.f32.mrb[0].mxu0
        %v5135 = vadd.f32 %v4424, %v5134
        %v5136 = vpop.f32.mrb[0].mxu0
        %v5137 = vpop.f32.mrb[0].mxu0
        %v5138 = vadd.f32 %v4424, %v5137
        %v5139 = vpop.f32.mrb[0].mxu0
        %5140 = vmatprep.mubr.bf16.mxu0 0
        %5141 = vmatmul.mubr.bf16.gmra.mrb[0].mxu0 %v4616
        %v5142 = vpop.f32.mrb[0].mxu0
        %v5143 = vadd.f32 %v4424, %v5142
        %v5144 = vpop.f32.mrb[0].mxu0
        %v5145 = vpop.f32.mrb[0].mxu0
        %v5146 = vadd.f32 %v4424, %v5145
        %v5147 = vpop.f32.mrb[0].mxu0
        %5148 = vmatprep.mubr.bf16.mxu0 0
        %5149 = vmatmul.mubr.bf16.gmra.mrb[0].mxu0 %v4619
        %v5150 = vpop.f32.mrb[0].mxu0
        %v5151 = vadd.f32 %v4424, %v5150
        %v5152 = vpop.f32.mrb[0].mxu0
        %v5153 = vpop.f32.mrb[0].mxu0
        %v5154 = vadd.f32 %v4424, %v5153
        %v5155 = vpop.f32.mrb[0].mxu0
        %5156 = vmatprep.mubr.bf16.mxu0 0
        %5157 = vmatmul.mubr.bf16.gmra.mrb[0].mxu0 %v4622
        %v5158 = vpop.f32.mrb[0].mxu0
        %v5159 = vadd.f32 %v4424, %v5158
        %v5160 = vpop.f32.mrb[0].mxu0
        %v5161 = vpop.f32.mrb[0].mxu0
        %v5162 = vadd.f32 %v4424, %v5161
        %v5163 = vpop.f32.mrb[0].mxu0
        %5164 = vmatprep.mubr.bf16.mxu0 0
        %5165 = vmatmul.mubr.bf16.gmra.mrb[0].mxu0 %v4625
        %v5166 = vpop.f32.mrb[0].mxu0
        %v5167 = vadd.f32 %v4424, %v5166
        %v5168 = vpop.f32.mrb[0].mxu0
        %v5169 = vpop.f32.mrb[0].mxu0
        %v5170 = vadd.f32 %v4424, %v5169
        %v5171 = vpop.f32.mrb[0].mxu0
        %5172 = vmatprep.mubr.bf16.mxu0 0
        %5173 = vmatmul.mubr.bf16.gmra.mrb[0].mxu0 %v4628
        %v5174 = vpop.f32.mrb[0].mxu0
        %v5175 = vadd.f32 %v4424, %v5174
        %v5176 = vpop.f32.mrb[0].mxu0
        %v5177 = vpop.f32.mrb[0].mxu0
        %v5178 = vadd.f32 %v4424, %v5177
        %v5179 = vpop.f32.mrb[0].mxu0
        %5180 = vdwg.mxu0
        %v5181 = vmax.f32 %v4671, 0.0
        %v5182 = vmax.f32 %v4674, 0.0
        %v5183 = vmax.f32 %v4679, 0.0
        %v5184 = vmax.f32 %v4682, 0.0
        %v5185 = vmax.f32 %v4687, 0.0
        %v5186 = vmax.f32 %v4690, 0.0
        %v5187 = vmax.f32 %v4695, 0.0
        %v5188 = vmax.f32 %v4698, 0.0
        %v5189 = vmax.f32 %v4703, 0.0
        %v5190 = vmax.f32 %v4706, 0.0
        %v5191 = vmax.f32 %v4711, 0.0
        %v5192 = vmax.f32 %v4714, 0.0
        %v5193 = vmax.f32 %v4719, 0.0
        %v5194 = vmax.f32 %v4722, 0.0
        %v5195 = vmax.f32 %v4727, 0.0
        %v5196 = vmax.f32 %v4730, 0.0
        %v5197 = vmax.f32 %v4735, 0.0
        %v5198 = vmax.f32 %v4738, 0.0
        %v5199 = vmax.f32 %v4743, 0.0
        %v5200 = vmax.f32 %v4746, 0.0
        %v5201 = vmax.f32 %v4751, 0.0
        %v5202 = vmax.f32 %v4754, 0.0
        %v5203 = vmax.f32 %v4759, 0.0
        %v5204 = vmax.f32 %v4762, 0.0
        %v5205 = vmax.f32 %v4767, 0.0
        %v5206 = vmax.f32 %v4770, 0.0
        %v5207 = vmax.f32 %v4775, 0.0
        %v5208 = vmax.f32 %v4778, 0.0
        %v5209 = vmax.f32 %v4783, 0.0
        %v5210 = vmax.f32 %v4786, 0.0
        %v5211 = vmax.f32 %v4791, 0.0
        %v5212 = vmax.f32 %v4794, 0.0
        %v5213 = vmax.f32 %v4799, 0.0
        %v5214 = vmax.f32 %v4802, 0.0
        %v5215 = vmax.f32 %v4807, 0.0
        %v5216 = vmax.f32 %v4810, 0.0
        %v5217 = vmax.f32 %v4815, 0.0
        %v5218 = vmax.f32 %v4818, 0.0
        %v5219 = vmax.f32 %v4823, 0.0
        %v5220 = vmax.f32 %v4826, 0.0
        %v5221 = vmax.f32 %v4831, 0.0
        %v5222 = vmax.f32 %v4834, 0.0
        %v5223 = vmax.f32 %v4839, 0.0
        %v5224 = vmax.f32 %v4842, 0.0
        %v5225 = vmax.f32 %v4847, 0.0
        %v5226 = vmax.f32 %v4850, 0.0
        %v5227 = vmax.f32 %v4855, 0.0
        %v5228 = vmax.f32 %v4858, 0.0
        %v5229 = vmax.f32 %v4863, 0.0
        %v5230 = vmax.f32 %v4866, 0.0
        %v5231 = vmax.f32 %v4871, 0.0
        %v5232 = vmax.f32 %v4874, 0.0
        %v5233 = vmax.f32 %v4879, 0.0
        %v5234 = vmax.f32 %v4882, 0.0
        %v5235 = vmax.f32 %v4887, 0.0
        %v5236 = vmax.f32 %v4890, 0.0
        %v5237 = vmax.f32 %v4895, 0.0
        %v5238 = vmax.f32 %v4898, 0.0
        %v5239 = vmax.f32 %v4903, 0.0
        %v5240 = vmax.f32 %v4906, 0.0
        %v5241 = vmax.f32 %v4911, 0.0
        %v5242 = vmax.f32 %v4914, 0.0
        %v5243 = vmax.f32 %v4919, 0.0
        %v5244 = vmax.f32 %v4922, 0.0
        %v5245 = vmax.f32 %v4927, 0.0
        %v5246 = vmax.f32 %v4930, 0.0
        %v5247 = vmax.f32 %v4935, 0.0
        %v5248 = vmax.f32 %v4938, 0.0
        %v5249 = vmax.f32 %v4943, 0.0
        %v5250 = vmax.f32 %v4946, 0.0
        %v5251 = vmax.f32 %v4951, 0.0
        %v5252 = vmax.f32 %v4954, 0.0
        %v5253 = vmax.f32 %v4959, 0.0
        %v5254 = vmax.f32 %v4962, 0.0
        %v5255 = vmax.f32 %v4967, 0.0
        %v5256 = vmax.f32 %v4970, 0.0
        %v5257 = vmax.f32 %v4975, 0.0
        %v5258 = vmax.f32 %v4978, 0.0
        %v5259 = vmax.f32 %v4983, 0.0
        %v5260 = vmax.f32 %v4986, 0.0
        %v5261 = vmax.f32 %v4991, 0.0
        %v5262 = vmax.f32 %v4994, 0.0
        %v5263 = vmax.f32 %v4999, 0.0
        %v5264 = vmax.f32 %v5002, 0.0
        %v5265 = vmax.f32 %v5007, 0.0
        %v5266 = vmax.f32 %v5010, 0.0
        %v5267 = vmax.f32 %v5015, 0.0
        %v5268 = vmax.f32 %v5018, 0.0
        %v5269 = vmax.f32 %v5023, 0.0
        %v5270 = vmax.f32 %v5026, 0.0
        %v5271 = vmax.f32 %v5031, 0.0
        %v5272 = vmax.f32 %v5034, 0.0
        %v5273 = vmax.f32 %v5039, 0.0
        %v5274 = vmax.f32 %v5042, 0.0
        %v5275 = vmax.f32 %v5047, 0.0
        %v5276 = vmax.f32 %v5050, 0.0
        %v5277 = vmax.f32 %v5055, 0.0
        %v5278 = vmax.f32 %v5058, 0.0
        %v5279 = vmax.f32 %v5063, 0.0
        %v5280 = vmax.f32 %v5066, 0.0
        %v5281 = vmax.f32 %v5071, 0.0
        %v5282 = vmax.f32 %v5074, 0.0
        %v5283 = vmax.f32 %v5079, 0.0
        %v5284 = vmax.f32 %v5082, 0.0
        %v5285 = vmax.f32 %v5087, 0.0
        %v5286 = vmax.f32 %v5090, 0.0
        %v5287 = vmax.f32 %v5095, 0.0
        %v5288 = vmax.f32 %v5098, 0.0
        %v5289 = vmax.f32 %v5103, 0.0
        %v5290 = vmax.f32 %v5106, 0.0
        %v5291 = vmax.f32 %v5111, 0.0
        %v5292 = vmax.f32 %v5114, 0.0
        %v5293 = vmax.f32 %v5119, 0.0
        %v5294 = vmax.f32 %v5122, 0.0
        %v5295 = vmax.f32 %v5127, 0.0
        %v5296 = vmax.f32 %v5130, 0.0
        %v5297 = vmax.f32 %v5135, 0.0
        %v5298 = vmax.f32 %v5138, 0.0
        %v5299 = vmax.f32 %v5143, 0.0
        %v5300 = vmax.f32 %v5146, 0.0
        %v5301 = vmax.f32 %v5151, 0.0
        %v5302 = vmax.f32 %v5154, 0.0
        %v5303 = vmax.f32 %v5159, 0.0
        %v5304 = vmax.f32 %v5162, 0.0
        %v5305 = vmax.f32 %v5167, 0.0
        %v5306 = vmax.f32 %v5170, 0.0
        %v5307 = vmax.f32 %v5175, 0.0
        %v5308 = vmax.f32 %v5178, 0.0
        %vm5309 = vcmask 523264
        %5310 = vst.msk [vmem:[%s163] sm:$0xff] %vm5309, %v5181
        %5311 = vst.msk [vmem:[%s163 + $0x8] sm:$0xff] %vm5309, %v5182
        %5312 = vst.msk [vmem:[%s163 + $0x10] sm:$0xff] %vm5309, %v5183
        %5313 = vst.msk [vmem:[%s163 + $0x18] sm:$0xff] %vm5309, %v5184
        %5314 = vst.msk [vmem:[%s163 + $0x20] sm:$0xff] %vm5309, %v5185
        %5315 = vst.msk [vmem:[%s163 + $0x28] sm:$0xff] %vm5309, %v5186
        %5316 = vst.msk [vmem:[%s163 + $0x30] sm:$0xff] %vm5309, %v5187
        %5317 = vst.msk [vmem:[%s163 + $0x38] sm:$0xff] %vm5309, %v5188
        %5318 = vst.msk [vmem:[%s163 + $0x40] sm:$0xff] %vm5309, %v5189
        %5319 = vst.msk [vmem:[%s163 + $0x48] sm:$0xff] %vm5309, %v5190
        %5320 = vst.msk [vmem:[%s163 + $0x50] sm:$0xff] %vm5309, %v5191
        %5321 = vst.msk [vmem:[%s163 + $0x58] sm:$0xff] %vm5309, %v5192
        %5322 = vst.msk [vmem:[%s163 + $0x60] sm:$0xff] %vm5309, %v5193
        %5323 = vst.msk [vmem:[%s163 + $0x68] sm:$0xff] %vm5309, %v5194
        %5324 = vst.msk [vmem:[%s163 + $0x70] sm:$0xff] %vm5309, %v5195
        %5325 = vst.msk [vmem:[%s163 + $0x78] sm:$0xff] %vm5309, %v5196
        %5326 = vst.msk [vmem:[%s163 + $0x80] sm:$0xff] %vm5309, %v5197
        %5327 = vst.msk [vmem:[%s163 + $0x88] sm:$0xff] %vm5309, %v5198
        %5328 = vst.msk [vmem:[%s163 + $0x90] sm:$0xff] %vm5309, %v5199
        %5329 = vst.msk [vmem:[%s163 + $0x98] sm:$0xff] %vm5309, %v5200
        %5330 = vst.msk [vmem:[%s163 + $0xa0] sm:$0xff] %vm5309, %v5201
        %5331 = vst.msk [vmem:[%s163 + $0xa8] sm:$0xff] %vm5309, %v5202
        %5332 = vst.msk [vmem:[%s163 + $0xb0] sm:$0xff] %vm5309, %v5203
        %5333 = vst.msk [vmem:[%s163 + $0xb8] sm:$0xff] %vm5309, %v5204
        %5334 = vst.msk [vmem:[%s163 + $0xc0] sm:$0xff] %vm5309, %v5205
        %5335 = vst.msk [vmem:[%s163 + $0xc8] sm:$0xff] %vm5309, %v5206
        %5336 = vst.msk [vmem:[%s163 + $0xd0] sm:$0xff] %vm5309, %v5207
        %5337 = vst.msk [vmem:[%s163 + $0xd8] sm:$0xff] %vm5309, %v5208
        %5338 = vst.msk [vmem:[%s163 + $0xe0] sm:$0xff] %vm5309, %v5209
        %5339 = vst.msk [vmem:[%s163 + $0xe8] sm:$0xff] %vm5309, %v5210
        %5340 = vst.msk [vmem:[%s163 + $0xf0] sm:$0xff] %vm5309, %v5211
        %5341 = vst.msk [vmem:[%s163 + $0xf8] sm:$0xff] %vm5309, %v5212
        %5342 = vst.msk [vmem:[%s163 + $0x100] sm:$0xff] %vm5309, %v5213
        %5343 = vst.msk [vmem:[%s163 + $0x108] sm:$0xff] %vm5309, %v5214
        %5344 = vst.msk [vmem:[%s163 + $0x110] sm:$0xff] %vm5309, %v5215
        %5345 = vst.msk [vmem:[%s163 + $0x118] sm:$0xff] %vm5309, %v5216
        %5346 = vst.msk [vmem:[%s163 + $0x120] sm:$0xff] %vm5309, %v5217
        %5347 = vst.msk [vmem:[%s163 + $0x128] sm:$0xff] %vm5309, %v5218
        %5348 = vst.msk [vmem:[%s163 + $0x130] sm:$0xff] %vm5309, %v5219
        %5349 = vst.msk [vmem:[%s163 + $0x138] sm:$0xff] %vm5309, %v5220
        %5350 = vst.msk [vmem:[%s163 + $0x140] sm:$0xff] %vm5309, %v5221
        %5351 = vst.msk [vmem:[%s163 + $0x148] sm:$0xff] %vm5309, %v5222
        %5352 = vst.msk [vmem:[%s163 + $0x150] sm:$0xff] %vm5309, %v5223
        %5353 = vst.msk [vmem:[%s163 + $0x158] sm:$0xff] %vm5309, %v5224
        %5354 = vst.msk [vmem:[%s163 + $0x160] sm:$0xff] %vm5309, %v5225
        %5355 = vst.msk [vmem:[%s163 + $0x168] sm:$0xff] %vm5309, %v5226
        %5356 = vst.msk [vmem:[%s163 + $0x170] sm:$0xff] %vm5309, %v5227
        %5357 = vst.msk [vmem:[%s163 + $0x178] sm:$0xff] %vm5309, %v5228
        %5358 = vst.msk [vmem:[%s163 + $0x180] sm:$0xff] %vm5309, %v5229
        %5359 = vst.msk [vmem:[%s163 + $0x188] sm:$0xff] %vm5309, %v5230
        %5360 = vst.msk [vmem:[%s163 + $0x190] sm:$0xff] %vm5309, %v5231
        %5361 = vst.msk [vmem:[%s163 + $0x198] sm:$0xff] %vm5309, %v5232
        %5362 = vst.msk [vmem:[%s163 + $0x1a0] sm:$0xff] %vm5309, %v5233
        %5363 = vst.msk [vmem:[%s163 + $0x1a8] sm:$0xff] %vm5309, %v5234
        %5364 = vst.msk [vmem:[%s163 + $0x1b0] sm:$0xff] %vm5309, %v5235
        %5365 = vst.msk [vmem:[%s163 + $0x1b8] sm:$0xff] %vm5309, %v5236
        %5366 = vst.msk [vmem:[%s163 + $0x1c0] sm:$0xff] %vm5309, %v5237
        %5367 = vst.msk [vmem:[%s163 + $0x1c8] sm:$0xff] %vm5309, %v5238
        %5368 = vst.msk [vmem:[%s163 + $0x1d0] sm:$0xff] %vm5309, %v5239
        %5369 = vst.msk [vmem:[%s163 + $0x1d8] sm:$0xff] %vm5309, %v5240
        %5370 = vst.msk [vmem:[%s163 + $0x1e0] sm:$0xff] %vm5309, %v5241
        %5371 = vst.msk [vmem:[%s163 + $0x1e8] sm:$0xff] %vm5309, %v5242
        %5372 = vst.msk [vmem:[%s163 + $0x1f0] sm:$0xff] %vm5309, %v5243
        %5373 = vst.msk [vmem:[%s163 + $0x1f8] sm:$0xff] %vm5309, %v5244
        %5374 = vst.msk [vmem:[%s163 + $0x200] sm:$0xff] %vm5309, %v5245
        %5375 = vst.msk [vmem:[%s163 + $0x208] sm:$0xff] %vm5309, %v5246
        %5376 = vst.msk [vmem:[%s163 + $0x210] sm:$0xff] %vm5309, %v5247
        %5377 = vst.msk [vmem:[%s163 + $0x218] sm:$0xff] %vm5309, %v5248
        %5378 = vst.msk [vmem:[%s163 + $0x220] sm:$0xff] %vm5309, %v5249
        %5379 = vst.msk [vmem:[%s163 + $0x228] sm:$0xff] %vm5309, %v5250
        %5380 = vst.msk [vmem:[%s163 + $0x230] sm:$0xff] %vm5309, %v5251
        %5381 = vst.msk [vmem:[%s163 + $0x238] sm:$0xff] %vm5309, %v5252
        %5382 = vst.msk [vmem:[%s163 + $0x240] sm:$0xff] %vm5309, %v5253
        %5383 = vst.msk [vmem:[%s163 + $0x248] sm:$0xff] %vm5309, %v5254
        %5384 = vst.msk [vmem:[%s163 + $0x250] sm:$0xff] %vm5309, %v5255
        %5385 = vst.msk [vmem:[%s163 + $0x258] sm:$0xff] %vm5309, %v5256
        %5386 = vst.msk [vmem:[%s163 + $0x260] sm:$0xff] %vm5309, %v5257
        %5387 = vst.msk [vmem:[%s163 + $0x268] sm:$0xff] %vm5309, %v5258
        %5388 = vst.msk [vmem:[%s163 + $0x270] sm:$0xff] %vm5309, %v5259
        %5389 = vst.msk [vmem:[%s163 + $0x278] sm:$0xff] %vm5309, %v5260
        %5390 = vst.msk [vmem:[%s163 + $0x280] sm:$0xff] %vm5309, %v5261
        %5391 = vst.msk [vmem:[%s163 + $0x288] sm:$0xff] %vm5309, %v5262
        %5392 = vst.msk [vmem:[%s163 + $0x290] sm:$0xff] %vm5309, %v5263
        %5393 = vst.msk [vmem:[%s163 + $0x298] sm:$0xff] %vm5309, %v5264
        %5394 = vst.msk [vmem:[%s163 + $0x2a0] sm:$0xff] %vm5309, %v5265
        %5395 = vst.msk [vmem:[%s163 + $0x2a8] sm:$0xff] %vm5309, %v5266
        %5396 = vst.msk [vmem:[%s163 + $0x2b0] sm:$0xff] %vm5309, %v5267
        %5397 = vst.msk [vmem:[%s163 + $0x2b8] sm:$0xff] %vm5309, %v5268
        %5398 = vst.msk [vmem:[%s163 + $0x2c0] sm:$0xff] %vm5309, %v5269
        %5399 = vst.msk [vmem:[%s163 + $0x2c8] sm:$0xff] %vm5309, %v5270
        %5400 = vst.msk [vmem:[%s163 + $0x2d0] sm:$0xff] %vm5309, %v5271
        %5401 = vst.msk [vmem:[%s163 + $0x2d8] sm:$0xff] %vm5309, %v5272
        %5402 = vst.msk [vmem:[%s163 + $0x2e0] sm:$0xff] %vm5309, %v5273
        %5403 = vst.msk [vmem:[%s163 + $0x2e8] sm:$0xff] %vm5309, %v5274
        %5404 = vst.msk [vmem:[%s163 + $0x2f0] sm:$0xff] %vm5309, %v5275
        %5405 = vst.msk [vmem:[%s163 + $0x2f8] sm:$0xff] %vm5309, %v5276
        %5406 = vst.msk [vmem:[%s163 + $0x300] sm:$0xff] %vm5309, %v5277
        %5407 = vst.msk [vmem:[%s163 + $0x308] sm:$0xff] %vm5309, %v5278
        %5408 = vst.msk [vmem:[%s163 + $0x310] sm:$0xff] %vm5309, %v5279
        %5409 = vst.msk [vmem:[%s163 + $0x318] sm:$0xff] %vm5309, %v5280
        %5410 = vst.msk [vmem:[%s163 + $0x320] sm:$0xff] %vm5309, %v5281
        %5411 = vst.msk [vmem:[%s163 + $0x328] sm:$0xff] %vm5309, %v5282
        %5412 = vst.msk [vmem:[%s163 + $0x330] sm:$0xff] %vm5309, %v5283
        %5413 = vst.msk [vmem:[%s163 + $0x338] sm:$0xff] %vm5309, %v5284
        %5414 = vst.msk [vmem:[%s163 + $0x340] sm:$0xff] %vm5309, %v5285
        %5415 = vst.msk [vmem:[%s163 + $0x348] sm:$0xff] %vm5309, %v5286
        %5416 = vst.msk [vmem:[%s163 + $0x350] sm:$0xff] %vm5309, %v5287
        %5417 = vst.msk [vmem:[%s163 + $0x358] sm:$0xff] %vm5309, %v5288
        %5418 = vst.msk [vmem:[%s163 + $0x360] sm:$0xff] %vm5309, %v5289
        %5419 = vst.msk [vmem:[%s163 + $0x368] sm:$0xff] %vm5309, %v5290
        %5420 = vst.msk [vmem:[%s163 + $0x370] sm:$0xff] %vm5309, %v5291
        %5421 = vst.msk [vmem:[%s163 + $0x378] sm:$0xff] %vm5309, %v5292
        %5422 = vst.msk [vmem:[%s163 + $0x380] sm:$0xff] %vm5309, %v5293
        %5423 = vst.msk [vmem:[%s163 + $0x388] sm:$0xff] %vm5309, %v5294
        %5424 = vst.msk [vmem:[%s163 + $0x390] sm:$0xff] %vm5309, %v5295
        %5425 = vst.msk [vmem:[%s163 + $0x398] sm:$0xff] %vm5309, %v5296
        %5426 = vst.msk [vmem:[%s163 + $0x3a0] sm:$0xff] %vm5309, %v5297
        %5427 = vst.msk [vmem:[%s163 + $0x3a8] sm:$0xff] %vm5309, %v5298
        %5428 = vst.msk [vmem:[%s163 + $0x3b0] sm:$0xff] %vm5309, %v5299
        %5429 = vst.msk [vmem:[%s163 + $0x3b8] sm:$0xff] %vm5309, %v5300
        %5430 = vst.msk [vmem:[%s163 + $0x3c0] sm:$0xff] %vm5309, %v5301
        %5431 = vst.msk [vmem:[%s163 + $0x3c8] sm:$0xff] %vm5309, %v5302
        %5432 = vst.msk [vmem:[%s163 + $0x3d0] sm:$0xff] %vm5309, %v5303
        %5433 = vst.msk [vmem:[%s163 + $0x3d8] sm:$0xff] %vm5309, %v5304
        %5434 = vst.msk [vmem:[%s163 + $0x3e0] sm:$0xff] %vm5309, %v5305
        %5435 = vst.msk [vmem:[%s163 + $0x3e8] sm:$0xff] %vm5309, %v5306
        %5436 = vst.msk [vmem:[%s163 + $0x3f0] sm:$0xff] %vm5309, %v5307
        %5437 = vst.msk [vmem:[%s163 + $0x3f8] sm:$0xff] %vm5309, %v5308
        %s5438 = sand.u32 %s93, 1
        %s5439 = scalar_lea.sflag [#allocation5], %s5438
        %s5440 = sand.u32 %s93, 1
        %s5441 = smul.addr %s5440, 1024
        %s5442 = scalar_lea.vmem [#allocation4], %s5441
        // Predicated region
        $region33: #{tpu_custom_call.1} parent=31 // pred_check
          %p5443 = pneg %p103
        $region34: #{tpu_custom_call.1} parent=31 // pred_check_branch
          %5445 = sbr.rel (%p5443) target = $region36
        $region35: #{tpu_custom_call.1} parent=31 // pred_region
          %s5447 = ssub.s32 16384, 16384
          %5448 = vsyncadd %s5439, %s5447
          %s5449 = smul.addr %s17, 128
          %s5450 = smul.addr %s5449, 128
          %s5451 = scalar_lea.hbm %s3, %s5450
          %s5452 = sshll.u32 %s5442, 4
          %s5453 = int_to_ptr.vmem [resolvable:$true] %s5452
          %5458 = dma.vmem_to_hbm [thread:$0]  %s5453, 16384, %s5451, %s5439, 128, 128, 8
        $region36: #{tpu_custom_call.1} parent=31 // pred_fallthru
          _
      $region32: #{tpu_custom_call.1} parent=5 // pred_fallthru
        _
      %p5459 = scmp.le.s32.totalorder 2, %s12
      // Predicated region
      $region37: #{tpu_custom_call.1} parent=5 // pred_check
        %p5460 = pneg %p5459
      $region38: #{tpu_custom_call.1} parent=5 // pred_check_branch
        %5462 = sbr.rel (%p5460) target = $region40
      $region39: #{tpu_custom_call.1} parent=5 // pred_region
        %s5463 = ssub.s32 %s12, 2
        // Predicated region
        $region41: #{tpu_custom_call.1} parent=39 // pred_check
          %p5464 = pneg %p109
        $region42: #{tpu_custom_call.1} parent=39 // pred_check_branch
          %5466 = sbr.rel (%p5464) target = $region44
        $region43: #{tpu_custom_call.1} parent=39 // pred_region
          %s5467 = sand.u32 %s94, 1
          %s5468 = scalar_lea.sflag [#allocation5], %s5467
          %s5469 = sand.u32 %s94, 1
          %s5470 = smul.addr %s5469, 1024
          %s5471 = scalar_lea.vmem [#allocation4], %s5470
          %5472 = dma.done %s5468, 16384
        $region44: #{tpu_custom_call.1} parent=39 // pred_fallthru
          _
      $region40: #{tpu_custom_call.1} parent=5 // pred_fallthru
        _
    $region6: #{tpu_custom_call.1} parent=1 // loop_footer
      %s16 = sadd.s32 1, %s12
    $region7: #{tpu_custom_call.1} parent=1 // loop_footer_branch
      %11 = sbr.rel target = $region3
    $region8: #{tpu_custom_call.1} parent=1 // loop_exit
      _
    %5473 = vsyncpa [#allocation5], 1
    %s5474 = scalar_lea.sflag [#allocation5], 1
    %5475 = vsyncpa %s5474, 1

</llo_original>
